<compile_context>
chip_gen: v7x
topology: tpu7x:2x2x1
jax: 0.10.0
libtpu: 0.0.40
codegen_flags: <defaults>
</compile_context>

<pallas_src>
import functools

import jax
import jax.numpy as jnp
from jax import lax
from jax.experimental import pallas as pl
from jax.experimental.pallas import tpu as pltpu


def _round_up(x, m):
    return (x + m - 1) // m * m


def _rnn_kernel(ids_ref, m_ref, w_hh_ref, fc_w_ref, fc_b_ref, out_ref,
                xw_scratch, *, seq_len, batch_padded, block_batch,
                compute_dtype):
    """Runs the full tanh recurrence for one batch block.

    ids_ref:    (S * Bp,) int32  SMEM scalar-prefetch -- padded token ids.
    m_ref:      (Vp, Hp)  f32    VMEM -- emb @ W_ih + (b_ih + b_hh), padded.
    w_hh_ref:   (Hp, Hp)  bf16   VMEM -- recurrent weight.
    fc_w_ref:   (Hp, Op)  bf16   VMEM -- output projection.
    fc_b_ref:   (1, Op)   f32    VMEM.
    out_ref:    (BB, Op)  f32    VMEM -- logits for this batch block.
    xw_scratch: (BB, Hp)  f32    VMEM -- per-step gathered additive term.
    """
    base = pl.program_id(0) * block_batch
    hp = w_hh_ref.shape[1]

    w_hh = w_hh_ref[...]                      # invariant weight, loaded once
    # TODO(synk): keep W_hh stationary in the MXU across the recurrence via
    # pltpu.matmul_push_rhs / matmul_acc_lhs / matmul_pop (per review);
    # jnp.dot re-pushes the 128-wide RHS each step.  Kept as jnp.dot for
    # guaranteed-clean lowering.

    def step(t, h):
        # Fused token gather: copy this step's B rows from the resident
        # m_table into scratch.  Independent of h, so these vld/vst overlap
        # with the h @ W_hh MXU push below.
        for b in range(block_batch):          # static, fully unrolled
            tok = ids_ref[t * batch_padded + base + b]
            xw_scratch[pl.ds(b, 1), :] = m_ref[pl.ds(tok, 1), :]
        # Serial critical path: one MXU matmul + add + tanh per step.
        pre = (jnp.dot(h, w_hh, preferred_element_type=jnp.float32)
               + xw_scratch[...])
        # h carried in compute_dtype (bf16): no up-cast on the next step's MXU
        # LHS.  tanh stays f32 (exact on v5e; padded rows/cols remain 0).
        return jnp.tanh(pre).astype(compute_dtype)

    h0 = jnp.zeros((block_batch, hp), compute_dtype)
    unroll = seq_len if seq_len <= 32 else 8   # bounded unroll for long S
    h_final = lax.fori_loop(0, seq_len, step, h0, unroll=unroll)

    logits = (jnp.dot(h_final, fc_w_ref[...],
                      preferred_element_type=jnp.float32)
              + fc_b_ref[...])
    out_ref[...] = logits.astype(out_ref.dtype)


@functools.partial(jax.jit, static_argnames=("compute_dtype",))
def rnn_forward(text, emb_table, w_ih, w_hh, b, fc_w, fc_b,
                *, compute_dtype=jnp.bfloat16):
    """text: (S, B) int32 token ids.  Returns (B, output_dim) float32 logits."""
    S, B = text.shape
    V, _ = emb_table.shape
    H = w_hh.shape[0]
    O = fc_w.shape[1]

    # Hardware tiles: lane dim -> 128; sublane -> 16 for bf16 packing (8 f32).
    batch_tile = 16 if compute_dtype == jnp.bfloat16 else 8
    Hp = _round_up(H, 128)
    Op = _round_up(O, 128)                    # lane-dense output store
    Vp = _round_up(V, 8)
    BB = max(batch_tile, min(64, _round_up(B, batch_tile)))  # per-core block
    Bp = _round_up(B, BB)
    n_blocks = Bp // BB

    # Hoisted input projection folded with both RNN biases: (V, H) table.
    # Kept f32 -- it is tiny and is the dominant additive term each step.
    m_table = emb_table @ w_ih + b
    m_p = jnp.pad(m_table, ((0, Vp - V), (0, Hp - H))).astype(jnp.float32)
    w_hh_p = jnp.pad(w_hh, ((0, Hp - H), (0, Hp - H))).astype(compute_dtype)
    fc_w_p = jnp.pad(fc_w, ((0, Hp - H), (0, Op - O))).astype(compute_dtype)
    fc_b_p = jnp.pad(fc_b, ((0, 0), (0, Op - O))).astype(jnp.float32)

    # Token ids, batch-padded with a valid id (0) and flattened to 1D so SMEM
    # only pads to next_pow2(4*S*Bp) bytes (a 2D SMEM array pads cols to 128).
    # Padded batch rows compute a valid all-token-0 sequence; sliced off below.
    ids = jnp.pad(text, ((0, 0), (0, Bp - B))).reshape(-1).astype(jnp.int32)

    kernel = functools.partial(
        _rnn_kernel, seq_len=S, batch_padded=Bp, block_batch=BB,
        compute_dtype=compute_dtype)

    # All VMEM operands are small and grid-invariant (table + weights); no
    # vmem_limit_bytes override needed even at large S since xW never exists.
    out_p = pl.pallas_call(
        kernel,
        out_shape=jax.ShapeDtypeStruct((Bp, Op), jnp.float32),
        grid_spec=pltpu.PrefetchScalarGridSpec(
            num_scalar_prefetch=1,
            grid=(n_blocks,),
            in_specs=[
                pl.BlockSpec((Vp, Hp), lambda i, _ids: (0, 0)),   # m_table
                pl.BlockSpec((Hp, Hp), lambda i, _ids: (0, 0)),   # W_hh
                pl.BlockSpec((Hp, Op), lambda i, _ids: (0, 0)),   # fc W
                pl.BlockSpec((1, Op), lambda i, _ids: (0, 0)),    # fc b
            ],
            out_specs=pl.BlockSpec((BB, Op), lambda i, _ids: (i, 0)),
            scratch_shapes=[pltpu.VMEM((BB, Hp), jnp.float32)],
        ),
        compiler_params=pltpu.CompilerParams(
            dimension_semantics=("parallel",)),     # batch blocks -> v7x 2 TCs
    )(ids, m_p, w_hh_p, fc_w_p, fc_b_p)

    return out_p[:B, :O]


def _reference(text, emb_table, w_ih, w_hh, b, fc_w, fc_b):
    embedded = jnp.take(emb_table, text, axis=0)   # (S, B, E)
    B = text.shape[1]
    H = w_hh.shape[0]

    def step(h, x_t):
        h_new = jnp.tanh(x_t @ w_ih + h @ w_hh + b)
        return h_new, None

    h_final, _ = jax.lax.scan(step, jnp.zeros((B, H), jnp.float32), embedded)
    return h_final @ fc_w + fc_b


if __name__ == "__main__":
    # Small shapes consistent with the module.
    input_dim = 50        # vocab size
    embedding_dim = 32
    hidden_dim = 32
    output_dim = 8
    seq_len = 8
    batch = 4

    key = jax.random.PRNGKey(0)
    (k_emb, k_wih, k_whh, k_bih, k_bhh,
     k_fcw, k_fcb, k_text) = jax.random.split(key, 8)

    emb_table = jax.random.normal(k_emb, (input_dim, embedding_dim), jnp.float32) * 0.1
    # Stored transposed vs. PyTorch: (E, H), (H, H), (H, O).
    w_ih = jax.random.normal(k_wih, (embedding_dim, hidden_dim), jnp.float32) * 0.1
    w_hh = jax.random.normal(k_whh, (hidden_dim, hidden_dim), jnp.float32) * 0.1
    b_ih = jax.random.normal(k_bih, (hidden_dim,), jnp.float32) * 0.1
    b_hh = jax.random.normal(k_bhh, (hidden_dim,), jnp.float32) * 0.1
    b = (b_ih + b_hh).reshape(1, hidden_dim)
    fc_w = jax.random.normal(k_fcw, (hidden_dim, output_dim), jnp.float32) * 0.1
    fc_b = jax.random.normal(k_fcb, (output_dim,), jnp.float32).reshape(1, output_dim) * 0.1

    text = jax.random.randint(k_text, (seq_len, batch), 0, input_dim, jnp.int32)

    out = rnn_forward(text, emb_table, w_ih, w_hh, b, fc_w, fc_b)
    out = jax.block_until_ready(out)

    ref = _reference(text, emb_table, w_ih, w_hh, b, fc_w, fc_b)
    assert out.shape == (batch, output_dim)
    # bf16 MXU weights + bf16-carried hidden state (f32 accumulation / tanh)
    # -> loosened tolerance vs. the f32 reference.
    assert jnp.allclose(out, ref, atol=2e-2, rtol=2e-2), "mismatch vs reference"

    print("KERNEL_OK")
</pallas_src>

<mosaic_0001>
module attributes {stable_mosaic.version = 11 : i64} {
  func.func @_rnn_kernel(%arg0: i32, %arg1: memref<128xi32, #tpu.memory_space<smem>>, %arg2: memref<56x128xf32, #tpu.memory_space<vmem>>, %arg3: memref<128x128xbf16, #tpu.memory_space<vmem>>, %arg4: memref<128x128xbf16, #tpu.memory_space<vmem>>, %arg5: memref<1x128xf32, #tpu.memory_space<vmem>>, %arg6: memref<16x128xf32, #tpu.memory_space<vmem>>, %arg7: memref<16x128xf32, #tpu.memory_space<vmem>>) attributes {dimension_semantics = [#tpu.dimension_semantics<parallel>], iteration_bounds = array<i64: 1>, scalar_prefetch = 1 : i64, scratch_operands = 1 : i64, tpu.core_type = #tpu.core_type<tc>, window_params = [{pipeline_mode = #tpu.pipeline_mode<synchronous>, transform_indices = @transform_0, window_bounds = array<i64: 56, 128>}, {pipeline_mode = #tpu.pipeline_mode<synchronous>, transform_indices = @transform_1, window_bounds = array<i64: 128, 128>}, {pipeline_mode = #tpu.pipeline_mode<synchronous>, transform_indices = @transform_2, window_bounds = array<i64: 128, 128>}, {pipeline_mode = #tpu.pipeline_mode<synchronous>, transform_indices = @transform_3, window_bounds = array<i64: 1, 128>}, {transform_indices = @transform_4, window_bounds = array<i64: 16, 128>}]} {
    %c16_i32 = arith.constant 16 : i32
    %0 = arith.muli %arg0, %c16_i32 : i32
    %c0 = arith.constant 0 : index
    %c0_0 = arith.constant 0 : index
    %1 = vector.load %arg3[%c0, %c0_0] : memref<128x128xbf16, #tpu.memory_space<vmem>>, vector<128x128xbf16>
    %cst = arith.constant 0.000000e+00 : bf16
    %2 = vector.broadcast %cst : bf16 to vector<16x128xbf16>
    %c0_i32 = arith.constant 0 : i32
    %c16_i32_1 = arith.constant 16 : i32
    %3 = arith.muli %c0_i32, %c16_i32_1 : i32
    %4 = arith.addi %3, %0 : i32
    %c0_i32_2 = arith.constant 0 : i32
    %5 = arith.addi %4, %c0_i32_2 : i32
    %6 = arith.index_cast %5 : i32 to index
    %7 = memref.load %arg1[%6] : memref<128xi32, #tpu.memory_space<smem>>
    %8 = arith.index_cast %7 : i32 to index
    %c0_3 = arith.constant 0 : index
    %9 = vector.load %arg2[%8, %c0_3] : memref<56x128xf32, #tpu.memory_space<vmem>>, vector<1x128xf32>
    %c0_4 = arith.constant 0 : index
    %c0_5 = arith.constant 0 : index
    %10 = vector.load %arg7[%c0_4, %c0_5] : memref<16x128xf32, #tpu.memory_space<vmem>>, vector<1x128xf32>
    tpu.vector_store %arg7[%c0_4, %c0_5], %9 {strides = array<i32>} : memref<16x128xf32, #tpu.memory_space<vmem>>, vector<1x128xf32>,
    %c16_i32_6 = arith.constant 16 : i32
    %11 = arith.muli %c0_i32, %c16_i32_6 : i32
    %12 = arith.addi %11, %0 : i32
    %c1_i32 = arith.constant 1 : i32
    %13 = arith.addi %12, %c1_i32 : i32
    %14 = arith.index_cast %13 : i32 to index
    %15 = memref.load %arg1[%14] : memref<128xi32, #tpu.memory_space<smem>>
    %16 = arith.index_cast %15 : i32 to index
    %c0_7 = arith.constant 0 : index
    %17 = vector.load %arg2[%16, %c0_7] : memref<56x128xf32, #tpu.memory_space<vmem>>, vector<1x128xf32>
    %c1 = arith.constant 1 : index
    %c0_8 = arith.constant 0 : index
    %18 = vector.load %arg7[%c1, %c0_8] : memref<16x128xf32, #tpu.memory_space<vmem>>, vector<1x128xf32>
    tpu.vector_store %arg7[%c1, %c0_8], %17 {strides = array<i32>} : memref<16x128xf32, #tpu.memory_space<vmem>>, vector<1x128xf32>,
    %c16_i32_9 = arith.constant 16 : i32
    %19 = arith.muli %c0_i32, %c16_i32_9 : i32
    %20 = arith.addi %19, %0 : i32
    %c2_i32 = arith.constant 2 : i32
    %21 = arith.addi %20, %c2_i32 : i32
    %22 = arith.index_cast %21 : i32 to index
    %23 = memref.load %arg1[%22] : memref<128xi32, #tpu.memory_space<smem>>
    %24 = arith.index_cast %23 : i32 to index
    %c0_10 = arith.constant 0 : index
    %25 = vector.load %arg2[%24, %c0_10] : memref<56x128xf32, #tpu.memory_space<vmem>>, vector<1x128xf32>
    %c2 = arith.constant 2 : index
    %c0_11 = arith.constant 0 : index
    %26 = vector.load %arg7[%c2, %c0_11] : memref<16x128xf32, #tpu.memory_space<vmem>>, vector<1x128xf32>
    tpu.vector_store %arg7[%c2, %c0_11], %25 {strides = array<i32>} : memref<16x128xf32, #tpu.memory_space<vmem>>, vector<1x128xf32>,
    %c16_i32_12 = arith.constant 16 : i32
    %27 = arith.muli %c0_i32, %c16_i32_12 : i32
    %28 = arith.addi %27, %0 : i32
    %c3_i32 = arith.constant 3 : i32
    %29 = arith.addi %28, %c3_i32 : i32
    %30 = arith.index_cast %29 : i32 to index
    %31 = memref.load %arg1[%30] : memref<128xi32, #tpu.memory_space<smem>>
    %32 = arith.index_cast %31 : i32 to index
    %c0_13 = arith.constant 0 : index
    %33 = vector.load %arg2[%32, %c0_13] : memref<56x128xf32, #tpu.memory_space<vmem>>, vector<1x128xf32>
    %c3 = arith.constant 3 : index
    %c0_14 = arith.constant 0 : index
    %34 = vector.load %arg7[%c3, %c0_14] : memref<16x128xf32, #tpu.memory_space<vmem>>, vector<1x128xf32>
    tpu.vector_store %arg7[%c3, %c0_14], %33 {strides = array<i32>} : memref<16x128xf32, #tpu.memory_space<vmem>>, vector<1x128xf32>,
    %c16_i32_15 = arith.constant 16 : i32
    %35 = arith.muli %c0_i32, %c16_i32_15 : i32
    %36 = arith.addi %35, %0 : i32
    %c4_i32 = arith.constant 4 : i32
    %37 = arith.addi %36, %c4_i32 : i32
    %38 = arith.index_cast %37 : i32 to index
    %39 = memref.load %arg1[%38] : memref<128xi32, #tpu.memory_space<smem>>
    %40 = arith.index_cast %39 : i32 to index
    %c0_16 = arith.constant 0 : index
    %41 = vector.load %arg2[%40, %c0_16] : memref<56x128xf32, #tpu.memory_space<vmem>>, vector<1x128xf32>
    %c4 = arith.constant 4 : index
    %c0_17 = arith.constant 0 : index
    %42 = vector.load %arg7[%c4, %c0_17] : memref<16x128xf32, #tpu.memory_space<vmem>>, vector<1x128xf32>
    tpu.vector_store %arg7[%c4, %c0_17], %41 {strides = array<i32>} : memref<16x128xf32, #tpu.memory_space<vmem>>, vector<1x128xf32>,
    %c16_i32_18 = arith.constant 16 : i32
    %43 = arith.muli %c0_i32, %c16_i32_18 : i32
    %44 = arith.addi %43, %0 : i32
    %c5_i32 = arith.constant 5 : i32
    %45 = arith.addi %44, %c5_i32 : i32
    %46 = arith.index_cast %45 : i32 to index
    %47 = memref.load %arg1[%46] : memref<128xi32, #tpu.memory_space<smem>>
    %48 = arith.index_cast %47 : i32 to index
    %c0_19 = arith.constant 0 : index
    %49 = vector.load %arg2[%48, %c0_19] : memref<56x128xf32, #tpu.memory_space<vmem>>, vector<1x128xf32>
    %c5 = arith.constant 5 : index
    %c0_20 = arith.constant 0 : index
    %50 = vector.load %arg7[%c5, %c0_20] : memref<16x128xf32, #tpu.memory_space<vmem>>, vector<1x128xf32>
    tpu.vector_store %arg7[%c5, %c0_20], %49 {strides = array<i32>} : memref<16x128xf32, #tpu.memory_space<vmem>>, vector<1x128xf32>,
    %c16_i32_21 = arith.constant 16 : i32
    %51 = arith.muli %c0_i32, %c16_i32_21 : i32
    %52 = arith.addi %51, %0 : i32
    %c6_i32 = arith.constant 6 : i32
    %53 = arith.addi %52, %c6_i32 : i32
    %54 = arith.index_cast %53 : i32 to index
    %55 = memref.load %arg1[%54] : memref<128xi32, #tpu.memory_space<smem>>
    %56 = arith.index_cast %55 : i32 to index
    %c0_22 = arith.constant 0 : index
    %57 = vector.load %arg2[%56, %c0_22] : memref<56x128xf32, #tpu.memory_space<vmem>>, vector<1x128xf32>
    %c6 = arith.constant 6 : index
    %c0_23 = arith.constant 0 : index
    %58 = vector.load %arg7[%c6, %c0_23] : memref<16x128xf32, #tpu.memory_space<vmem>>, vector<1x128xf32>
    tpu.vector_store %arg7[%c6, %c0_23], %57 {strides = array<i32>} : memref<16x128xf32, #tpu.memory_space<vmem>>, vector<1x128xf32>,
    %c16_i32_24 = arith.constant 16 : i32
    %59 = arith.muli %c0_i32, %c16_i32_24 : i32
    %60 = arith.addi %59, %0 : i32
    %c7_i32 = arith.constant 7 : i32
    %61 = arith.addi %60, %c7_i32 : i32
    %62 = arith.index_cast %61 : i32 to index
    %63 = memref.load %arg1[%62] : memref<128xi32, #tpu.memory_space<smem>>
    %64 = arith.index_cast %63 : i32 to index
    %c0_25 = arith.constant 0 : index
    %65 = vector.load %arg2[%64, %c0_25] : memref<56x128xf32, #tpu.memory_space<vmem>>, vector<1x128xf32>
    %c7 = arith.constant 7 : index
    %c0_26 = arith.constant 0 : index
    %66 = vector.load %arg7[%c7, %c0_26] : memref<16x128xf32, #tpu.memory_space<vmem>>, vector<1x128xf32>
    tpu.vector_store %arg7[%c7, %c0_26], %65 {strides = array<i32>} : memref<16x128xf32, #tpu.memory_space<vmem>>, vector<1x128xf32>,
    %c16_i32_27 = arith.constant 16 : i32
    %67 = arith.muli %c0_i32, %c16_i32_27 : i32
    %68 = arith.addi %67, %0 : i32
    %c8_i32 = arith.constant 8 : i32
    %69 = arith.addi %68, %c8_i32 : i32
    %70 = arith.index_cast %69 : i32 to index
    %71 = memref.load %arg1[%70] : memref<128xi32, #tpu.memory_space<smem>>
    %72 = arith.index_cast %71 : i32 to index
    %c0_28 = arith.constant 0 : index
    %73 = vector.load %arg2[%72, %c0_28] : memref<56x128xf32, #tpu.memory_space<vmem>>, vector<1x128xf32>
    %c8 = arith.constant 8 : index
    %c0_29 = arith.constant 0 : index
    %74 = vector.load %arg7[%c8, %c0_29] : memref<16x128xf32, #tpu.memory_space<vmem>>, vector<1x128xf32>
    tpu.vector_store %arg7[%c8, %c0_29], %73 {strides = array<i32>} : memref<16x128xf32, #tpu.memory_space<vmem>>, vector<1x128xf32>,
    %c16_i32_30 = arith.constant 16 : i32
    %75 = arith.muli %c0_i32, %c16_i32_30 : i32
    %76 = arith.addi %75, %0 : i32
    %c9_i32 = arith.constant 9 : i32
    %77 = arith.addi %76, %c9_i32 : i32
    %78 = arith.index_cast %77 : i32 to index
    %79 = memref.load %arg1[%78] : memref<128xi32, #tpu.memory_space<smem>>
    %80 = arith.index_cast %79 : i32 to index
    %c0_31 = arith.constant 0 : index
    %81 = vector.load %arg2[%80, %c0_31] : memref<56x128xf32, #tpu.memory_space<vmem>>, vector<1x128xf32>
    %c9 = arith.constant 9 : index
    %c0_32 = arith.constant 0 : index
    %82 = vector.load %arg7[%c9, %c0_32] : memref<16x128xf32, #tpu.memory_space<vmem>>, vector<1x128xf32>
    tpu.vector_store %arg7[%c9, %c0_32], %81 {strides = array<i32>} : memref<16x128xf32, #tpu.memory_space<vmem>>, vector<1x128xf32>,
    %c16_i32_33 = arith.constant 16 : i32
    %83 = arith.muli %c0_i32, %c16_i32_33 : i32
    %84 = arith.addi %83, %0 : i32
    %c10_i32 = arith.constant 10 : i32
    %85 = arith.addi %84, %c10_i32 : i32
    %86 = arith.index_cast %85 : i32 to index
    %87 = memref.load %arg1[%86] : memref<128xi32, #tpu.memory_space<smem>>
    %88 = arith.index_cast %87 : i32 to index
    %c0_34 = arith.constant 0 : index
    %89 = vector.load %arg2[%88, %c0_34] : memref<56x128xf32, #tpu.memory_space<vmem>>, vector<1x128xf32>
    %c10 = arith.constant 10 : index
    %c0_35 = arith.constant 0 : index
    %90 = vector.load %arg7[%c10, %c0_35] : memref<16x128xf32, #tpu.memory_space<vmem>>, vector<1x128xf32>
    tpu.vector_store %arg7[%c10, %c0_35], %89 {strides = array<i32>} : memref<16x128xf32, #tpu.memory_space<vmem>>, vector<1x128xf32>,
    %c16_i32_36 = arith.constant 16 : i32
    %91 = arith.muli %c0_i32, %c16_i32_36 : i32
    %92 = arith.addi %91, %0 : i32
    %c11_i32 = arith.constant 11 : i32
    %93 = arith.addi %92, %c11_i32 : i32
    %94 = arith.index_cast %93 : i32 to index
    %95 = memref.load %arg1[%94] : memref<128xi32, #tpu.memory_space<smem>>
    %96 = arith.index_cast %95 : i32 to index
    %c0_37 = arith.constant 0 : index
    %97 = vector.load %arg2[%96, %c0_37] : memref<56x128xf32, #tpu.memory_space<vmem>>, vector<1x128xf32>
    %c11 = arith.constant 11 : index
    %c0_38 = arith.constant 0 : index
    %98 = vector.load %arg7[%c11, %c0_38] : memref<16x128xf32, #tpu.memory_space<vmem>>, vector<1x128xf32>
    tpu.vector_store %arg7[%c11, %c0_38], %97 {strides = array<i32>} : memref<16x128xf32, #tpu.memory_space<vmem>>, vector<1x128xf32>,
    %c16_i32_39 = arith.constant 16 : i32
    %99 = arith.muli %c0_i32, %c16_i32_39 : i32
    %100 = arith.addi %99, %0 : i32
    %c12_i32 = arith.constant 12 : i32
    %101 = arith.addi %100, %c12_i32 : i32
    %102 = arith.index_cast %101 : i32 to index
    %103 = memref.load %arg1[%102] : memref<128xi32, #tpu.memory_space<smem>>
    %104 = arith.index_cast %103 : i32 to index
    %c0_40 = arith.constant 0 : index
    %105 = vector.load %arg2[%104, %c0_40] : memref<56x128xf32, #tpu.memory_space<vmem>>, vector<1x128xf32>
    %c12 = arith.constant 12 : index
    %c0_41 = arith.constant 0 : index
    %106 = vector.load %arg7[%c12, %c0_41] : memref<16x128xf32, #tpu.memory_space<vmem>>, vector<1x128xf32>
    tpu.vector_store %arg7[%c12, %c0_41], %105 {strides = array<i32>} : memref<16x128xf32, #tpu.memory_space<vmem>>, vector<1x128xf32>,
    %c16_i32_42 = arith.constant 16 : i32
    %107 = arith.muli %c0_i32, %c16_i32_42 : i32
    %108 = arith.addi %107, %0 : i32
    %c13_i32 = arith.constant 13 : i32
    %109 = arith.addi %108, %c13_i32 : i32
    %110 = arith.index_cast %109 : i32 to index
    %111 = memref.load %arg1[%110] : memref<128xi32, #tpu.memory_space<smem>>
    %112 = arith.index_cast %111 : i32 to index
    %c0_43 = arith.constant 0 : index
    %113 = vector.load %arg2[%112, %c0_43] : memref<56x128xf32, #tpu.memory_space<vmem>>, vector<1x128xf32>
    %c13 = arith.constant 13 : index
    %c0_44 = arith.constant 0 : index
    %114 = vector.load %arg7[%c13, %c0_44] : memref<16x128xf32, #tpu.memory_space<vmem>>, vector<1x128xf32>
    tpu.vector_store %arg7[%c13, %c0_44], %113 {strides = array<i32>} : memref<16x128xf32, #tpu.memory_space<vmem>>, vector<1x128xf32>,
    %c16_i32_45 = arith.constant 16 : i32
    %115 = arith.muli %c0_i32, %c16_i32_45 : i32
    %116 = arith.addi %115, %0 : i32
    %c14_i32 = arith.constant 14 : i32
    %117 = arith.addi %116, %c14_i32 : i32
    %118 = arith.index_cast %117 : i32 to index
    %119 = memref.load %arg1[%118] : memref<128xi32, #tpu.memory_space<smem>>
    %120 = arith.index_cast %119 : i32 to index
    %c0_46 = arith.constant 0 : index
    %121 = vector.load %arg2[%120, %c0_46] : memref<56x128xf32, #tpu.memory_space<vmem>>, vector<1x128xf32>
    %c14 = arith.constant 14 : index
    %c0_47 = arith.constant 0 : index
    %122 = vector.load %arg7[%c14, %c0_47] : memref<16x128xf32, #tpu.memory_space<vmem>>, vector<1x128xf32>
    tpu.vector_store %arg7[%c14, %c0_47], %121 {strides = array<i32>} : memref<16x128xf32, #tpu.memory_space<vmem>>, vector<1x128xf32>,
    %c16_i32_48 = arith.constant 16 : i32
    %123 = arith.muli %c0_i32, %c16_i32_48 : i32
    %124 = arith.addi %123, %0 : i32
    %c15_i32 = arith.constant 15 : i32
    %125 = arith.addi %124, %c15_i32 : i32
    %126 = arith.index_cast %125 : i32 to index
    %127 = memref.load %arg1[%126] : memref<128xi32, #tpu.memory_space<smem>>
    %128 = arith.index_cast %127 : i32 to index
    %c0_49 = arith.constant 0 : index
    %129 = vector.load %arg2[%128, %c0_49] : memref<56x128xf32, #tpu.memory_space<vmem>>, vector<1x128xf32>
    %c15 = arith.constant 15 : index
    %c0_50 = arith.constant 0 : index
    %130 = vector.load %arg7[%c15, %c0_50] : memref<16x128xf32, #tpu.memory_space<vmem>>, vector<1x128xf32>
    tpu.vector_store %arg7[%c15, %c0_50], %129 {strides = array<i32>} : memref<16x128xf32, #tpu.memory_space<vmem>>, vector<1x128xf32>,
    %cst_51 = arith.constant dense<0.000000e+00> : vector<16x128xf32>
    %131 = tpu.matmul %2, %1, %cst_51 {dimension_numbers = #tpu.dot_dimension_numbers<[1], [0], [0], [1], [0, 0, 1, 1], [], []>} : vector<16x128xbf16>, vector<128x128xbf16>, vector<16x128xf32> -> vector<16x128xf32>
    %c0_52 = arith.constant 0 : index
    %c0_53 = arith.constant 0 : index
    %132 = vector.load %arg7[%c0_52, %c0_53] : memref<16x128xf32, #tpu.memory_space<vmem>>, vector<16x128xf32>
    %133 = arith.addf %131, %132 : vector<16x128xf32>
    %134 = math.tanh %133 : vector<16x128xf32>
    %135 = arith.truncf %134 : vector<16x128xf32> to vector<16x128xbf16>
    %c1_i32_54 = arith.constant 1 : i32
    %c16_i32_55 = arith.constant 16 : i32
    %136 = arith.muli %c1_i32_54, %c16_i32_55 : i32
    %137 = arith.addi %136, %0 : i32
    %c0_i32_56 = arith.constant 0 : i32
    %138 = arith.addi %137, %c0_i32_56 : i32
    %139 = arith.index_cast %138 : i32 to index
    %140 = memref.load %arg1[%139] : memref<128xi32, #tpu.memory_space<smem>>
    %141 = arith.index_cast %140 : i32 to index
    %c0_57 = arith.constant 0 : index
    %142 = vector.load %arg2[%141, %c0_57] : memref<56x128xf32, #tpu.memory_space<vmem>>, vector<1x128xf32>
    %c0_58 = arith.constant 0 : index
    %c0_59 = arith.constant 0 : index
    %143 = vector.load %arg7[%c0_58, %c0_59] : memref<16x128xf32, #tpu.memory_space<vmem>>, vector<1x128xf32>
    tpu.vector_store %arg7[%c0_58, %c0_59], %142 {strides = array<i32>} : memref<16x128xf32, #tpu.memory_space<vmem>>, vector<1x128xf32>,
    %c16_i32_60 = arith.constant 16 : i32
    %144 = arith.muli %c1_i32_54, %c16_i32_60 : i32
    %145 = arith.addi %144, %0 : i32
    %c1_i32_61 = arith.constant 1 : i32
    %146 = arith.addi %145, %c1_i32_61 : i32
    %147 = arith.index_cast %146 : i32 to index
    %148 = memref.load %arg1[%147] : memref<128xi32, #tpu.memory_space<smem>>
    %149 = arith.index_cast %148 : i32 to index
    %c0_62 = arith.constant 0 : index
    %150 = vector.load %arg2[%149, %c0_62] : memref<56x128xf32, #tpu.memory_space<vmem>>, vector<1x128xf32>
    %c1_63 = arith.constant 1 : index
    %c0_64 = arith.constant 0 : index
    %151 = vector.load %arg7[%c1_63, %c0_64] : memref<16x128xf32, #tpu.memory_space<vmem>>, vector<1x128xf32>
    tpu.vector_store %arg7[%c1_63, %c0_64], %150 {strides = array<i32>} : memref<16x128xf32, #tpu.memory_space<vmem>>, vector<1x128xf32>,
    %c16_i32_65 = arith.constant 16 : i32
    %152 = arith.muli %c1_i32_54, %c16_i32_65 : i32
    %153 = arith.addi %152, %0 : i32
    %c2_i32_66 = arith.constant 2 : i32
    %154 = arith.addi %153, %c2_i32_66 : i32
    %155 = arith.index_cast %154 : i32 to index
    %156 = memref.load %arg1[%155] : memref<128xi32, #tpu.memory_space<smem>>
    %157 = arith.index_cast %156 : i32 to index
    %c0_67 = arith.constant 0 : index
    %158 = vector.load %arg2[%157, %c0_67] : memref<56x128xf32, #tpu.memory_space<vmem>>, vector<1x128xf32>
    %c2_68 = arith.constant 2 : index
    %c0_69 = arith.constant 0 : index
    %159 = vector.load %arg7[%c2_68, %c0_69] : memref<16x128xf32, #tpu.memory_space<vmem>>, vector<1x128xf32>
    tpu.vector_store %arg7[%c2_68, %c0_69], %158 {strides = array<i32>} : memref<16x128xf32, #tpu.memory_space<vmem>>, vector<1x128xf32>,
    %c16_i32_70 = arith.constant 16 : i32
    %160 = arith.muli %c1_i32_54, %c16_i32_70 : i32
    %161 = arith.addi %160, %0 : i32
    %c3_i32_71 = arith.constant 3 : i32
    %162 = arith.addi %161, %c3_i32_71 : i32
    %163 = arith.index_cast %162 : i32 to index
    %164 = memref.load %arg1[%163] : memref<128xi32, #tpu.memory_space<smem>>
    %165 = arith.index_cast %164 : i32 to index
    %c0_72 = arith.constant 0 : index
    %166 = vector.load %arg2[%165, %c0_72] : memref<56x128xf32, #tpu.memory_space<vmem>>, vector<1x128xf32>
    %c3_73 = arith.constant 3 : index
    %c0_74 = arith.constant 0 : index
    %167 = vector.load %arg7[%c3_73, %c0_74] : memref<16x128xf32, #tpu.memory_space<vmem>>, vector<1x128xf32>
    tpu.vector_store %arg7[%c3_73, %c0_74], %166 {strides = array<i32>} : memref<16x128xf32, #tpu.memory_space<vmem>>, vector<1x128xf32>,
    %c16_i32_75 = arith.constant 16 : i32
    %168 = arith.muli %c1_i32_54, %c16_i32_75 : i32
    %169 = arith.addi %168, %0 : i32
    %c4_i32_76 = arith.constant 4 : i32
    %170 = arith.addi %169, %c4_i32_76 : i32
    %171 = arith.index_cast %170 : i32 to index
    %172 = memref.load %arg1[%171] : memref<128xi32, #tpu.memory_space<smem>>
    %173 = arith.index_cast %172 : i32 to index
    %c0_77 = arith.constant 0 : index
    %174 = vector.load %arg2[%173, %c0_77] : memref<56x128xf32, #tpu.memory_space<vmem>>, vector<1x128xf32>
    %c4_78 = arith.constant 4 : index
    %c0_79 = arith.constant 0 : index
    %175 = vector.load %arg7[%c4_78, %c0_79] : memref<16x128xf32, #tpu.memory_space<vmem>>, vector<1x128xf32>
    tpu.vector_store %arg7[%c4_78, %c0_79], %174 {strides = array<i32>} : memref<16x128xf32, #tpu.memory_space<vmem>>, vector<1x128xf32>,
    %c16_i32_80 = arith.constant 16 : i32
    %176 = arith.muli %c1_i32_54, %c16_i32_80 : i32
    %177 = arith.addi %176, %0 : i32
    %c5_i32_81 = arith.constant 5 : i32
    %178 = arith.addi %177, %c5_i32_81 : i32
    %179 = arith.index_cast %178 : i32 to index
    %180 = memref.load %arg1[%179] : memref<128xi32, #tpu.memory_space<smem>>
    %181 = arith.index_cast %180 : i32 to index
    %c0_82 = arith.constant 0 : index
    %182 = vector.load %arg2[%181, %c0_82] : memref<56x128xf32, #tpu.memory_space<vmem>>, vector<1x128xf32>
    %c5_83 = arith.constant 5 : index
    %c0_84 = arith.constant 0 : index
    %183 = vector.load %arg7[%c5_83, %c0_84] : memref<16x128xf32, #tpu.memory_space<vmem>>, vector<1x128xf32>
    tpu.vector_store %arg7[%c5_83, %c0_84], %182 {strides = array<i32>} : memref<16x128xf32, #tpu.memory_space<vmem>>, vector<1x128xf32>,
    %c16_i32_85 = arith.constant 16 : i32
    %184 = arith.muli %c1_i32_54, %c16_i32_85 : i32
    %185 = arith.addi %184, %0 : i32
    %c6_i32_86 = arith.constant 6 : i32
    %186 = arith.addi %185, %c6_i32_86 : i32
    %187 = arith.index_cast %186 : i32 to index
    %188 = memref.load %arg1[%187] : memref<128xi32, #tpu.memory_space<smem>>
    %189 = arith.index_cast %188 : i32 to index
    %c0_87 = arith.constant 0 : index
    %190 = vector.load %arg2[%189, %c0_87] : memref<56x128xf32, #tpu.memory_space<vmem>>, vector<1x128xf32>
    %c6_88 = arith.constant 6 : index
    %c0_89 = arith.constant 0 : index
    %191 = vector.load %arg7[%c6_88, %c0_89] : memref<16x128xf32, #tpu.memory_space<vmem>>, vector<1x128xf32>
    tpu.vector_store %arg7[%c6_88, %c0_89], %190 {strides = array<i32>} : memref<16x128xf32, #tpu.memory_space<vmem>>, vector<1x128xf32>,
    %c16_i32_90 = arith.constant 16 : i32
    %192 = arith.muli %c1_i32_54, %c16_i32_90 : i32
    %193 = arith.addi %192, %0 : i32
    %c7_i32_91 = arith.constant 7 : i32
    %194 = arith.addi %193, %c7_i32_91 : i32
    %195 = arith.index_cast %194 : i32 to index
    %196 = memref.load %arg1[%195] : memref<128xi32, #tpu.memory_space<smem>>
    %197 = arith.index_cast %196 : i32 to index
    %c0_92 = arith.constant 0 : index
    %198 = vector.load %arg2[%197, %c0_92] : memref<56x128xf32, #tpu.memory_space<vmem>>, vector<1x128xf32>
    %c7_93 = arith.constant 7 : index
    %c0_94 = arith.constant 0 : index
    %199 = vector.load %arg7[%c7_93, %c0_94] : memref<16x128xf32, #tpu.memory_space<vmem>>, vector<1x128xf32>
    tpu.vector_store %arg7[%c7_93, %c0_94], %198 {strides = array<i32>} : memref<16x128xf32, #tpu.memory_space<vmem>>, vector<1x128xf32>,
    %c16_i32_95 = arith.constant 16 : i32
    %200 = arith.muli %c1_i32_54, %c16_i32_95 : i32
    %201 = arith.addi %200, %0 : i32
    %c8_i32_96 = arith.constant 8 : i32
    %202 = arith.addi %201, %c8_i32_96 : i32
    %203 = arith.index_cast %202 : i32 to index
    %204 = memref.load %arg1[%203] : memref<128xi32, #tpu.memory_space<smem>>
    %205 = arith.index_cast %204 : i32 to index
    %c0_97 = arith.constant 0 : index
    %206 = vector.load %arg2[%205, %c0_97] : memref<56x128xf32, #tpu.memory_space<vmem>>, vector<1x128xf32>
    %c8_98 = arith.constant 8 : index
    %c0_99 = arith.constant 0 : index
    %207 = vector.load %arg7[%c8_98, %c0_99] : memref<16x128xf32, #tpu.memory_space<vmem>>, vector<1x128xf32>
    tpu.vector_store %arg7[%c8_98, %c0_99], %206 {strides = array<i32>} : memref<16x128xf32, #tpu.memory_space<vmem>>, vector<1x128xf32>,
    %c16_i32_100 = arith.constant 16 : i32
    %208 = arith.muli %c1_i32_54, %c16_i32_100 : i32
    %209 = arith.addi %208, %0 : i32
    %c9_i32_101 = arith.constant 9 : i32
    %210 = arith.addi %209, %c9_i32_101 : i32
    %211 = arith.index_cast %210 : i32 to index
    %212 = memref.load %arg1[%211] : memref<128xi32, #tpu.memory_space<smem>>
    %213 = arith.index_cast %212 : i32 to index
    %c0_102 = arith.constant 0 : index
    %214 = vector.load %arg2[%213, %c0_102] : memref<56x128xf32, #tpu.memory_space<vmem>>, vector<1x128xf32>
    %c9_103 = arith.constant 9 : index
    %c0_104 = arith.constant 0 : index
    %215 = vector.load %arg7[%c9_103, %c0_104] : memref<16x128xf32, #tpu.memory_space<vmem>>, vector<1x128xf32>
    tpu.vector_store %arg7[%c9_103, %c0_104], %214 {strides = array<i32>} : memref<16x128xf32, #tpu.memory_space<vmem>>, vector<1x128xf32>,
    %c16_i32_105 = arith.constant 16 : i32
    %216 = arith.muli %c1_i32_54, %c16_i32_105 : i32
    %217 = arith.addi %216, %0 : i32
    %c10_i32_106 = arith.constant 10 : i32
    %218 = arith.addi %217, %c10_i32_106 : i32
    %219 = arith.index_cast %218 : i32 to index
    %220 = memref.load %arg1[%219] : memref<128xi32, #tpu.memory_space<smem>>
    %221 = arith.index_cast %220 : i32 to index
    %c0_107 = arith.constant 0 : index
    %222 = vector.load %arg2[%221, %c0_107] : memref<56x128xf32, #tpu.memory_space<vmem>>, vector<1x128xf32>
    %c10_108 = arith.constant 10 : index
    %c0_109 = arith.constant 0 : index
    %223 = vector.load %arg7[%c10_108, %c0_109] : memref<16x128xf32, #tpu.memory_space<vmem>>, vector<1x128xf32>
    tpu.vector_store %arg7[%c10_108, %c0_109], %222 {strides = array<i32>} : memref<16x128xf32, #tpu.memory_space<vmem>>, vector<1x128xf32>,
    %c16_i32_110 = arith.constant 16 : i32
    %224 = arith.muli %c1_i32_54, %c16_i32_110 : i32
    %225 = arith.addi %224, %0 : i32
    %c11_i32_111 = arith.constant 11 : i32
    %226 = arith.addi %225, %c11_i32_111 : i32
    %227 = arith.index_cast %226 : i32 to index
    %228 = memref.load %arg1[%227] : memref<128xi32, #tpu.memory_space<smem>>
    %229 = arith.index_cast %228 : i32 to index
    %c0_112 = arith.constant 0 : index
    %230 = vector.load %arg2[%229, %c0_112] : memref<56x128xf32, #tpu.memory_space<vmem>>, vector<1x128xf32>
    %c11_113 = arith.constant 11 : index
    %c0_114 = arith.constant 0 : index
    %231 = vector.load %arg7[%c11_113, %c0_114] : memref<16x128xf32, #tpu.memory_space<vmem>>, vector<1x128xf32>
    tpu.vector_store %arg7[%c11_113, %c0_114], %230 {strides = array<i32>} : memref<16x128xf32, #tpu.memory_space<vmem>>, vector<1x128xf32>,
    %c16_i32_115 = arith.constant 16 : i32
    %232 = arith.muli %c1_i32_54, %c16_i32_115 : i32
    %233 = arith.addi %232, %0 : i32
    %c12_i32_116 = arith.constant 12 : i32
    %234 = arith.addi %233, %c12_i32_116 : i32
    %235 = arith.index_cast %234 : i32 to index
    %236 = memref.load %arg1[%235] : memref<128xi32, #tpu.memory_space<smem>>
    %237 = arith.index_cast %236 : i32 to index
    %c0_117 = arith.constant 0 : index
    %238 = vector.load %arg2[%237, %c0_117] : memref<56x128xf32, #tpu.memory_space<vmem>>, vector<1x128xf32>
    %c12_118 = arith.constant 12 : index
    %c0_119 = arith.constant 0 : index
    %239 = vector.load %arg7[%c12_118, %c0_119] : memref<16x128xf32, #tpu.memory_space<vmem>>, vector<1x128xf32>
    tpu.vector_store %arg7[%c12_118, %c0_119], %238 {strides = array<i32>} : memref<16x128xf32, #tpu.memory_space<vmem>>, vector<1x128xf32>,
    %c16_i32_120 = arith.constant 16 : i32
    %240 = arith.muli %c1_i32_54, %c16_i32_120 : i32
    %241 = arith.addi %240, %0 : i32
    %c13_i32_121 = arith.constant 13 : i32
    %242 = arith.addi %241, %c13_i32_121 : i32
    %243 = arith.index_cast %242 : i32 to index
    %244 = memref.load %arg1[%243] : memref<128xi32, #tpu.memory_space<smem>>
    %245 = arith.index_cast %244 : i32 to index
    %c0_122 = arith.constant 0 : index
    %246 = vector.load %arg2[%245, %c0_122] : memref<56x128xf32, #tpu.memory_space<vmem>>, vector<1x128xf32>
    %c13_123 = arith.constant 13 : index
    %c0_124 = arith.constant 0 : index
    %247 = vector.load %arg7[%c13_123, %c0_124] : memref<16x128xf32, #tpu.memory_space<vmem>>, vector<1x128xf32>
    tpu.vector_store %arg7[%c13_123, %c0_124], %246 {strides = array<i32>} : memref<16x128xf32, #tpu.memory_space<vmem>>, vector<1x128xf32>,
    %c16_i32_125 = arith.constant 16 : i32
    %248 = arith.muli %c1_i32_54, %c16_i32_125 : i32
    %249 = arith.addi %248, %0 : i32
    %c14_i32_126 = arith.constant 14 : i32
    %250 = arith.addi %249, %c14_i32_126 : i32
    %251 = arith.index_cast %250 : i32 to index
    %252 = memref.load %arg1[%251] : memref<128xi32, #tpu.memory_space<smem>>
    %253 = arith.index_cast %252 : i32 to index
    %c0_127 = arith.constant 0 : index
    %254 = vector.load %arg2[%253, %c0_127] : memref<56x128xf32, #tpu.memory_space<vmem>>, vector<1x128xf32>
    %c14_128 = arith.constant 14 : index
    %c0_129 = arith.constant 0 : index
    %255 = vector.load %arg7[%c14_128, %c0_129] : memref<16x128xf32, #tpu.memory_space<vmem>>, vector<1x128xf32>
    tpu.vector_store %arg7[%c14_128, %c0_129], %254 {strides = array<i32>} : memref<16x128xf32, #tpu.memory_space<vmem>>, vector<1x128xf32>,
    %c16_i32_130 = arith.constant 16 : i32
    %256 = arith.muli %c1_i32_54, %c16_i32_130 : i32
    %257 = arith.addi %256, %0 : i32
    %c15_i32_131 = arith.constant 15 : i32
    %258 = arith.addi %257, %c15_i32_131 : i32
    %259 = arith.index_cast %258 : i32 to index
    %260 = memref.load %arg1[%259] : memref<128xi32, #tpu.memory_space<smem>>
    %261 = arith.index_cast %260 : i32 to index
    %c0_132 = arith.constant 0 : index
    %262 = vector.load %arg2[%261, %c0_132] : memref<56x128xf32, #tpu.memory_space<vmem>>, vector<1x128xf32>
    %c15_133 = arith.constant 15 : index
    %c0_134 = arith.constant 0 : index
    %263 = vector.load %arg7[%c15_133, %c0_134] : memref<16x128xf32, #tpu.memory_space<vmem>>, vector<1x128xf32>
    tpu.vector_store %arg7[%c15_133, %c0_134], %262 {strides = array<i32>} : memref<16x128xf32, #tpu.memory_space<vmem>>, vector<1x128xf32>,
    %cst_135 = arith.constant dense<0.000000e+00> : vector<16x128xf32>
    %264 = tpu.matmul %135, %1, %cst_135 {dimension_numbers = #tpu.dot_dimension_numbers<[1], [0], [0], [1], [0, 0, 1, 1], [], []>} : vector<16x128xbf16>, vector<128x128xbf16>, vector<16x128xf32> -> vector<16x128xf32>
    %c0_136 = arith.constant 0 : index
    %c0_137 = arith.constant 0 : index
    %265 = vector.load %arg7[%c0_136, %c0_137] : memref<16x128xf32, #tpu.memory_space<vmem>>, vector<16x128xf32>
    %266 = arith.addf %264, %265 : vector<16x128xf32>
    %267 = math.tanh %266 : vector<16x128xf32>
    %268 = arith.truncf %267 : vector<16x128xf32> to vector<16x128xbf16>
    %c2_i32_138 = arith.constant 2 : i32
    %c16_i32_139 = arith.constant 16 : i32
    %269 = arith.muli %c2_i32_138, %c16_i32_139 : i32
    %270 = arith.addi %269, %0 : i32
    %c0_i32_140 = arith.constant 0 : i32
    %271 = arith.addi %270, %c0_i32_140 : i32
    %272 = arith.index_cast %271 : i32 to index
    %273 = memref.load %arg1[%272] : memref<128xi32, #tpu.memory_space<smem>>
    %274 = arith.index_cast %273 : i32 to index
    %c0_141 = arith.constant 0 : index
    %275 = vector.load %arg2[%274, %c0_141] : memref<56x128xf32, #tpu.memory_space<vmem>>, vector<1x128xf32>
    %c0_142 = arith.constant 0 : index
    %c0_143 = arith.constant 0 : index
    %276 = vector.load %arg7[%c0_142, %c0_143] : memref<16x128xf32, #tpu.memory_space<vmem>>, vector<1x128xf32>
    tpu.vector_store %arg7[%c0_142, %c0_143], %275 {strides = array<i32>} : memref<16x128xf32, #tpu.memory_space<vmem>>, vector<1x128xf32>,
    %c16_i32_144 = arith.constant 16 : i32
    %277 = arith.muli %c2_i32_138, %c16_i32_144 : i32
    %278 = arith.addi %277, %0 : i32
    %c1_i32_145 = arith.constant 1 : i32
    %279 = arith.addi %278, %c1_i32_145 : i32
    %280 = arith.index_cast %279 : i32 to index
    %281 = memref.load %arg1[%280] : memref<128xi32, #tpu.memory_space<smem>>
    %282 = arith.index_cast %281 : i32 to index
    %c0_146 = arith.constant 0 : index
    %283 = vector.load %arg2[%282, %c0_146] : memref<56x128xf32, #tpu.memory_space<vmem>>, vector<1x128xf32>
    %c1_147 = arith.constant 1 : index
    %c0_148 = arith.constant 0 : index
    %284 = vector.load %arg7[%c1_147, %c0_148] : memref<16x128xf32, #tpu.memory_space<vmem>>, vector<1x128xf32>
    tpu.vector_store %arg7[%c1_147, %c0_148], %283 {strides = array<i32>} : memref<16x128xf32, #tpu.memory_space<vmem>>, vector<1x128xf32>,
    %c16_i32_149 = arith.constant 16 : i32
    %285 = arith.muli %c2_i32_138, %c16_i32_149 : i32
    %286 = arith.addi %285, %0 : i32
    %c2_i32_150 = arith.constant 2 : i32
    %287 = arith.addi %286, %c2_i32_150 : i32
    %288 = arith.index_cast %287 : i32 to index
    %289 = memref.load %arg1[%288] : memref<128xi32, #tpu.memory_space<smem>>
    %290 = arith.index_cast %289 : i32 to index
    %c0_151 = arith.constant 0 : index
    %291 = vector.load %arg2[%290, %c0_151] : memref<56x128xf32, #tpu.memory_space<vmem>>, vector<1x128xf32>
    %c2_152 = arith.constant 2 : index
    %c0_153 = arith.constant 0 : index
    %292 = vector.load %arg7[%c2_152, %c0_153] : memref<16x128xf32, #tpu.memory_space<vmem>>, vector<1x128xf32>
    tpu.vector_store %arg7[%c2_152, %c0_153], %291 {strides = array<i32>} : memref<16x128xf32, #tpu.memory_space<vmem>>, vector<1x128xf32>,
    %c16_i32_154 = arith.constant 16 : i32
    %293 = arith.muli %c2_i32_138, %c16_i32_154 : i32
    %294 = arith.addi %293, %0 : i32
    %c3_i32_155 = arith.constant 3 : i32
    %295 = arith.addi %294, %c3_i32_155 : i32
    %296 = arith.index_cast %295 : i32 to index
    %297 = memref.load %arg1[%296] : memref<128xi32, #tpu.memory_space<smem>>
    %298 = arith.index_cast %297 : i32 to index
    %c0_156 = arith.constant 0 : index
    %299 = vector.load %arg2[%298, %c0_156] : memref<56x128xf32, #tpu.memory_space<vmem>>, vector<1x128xf32>
    %c3_157 = arith.constant 3 : index
    %c0_158 = arith.constant 0 : index
    %300 = vector.load %arg7[%c3_157, %c0_158] : memref<16x128xf32, #tpu.memory_space<vmem>>, vector<1x128xf32>
    tpu.vector_store %arg7[%c3_157, %c0_158], %299 {strides = array<i32>} : memref<16x128xf32, #tpu.memory_space<vmem>>, vector<1x128xf32>,
    %c16_i32_159 = arith.constant 16 : i32
    %301 = arith.muli %c2_i32_138, %c16_i32_159 : i32
    %302 = arith.addi %301, %0 : i32
    %c4_i32_160 = arith.constant 4 : i32
    %303 = arith.addi %302, %c4_i32_160 : i32
    %304 = arith.index_cast %303 : i32 to index
    %305 = memref.load %arg1[%304] : memref<128xi32, #tpu.memory_space<smem>>
    %306 = arith.index_cast %305 : i32 to index
    %c0_161 = arith.constant 0 : index
    %307 = vector.load %arg2[%306, %c0_161] : memref<56x128xf32, #tpu.memory_space<vmem>>, vector<1x128xf32>
    %c4_162 = arith.constant 4 : index
    %c0_163 = arith.constant 0 : index
    %308 = vector.load %arg7[%c4_162, %c0_163] : memref<16x128xf32, #tpu.memory_space<vmem>>, vector<1x128xf32>
    tpu.vector_store %arg7[%c4_162, %c0_163], %307 {strides = array<i32>} : memref<16x128xf32, #tpu.memory_space<vmem>>, vector<1x128xf32>,
    %c16_i32_164 = arith.constant 16 : i32
    %309 = arith.muli %c2_i32_138, %c16_i32_164 : i32
    %310 = arith.addi %309, %0 : i32
    %c5_i32_165 = arith.constant 5 : i32
    %311 = arith.addi %310, %c5_i32_165 : i32
    %312 = arith.index_cast %311 : i32 to index
    %313 = memref.load %arg1[%312] : memref<128xi32, #tpu.memory_space<smem>>
    %314 = arith.index_cast %313 : i32 to index
    %c0_166 = arith.constant 0 : index
    %315 = vector.load %arg2[%314, %c0_166] : memref<56x128xf32, #tpu.memory_space<vmem>>, vector<1x128xf32>
    %c5_167 = arith.constant 5 : index
    %c0_168 = arith.constant 0 : index
    %316 = vector.load %arg7[%c5_167, %c0_168] : memref<16x128xf32, #tpu.memory_space<vmem>>, vector<1x128xf32>
    tpu.vector_store %arg7[%c5_167, %c0_168], %315 {strides = array<i32>} : memref<16x128xf32, #tpu.memory_space<vmem>>, vector<1x128xf32>,
    %c16_i32_169 = arith.constant 16 : i32
    %317 = arith.muli %c2_i32_138, %c16_i32_169 : i32
    %318 = arith.addi %317, %0 : i32
    %c6_i32_170 = arith.constant 6 : i32
    %319 = arith.addi %318, %c6_i32_170 : i32
    %320 = arith.index_cast %319 : i32 to index
    %321 = memref.load %arg1[%320] : memref<128xi32, #tpu.memory_space<smem>>
    %322 = arith.index_cast %321 : i32 to index
    %c0_171 = arith.constant 0 : index
    %323 = vector.load %arg2[%322, %c0_171] : memref<56x128xf32, #tpu.memory_space<vmem>>, vector<1x128xf32>
    %c6_172 = arith.constant 6 : index
    %c0_173 = arith.constant 0 : index
    %324 = vector.load %arg7[%c6_172, %c0_173] : memref<16x128xf32, #tpu.memory_space<vmem>>, vector<1x128xf32>
    tpu.vector_store %arg7[%c6_172, %c0_173], %323 {strides = array<i32>} : memref<16x128xf32, #tpu.memory_space<vmem>>, vector<1x128xf32>,
    %c16_i32_174 = arith.constant 16 : i32
    %325 = arith.muli %c2_i32_138, %c16_i32_174 : i32
    %326 = arith.addi %325, %0 : i32
    %c7_i32_175 = arith.constant 7 : i32
    %327 = arith.addi %326, %c7_i32_175 : i32
    %328 = arith.index_cast %327 : i32 to index
    %329 = memref.load %arg1[%328] : memref<128xi32, #tpu.memory_space<smem>>
    %330 = arith.index_cast %329 : i32 to index
    %c0_176 = arith.constant 0 : index
    %331 = vector.load %arg2[%330, %c0_176] : memref<56x128xf32, #tpu.memory_space<vmem>>, vector<1x128xf32>
    %c7_177 = arith.constant 7 : index
    %c0_178 = arith.constant 0 : index
    %332 = vector.load %arg7[%c7_177, %c0_178] : memref<16x128xf32, #tpu.memory_space<vmem>>, vector<1x128xf32>
    tpu.vector_store %arg7[%c7_177, %c0_178], %331 {strides = array<i32>} : memref<16x128xf32, #tpu.memory_space<vmem>>, vector<1x128xf32>,
    %c16_i32_179 = arith.constant 16 : i32
    %333 = arith.muli %c2_i32_138, %c16_i32_179 : i32
    %334 = arith.addi %333, %0 : i32
    %c8_i32_180 = arith.constant 8 : i32
    %335 = arith.addi %334, %c8_i32_180 : i32
    %336 = arith.index_cast %335 : i32 to index
    %337 = memref.load %arg1[%336] : memref<128xi32, #tpu.memory_space<smem>>
    %338 = arith.index_cast %337 : i32 to index
    %c0_181 = arith.constant 0 : index
    %339 = vector.load %arg2[%338, %c0_181] : memref<56x128xf32, #tpu.memory_space<vmem>>, vector<1x128xf32>
    %c8_182 = arith.constant 8 : index
    %c0_183 = arith.constant 0 : index
    %340 = vector.load %arg7[%c8_182, %c0_183] : memref<16x128xf32, #tpu.memory_space<vmem>>, vector<1x128xf32>
    tpu.vector_store %arg7[%c8_182, %c0_183], %339 {strides = array<i32>} : memref<16x128xf32, #tpu.memory_space<vmem>>, vector<1x128xf32>,
    %c16_i32_184 = arith.constant 16 : i32
    %341 = arith.muli %c2_i32_138, %c16_i32_184 : i32
    %342 = arith.addi %341, %0 : i32
    %c9_i32_185 = arith.constant 9 : i32
    %343 = arith.addi %342, %c9_i32_185 : i32
    %344 = arith.index_cast %343 : i32 to index
    %345 = memref.load %arg1[%344] : memref<128xi32, #tpu.memory_space<smem>>
    %346 = arith.index_cast %345 : i32 to index
    %c0_186 = arith.constant 0 : index
    %347 = vector.load %arg2[%346, %c0_186] : memref<56x128xf32, #tpu.memory_space<vmem>>, vector<1x128xf32>
    %c9_187 = arith.constant 9 : index
    %c0_188 = arith.constant 0 : index
    %348 = vector.load %arg7[%c9_187, %c0_188] : memref<16x128xf32, #tpu.memory_space<vmem>>, vector<1x128xf32>
    tpu.vector_store %arg7[%c9_187, %c0_188], %347 {strides = array<i32>} : memref<16x128xf32, #tpu.memory_space<vmem>>, vector<1x128xf32>,
    %c16_i32_189 = arith.constant 16 : i32
    %349 = arith.muli %c2_i32_138, %c16_i32_189 : i32
    %350 = arith.addi %349, %0 : i32
    %c10_i32_190 = arith.constant 10 : i32
    %351 = arith.addi %350, %c10_i32_190 : i32
    %352 = arith.index_cast %351 : i32 to index
    %353 = memref.load %arg1[%352] : memref<128xi32, #tpu.memory_space<smem>>
    %354 = arith.index_cast %353 : i32 to index
    %c0_191 = arith.constant 0 : index
    %355 = vector.load %arg2[%354, %c0_191] : memref<56x128xf32, #tpu.memory_space<vmem>>, vector<1x128xf32>
    %c10_192 = arith.constant 10 : index
    %c0_193 = arith.constant 0 : index
    %356 = vector.load %arg7[%c10_192, %c0_193] : memref<16x128xf32, #tpu.memory_space<vmem>>, vector<1x128xf32>
    tpu.vector_store %arg7[%c10_192, %c0_193], %355 {strides = array<i32>} : memref<16x128xf32, #tpu.memory_space<vmem>>, vector<1x128xf32>,
    %c16_i32_194 = arith.constant 16 : i32
    %357 = arith.muli %c2_i32_138, %c16_i32_194 : i32
    %358 = arith.addi %357, %0 : i32
    %c11_i32_195 = arith.constant 11 : i32
    %359 = arith.addi %358, %c11_i32_195 : i32
    %360 = arith.index_cast %359 : i32 to index
    %361 = memref.load %arg1[%360] : memref<128xi32, #tpu.memory_space<smem>>
    %362 = arith.index_cast %361 : i32 to index
    %c0_196 = arith.constant 0 : index
    %363 = vector.load %arg2[%362, %c0_196] : memref<56x128xf32, #tpu.memory_space<vmem>>, vector<1x128xf32>
    %c11_197 = arith.constant 11 : index
    %c0_198 = arith.constant 0 : index
    %364 = vector.load %arg7[%c11_197, %c0_198] : memref<16x128xf32, #tpu.memory_space<vmem>>, vector<1x128xf32>
    tpu.vector_store %arg7[%c11_197, %c0_198], %363 {strides = array<i32>} : memref<16x128xf32, #tpu.memory_space<vmem>>, vector<1x128xf32>,
    %c16_i32_199 = arith.constant 16 : i32
    %365 = arith.muli %c2_i32_138, %c16_i32_199 : i32
    %366 = arith.addi %365, %0 : i32
    %c12_i32_200 = arith.constant 12 : i32
    %367 = arith.addi %366, %c12_i32_200 : i32
    %368 = arith.index_cast %367 : i32 to index
    %369 = memref.load %arg1[%368] : memref<128xi32, #tpu.memory_space<smem>>
    %370 = arith.index_cast %369 : i32 to index
    %c0_201 = arith.constant 0 : index
    %371 = vector.load %arg2[%370, %c0_201] : memref<56x128xf32, #tpu.memory_space<vmem>>, vector<1x128xf32>
    %c12_202 = arith.constant 12 : index
    %c0_203 = arith.constant 0 : index
    %372 = vector.load %arg7[%c12_202, %c0_203] : memref<16x128xf32, #tpu.memory_space<vmem>>, vector<1x128xf32>
    tpu.vector_store %arg7[%c12_202, %c0_203], %371 {strides = array<i32>} : memref<16x128xf32, #tpu.memory_space<vmem>>, vector<1x128xf32>,
    %c16_i32_204 = arith.constant 16 : i32
    %373 = arith.muli %c2_i32_138, %c16_i32_204 : i32
    %374 = arith.addi %373, %0 : i32
    %c13_i32_205 = arith.constant 13 : i32
    %375 = arith.addi %374, %c13_i32_205 : i32
    %376 = arith.index_cast %375 : i32 to index
    %377 = memref.load %arg1[%376] : memref<128xi32, #tpu.memory_space<smem>>
    %378 = arith.index_cast %377 : i32 to index
    %c0_206 = arith.constant 0 : index
    %379 = vector.load %arg2[%378, %c0_206] : memref<56x128xf32, #tpu.memory_space<vmem>>, vector<1x128xf32>
    %c13_207 = arith.constant 13 : index
    %c0_208 = arith.constant 0 : index
    %380 = vector.load %arg7[%c13_207, %c0_208] : memref<16x128xf32, #tpu.memory_space<vmem>>, vector<1x128xf32>
    tpu.vector_store %arg7[%c13_207, %c0_208], %379 {strides = array<i32>} : memref<16x128xf32, #tpu.memory_space<vmem>>, vector<1x128xf32>,
    %c16_i32_209 = arith.constant 16 : i32
    %381 = arith.muli %c2_i32_138, %c16_i32_209 : i32
    %382 = arith.addi %381, %0 : i32
    %c14_i32_210 = arith.constant 14 : i32
    %383 = arith.addi %382, %c14_i32_210 : i32
    %384 = arith.index_cast %383 : i32 to index
    %385 = memref.load %arg1[%384] : memref<128xi32, #tpu.memory_space<smem>>
    %386 = arith.index_cast %385 : i32 to index
    %c0_211 = arith.constant 0 : index
    %387 = vector.load %arg2[%386, %c0_211] : memref<56x128xf32, #tpu.memory_space<vmem>>, vector<1x128xf32>
    %c14_212 = arith.constant 14 : index
    %c0_213 = arith.constant 0 : index
    %388 = vector.load %arg7[%c14_212, %c0_213] : memref<16x128xf32, #tpu.memory_space<vmem>>, vector<1x128xf32>
    tpu.vector_store %arg7[%c14_212, %c0_213], %387 {strides = array<i32>} : memref<16x128xf32, #tpu.memory_space<vmem>>, vector<1x128xf32>,
    %c16_i32_214 = arith.constant 16 : i32
    %389 = arith.muli %c2_i32_138, %c16_i32_214 : i32
    %390 = arith.addi %389, %0 : i32
    %c15_i32_215 = arith.constant 15 : i32
    %391 = arith.addi %390, %c15_i32_215 : i32
    %392 = arith.index_cast %391 : i32 to index
    %393 = memref.load %arg1[%392] : memref<128xi32, #tpu.memory_space<smem>>
    %394 = arith.index_cast %393 : i32 to index
    %c0_216 = arith.constant 0 : index
    %395 = vector.load %arg2[%394, %c0_216] : memref<56x128xf32, #tpu.memory_space<vmem>>, vector<1x128xf32>
    %c15_217 = arith.constant 15 : index
    %c0_218 = arith.constant 0 : index
    %396 = vector.load %arg7[%c15_217, %c0_218] : memref<16x128xf32, #tpu.memory_space<vmem>>, vector<1x128xf32>
    tpu.vector_store %arg7[%c15_217, %c0_218], %395 {strides = array<i32>} : memref<16x128xf32, #tpu.memory_space<vmem>>, vector<1x128xf32>,
    %cst_219 = arith.constant dense<0.000000e+00> : vector<16x128xf32>
    %397 = tpu.matmul %268, %1, %cst_219 {dimension_numbers = #tpu.dot_dimension_numbers<[1], [0], [0], [1], [0, 0, 1, 1], [], []>} : vector<16x128xbf16>, vector<128x128xbf16>, vector<16x128xf32> -> vector<16x128xf32>
    %c0_220 = arith.constant 0 : index
    %c0_221 = arith.constant 0 : index
    %398 = vector.load %arg7[%c0_220, %c0_221] : memref<16x128xf32, #tpu.memory_space<vmem>>, vector<16x128xf32>
    %399 = arith.addf %397, %398 : vector<16x128xf32>
    %400 = math.tanh %399 : vector<16x128xf32>
    %401 = arith.truncf %400 : vector<16x128xf32> to vector<16x128xbf16>
    %c3_i32_222 = arith.constant 3 : i32
    %c16_i32_223 = arith.constant 16 : i32
    %402 = arith.muli %c3_i32_222, %c16_i32_223 : i32
    %403 = arith.addi %402, %0 : i32
    %c0_i32_224 = arith.constant 0 : i32
    %404 = arith.addi %403, %c0_i32_224 : i32
    %405 = arith.index_cast %404 : i32 to index
    %406 = memref.load %arg1[%405] : memref<128xi32, #tpu.memory_space<smem>>
    %407 = arith.index_cast %406 : i32 to index
    %c0_225 = arith.constant 0 : index
    %408 = vector.load %arg2[%407, %c0_225] : memref<56x128xf32, #tpu.memory_space<vmem>>, vector<1x128xf32>
    %c0_226 = arith.constant 0 : index
    %c0_227 = arith.constant 0 : index
    %409 = vector.load %arg7[%c0_226, %c0_227] : memref<16x128xf32, #tpu.memory_space<vmem>>, vector<1x128xf32>
    tpu.vector_store %arg7[%c0_226, %c0_227], %408 {strides = array<i32>} : memref<16x128xf32, #tpu.memory_space<vmem>>, vector<1x128xf32>,
    %c16_i32_228 = arith.constant 16 : i32
    %410 = arith.muli %c3_i32_222, %c16_i32_228 : i32
    %411 = arith.addi %410, %0 : i32
    %c1_i32_229 = arith.constant 1 : i32
    %412 = arith.addi %411, %c1_i32_229 : i32
    %413 = arith.index_cast %412 : i32 to index
    %414 = memref.load %arg1[%413] : memref<128xi32, #tpu.memory_space<smem>>
    %415 = arith.index_cast %414 : i32 to index
    %c0_230 = arith.constant 0 : index
    %416 = vector.load %arg2[%415, %c0_230] : memref<56x128xf32, #tpu.memory_space<vmem>>, vector<1x128xf32>
    %c1_231 = arith.constant 1 : index
    %c0_232 = arith.constant 0 : index
    %417 = vector.load %arg7[%c1_231, %c0_232] : memref<16x128xf32, #tpu.memory_space<vmem>>, vector<1x128xf32>
    tpu.vector_store %arg7[%c1_231, %c0_232], %416 {strides = array<i32>} : memref<16x128xf32, #tpu.memory_space<vmem>>, vector<1x128xf32>,
    %c16_i32_233 = arith.constant 16 : i32
    %418 = arith.muli %c3_i32_222, %c16_i32_233 : i32
    %419 = arith.addi %418, %0 : i32
    %c2_i32_234 = arith.constant 2 : i32
    %420 = arith.addi %419, %c2_i32_234 : i32
    %421 = arith.index_cast %420 : i32 to index
    %422 = memref.load %arg1[%421] : memref<128xi32, #tpu.memory_space<smem>>
    %423 = arith.index_cast %422 : i32 to index
    %c0_235 = arith.constant 0 : index
    %424 = vector.load %arg2[%423, %c0_235] : memref<56x128xf32, #tpu.memory_space<vmem>>, vector<1x128xf32>
    %c2_236 = arith.constant 2 : index
    %c0_237 = arith.constant 0 : index
    %425 = vector.load %arg7[%c2_236, %c0_237] : memref<16x128xf32, #tpu.memory_space<vmem>>, vector<1x128xf32>
    tpu.vector_store %arg7[%c2_236, %c0_237], %424 {strides = array<i32>} : memref<16x128xf32, #tpu.memory_space<vmem>>, vector<1x128xf32>,
    %c16_i32_238 = arith.constant 16 : i32
    %426 = arith.muli %c3_i32_222, %c16_i32_238 : i32
    %427 = arith.addi %426, %0 : i32
    %c3_i32_239 = arith.constant 3 : i32
    %428 = arith.addi %427, %c3_i32_239 : i32
    %429 = arith.index_cast %428 : i32 to index
    %430 = memref.load %arg1[%429] : memref<128xi32, #tpu.memory_space<smem>>
    %431 = arith.index_cast %430 : i32 to index
    %c0_240 = arith.constant 0 : index
    %432 = vector.load %arg2[%431, %c0_240] : memref<56x128xf32, #tpu.memory_space<vmem>>, vector<1x128xf32>
    %c3_241 = arith.constant 3 : index
    %c0_242 = arith.constant 0 : index
    %433 = vector.load %arg7[%c3_241, %c0_242] : memref<16x128xf32, #tpu.memory_space<vmem>>, vector<1x128xf32>
    tpu.vector_store %arg7[%c3_241, %c0_242], %432 {strides = array<i32>} : memref<16x128xf32, #tpu.memory_space<vmem>>, vector<1x128xf32>,
    %c16_i32_243 = arith.constant 16 : i32
    %434 = arith.muli %c3_i32_222, %c16_i32_243 : i32
    %435 = arith.addi %434, %0 : i32
    %c4_i32_244 = arith.constant 4 : i32
    %436 = arith.addi %435, %c4_i32_244 : i32
    %437 = arith.index_cast %436 : i32 to index
    %438 = memref.load %arg1[%437] : memref<128xi32, #tpu.memory_space<smem>>
    %439 = arith.index_cast %438 : i32 to index
    %c0_245 = arith.constant 0 : index
    %440 = vector.load %arg2[%439, %c0_245] : memref<56x128xf32, #tpu.memory_space<vmem>>, vector<1x128xf32>
    %c4_246 = arith.constant 4 : index
    %c0_247 = arith.constant 0 : index
    %441 = vector.load %arg7[%c4_246, %c0_247] : memref<16x128xf32, #tpu.memory_space<vmem>>, vector<1x128xf32>
    tpu.vector_store %arg7[%c4_246, %c0_247], %440 {strides = array<i32>} : memref<16x128xf32, #tpu.memory_space<vmem>>, vector<1x128xf32>,
    %c16_i32_248 = arith.constant 16 : i32
    %442 = arith.muli %c3_i32_222, %c16_i32_248 : i32
    %443 = arith.addi %442, %0 : i32
    %c5_i32_249 = arith.constant 5 : i32
    %444 = arith.addi %443, %c5_i32_249 : i32
    %445 = arith.index_cast %444 : i32 to index
    %446 = memref.load %arg1[%445] : memref<128xi32, #tpu.memory_space<smem>>
    %447 = arith.index_cast %446 : i32 to index
    %c0_250 = arith.constant 0 : index
    %448 = vector.load %arg2[%447, %c0_250] : memref<56x128xf32, #tpu.memory_space<vmem>>, vector<1x128xf32>
    %c5_251 = arith.constant 5 : index
    %c0_252 = arith.constant 0 : index
    %449 = vector.load %arg7[%c5_251, %c0_252] : memref<16x128xf32, #tpu.memory_space<vmem>>, vector<1x128xf32>
    tpu.vector_store %arg7[%c5_251, %c0_252], %448 {strides = array<i32>} : memref<16x128xf32, #tpu.memory_space<vmem>>, vector<1x128xf32>,
    %c16_i32_253 = arith.constant 16 : i32
    %450 = arith.muli %c3_i32_222, %c16_i32_253 : i32
    %451 = arith.addi %450, %0 : i32
    %c6_i32_254 = arith.constant 6 : i32
    %452 = arith.addi %451, %c6_i32_254 : i32
    %453 = arith.index_cast %452 : i32 to index
    %454 = memref.load %arg1[%453] : memref<128xi32, #tpu.memory_space<smem>>
    %455 = arith.index_cast %454 : i32 to index
    %c0_255 = arith.constant 0 : index
    %456 = vector.load %arg2[%455, %c0_255] : memref<56x128xf32, #tpu.memory_space<vmem>>, vector<1x128xf32>
    %c6_256 = arith.constant 6 : index
    %c0_257 = arith.constant 0 : index
    %457 = vector.load %arg7[%c6_256, %c0_257] : memref<16x128xf32, #tpu.memory_space<vmem>>, vector<1x128xf32>
    tpu.vector_store %arg7[%c6_256, %c0_257], %456 {strides = array<i32>} : memref<16x128xf32, #tpu.memory_space<vmem>>, vector<1x128xf32>,
    %c16_i32_258 = arith.constant 16 : i32
    %458 = arith.muli %c3_i32_222, %c16_i32_258 : i32
    %459 = arith.addi %458, %0 : i32
    %c7_i32_259 = arith.constant 7 : i32
    %460 = arith.addi %459, %c7_i32_259 : i32
    %461 = arith.index_cast %460 : i32 to index
    %462 = memref.load %arg1[%461] : memref<128xi32, #tpu.memory_space<smem>>
    %463 = arith.index_cast %462 : i32 to index
    %c0_260 = arith.constant 0 : index
    %464 = vector.load %arg2[%463, %c0_260] : memref<56x128xf32, #tpu.memory_space<vmem>>, vector<1x128xf32>
    %c7_261 = arith.constant 7 : index
    %c0_262 = arith.constant 0 : index
    %465 = vector.load %arg7[%c7_261, %c0_262] : memref<16x128xf32, #tpu.memory_space<vmem>>, vector<1x128xf32>
    tpu.vector_store %arg7[%c7_261, %c0_262], %464 {strides = array<i32>} : memref<16x128xf32, #tpu.memory_space<vmem>>, vector<1x128xf32>,
    %c16_i32_263 = arith.constant 16 : i32
    %466 = arith.muli %c3_i32_222, %c16_i32_263 : i32
    %467 = arith.addi %466, %0 : i32
    %c8_i32_264 = arith.constant 8 : i32
    %468 = arith.addi %467, %c8_i32_264 : i32
    %469 = arith.index_cast %468 : i32 to index
    %470 = memref.load %arg1[%469] : memref<128xi32, #tpu.memory_space<smem>>
    %471 = arith.index_cast %470 : i32 to index
    %c0_265 = arith.constant 0 : index
    %472 = vector.load %arg2[%471, %c0_265] : memref<56x128xf32, #tpu.memory_space<vmem>>, vector<1x128xf32>
    %c8_266 = arith.constant 8 : index
    %c0_267 = arith.constant 0 : index
    %473 = vector.load %arg7[%c8_266, %c0_267] : memref<16x128xf32, #tpu.memory_space<vmem>>, vector<1x128xf32>
    tpu.vector_store %arg7[%c8_266, %c0_267], %472 {strides = array<i32>} : memref<16x128xf32, #tpu.memory_space<vmem>>, vector<1x128xf32>,
    %c16_i32_268 = arith.constant 16 : i32
    %474 = arith.muli %c3_i32_222, %c16_i32_268 : i32
    %475 = arith.addi %474, %0 : i32
    %c9_i32_269 = arith.constant 9 : i32
    %476 = arith.addi %475, %c9_i32_269 : i32
    %477 = arith.index_cast %476 : i32 to index
    %478 = memref.load %arg1[%477] : memref<128xi32, #tpu.memory_space<smem>>
    %479 = arith.index_cast %478 : i32 to index
    %c0_270 = arith.constant 0 : index
    %480 = vector.load %arg2[%479, %c0_270] : memref<56x128xf32, #tpu.memory_space<vmem>>, vector<1x128xf32>
    %c9_271 = arith.constant 9 : index
    %c0_272 = arith.constant 0 : index
    %481 = vector.load %arg7[%c9_271, %c0_272] : memref<16x128xf32, #tpu.memory_space<vmem>>, vector<1x128xf32>
    tpu.vector_store %arg7[%c9_271, %c0_272], %480 {strides = array<i32>} : memref<16x128xf32, #tpu.memory_space<vmem>>, vector<1x128xf32>,
    %c16_i32_273 = arith.constant 16 : i32
    %482 = arith.muli %c3_i32_222, %c16_i32_273 : i32
    %483 = arith.addi %482, %0 : i32
    %c10_i32_274 = arith.constant 10 : i32
    %484 = arith.addi %483, %c10_i32_274 : i32
    %485 = arith.index_cast %484 : i32 to index
    %486 = memref.load %arg1[%485] : memref<128xi32, #tpu.memory_space<smem>>
    %487 = arith.index_cast %486 : i32 to index
    %c0_275 = arith.constant 0 : index
    %488 = vector.load %arg2[%487, %c0_275] : memref<56x128xf32, #tpu.memory_space<vmem>>, vector<1x128xf32>
    %c10_276 = arith.constant 10 : index
    %c0_277 = arith.constant 0 : index
    %489 = vector.load %arg7[%c10_276, %c0_277] : memref<16x128xf32, #tpu.memory_space<vmem>>, vector<1x128xf32>
    tpu.vector_store %arg7[%c10_276, %c0_277], %488 {strides = array<i32>} : memref<16x128xf32, #tpu.memory_space<vmem>>, vector<1x128xf32>,
    %c16_i32_278 = arith.constant 16 : i32
    %490 = arith.muli %c3_i32_222, %c16_i32_278 : i32
    %491 = arith.addi %490, %0 : i32
    %c11_i32_279 = arith.constant 11 : i32
    %492 = arith.addi %491, %c11_i32_279 : i32
    %493 = arith.index_cast %492 : i32 to index
    %494 = memref.load %arg1[%493] : memref<128xi32, #tpu.memory_space<smem>>
    %495 = arith.index_cast %494 : i32 to index
    %c0_280 = arith.constant 0 : index
    %496 = vector.load %arg2[%495, %c0_280] : memref<56x128xf32, #tpu.memory_space<vmem>>, vector<1x128xf32>
    %c11_281 = arith.constant 11 : index
    %c0_282 = arith.constant 0 : index
    %497 = vector.load %arg7[%c11_281, %c0_282] : memref<16x128xf32, #tpu.memory_space<vmem>>, vector<1x128xf32>
    tpu.vector_store %arg7[%c11_281, %c0_282], %496 {strides = array<i32>} : memref<16x128xf32, #tpu.memory_space<vmem>>, vector<1x128xf32>,
    %c16_i32_283 = arith.constant 16 : i32
    %498 = arith.muli %c3_i32_222, %c16_i32_283 : i32
    %499 = arith.addi %498, %0 : i32
    %c12_i32_284 = arith.constant 12 : i32
    %500 = arith.addi %499, %c12_i32_284 : i32
    %501 = arith.index_cast %500 : i32 to index
    %502 = memref.load %arg1[%501] : memref<128xi32, #tpu.memory_space<smem>>
    %503 = arith.index_cast %502 : i32 to index
    %c0_285 = arith.constant 0 : index
    %504 = vector.load %arg2[%503, %c0_285] : memref<56x128xf32, #tpu.memory_space<vmem>>, vector<1x128xf32>
    %c12_286 = arith.constant 12 : index
    %c0_287 = arith.constant 0 : index
    %505 = vector.load %arg7[%c12_286, %c0_287] : memref<16x128xf32, #tpu.memory_space<vmem>>, vector<1x128xf32>
    tpu.vector_store %arg7[%c12_286, %c0_287], %504 {strides = array<i32>} : memref<16x128xf32, #tpu.memory_space<vmem>>, vector<1x128xf32>,
    %c16_i32_288 = arith.constant 16 : i32
    %506 = arith.muli %c3_i32_222, %c16_i32_288 : i32
    %507 = arith.addi %506, %0 : i32
    %c13_i32_289 = arith.constant 13 : i32
    %508 = arith.addi %507, %c13_i32_289 : i32
    %509 = arith.index_cast %508 : i32 to index
    %510 = memref.load %arg1[%509] : memref<128xi32, #tpu.memory_space<smem>>
    %511 = arith.index_cast %510 : i32 to index
    %c0_290 = arith.constant 0 : index
    %512 = vector.load %arg2[%511, %c0_290] : memref<56x128xf32, #tpu.memory_space<vmem>>, vector<1x128xf32>
    %c13_291 = arith.constant 13 : index
    %c0_292 = arith.constant 0 : index
    %513 = vector.load %arg7[%c13_291, %c0_292] : memref<16x128xf32, #tpu.memory_space<vmem>>, vector<1x128xf32>
    tpu.vector_store %arg7[%c13_291, %c0_292], %512 {strides = array<i32>} : memref<16x128xf32, #tpu.memory_space<vmem>>, vector<1x128xf32>,
    %c16_i32_293 = arith.constant 16 : i32
    %514 = arith.muli %c3_i32_222, %c16_i32_293 : i32
    %515 = arith.addi %514, %0 : i32
    %c14_i32_294 = arith.constant 14 : i32
    %516 = arith.addi %515, %c14_i32_294 : i32
    %517 = arith.index_cast %516 : i32 to index
    %518 = memref.load %arg1[%517] : memref<128xi32, #tpu.memory_space<smem>>
    %519 = arith.index_cast %518 : i32 to index
    %c0_295 = arith.constant 0 : index
    %520 = vector.load %arg2[%519, %c0_295] : memref<56x128xf32, #tpu.memory_space<vmem>>, vector<1x128xf32>
    %c14_296 = arith.constant 14 : index
    %c0_297 = arith.constant 0 : index
    %521 = vector.load %arg7[%c14_296, %c0_297] : memref<16x128xf32, #tpu.memory_space<vmem>>, vector<1x128xf32>
    tpu.vector_store %arg7[%c14_296, %c0_297], %520 {strides = array<i32>} : memref<16x128xf32, #tpu.memory_space<vmem>>, vector<1x128xf32>,
    %c16_i32_298 = arith.constant 16 : i32
    %522 = arith.muli %c3_i32_222, %c16_i32_298 : i32
    %523 = arith.addi %522, %0 : i32
    %c15_i32_299 = arith.constant 15 : i32
    %524 = arith.addi %523, %c15_i32_299 : i32
    %525 = arith.index_cast %524 : i32 to index
    %526 = memref.load %arg1[%525] : memref<128xi32, #tpu.memory_space<smem>>
    %527 = arith.index_cast %526 : i32 to index
    %c0_300 = arith.constant 0 : index
    %528 = vector.load %arg2[%527, %c0_300] : memref<56x128xf32, #tpu.memory_space<vmem>>, vector<1x128xf32>
    %c15_301 = arith.constant 15 : index
    %c0_302 = arith.constant 0 : index
    %529 = vector.load %arg7[%c15_301, %c0_302] : memref<16x128xf32, #tpu.memory_space<vmem>>, vector<1x128xf32>
    tpu.vector_store %arg7[%c15_301, %c0_302], %528 {strides = array<i32>} : memref<16x128xf32, #tpu.memory_space<vmem>>, vector<1x128xf32>,
    %cst_303 = arith.constant dense<0.000000e+00> : vector<16x128xf32>
    %530 = tpu.matmul %401, %1, %cst_303 {dimension_numbers = #tpu.dot_dimension_numbers<[1], [0], [0], [1], [0, 0, 1, 1], [], []>} : vector<16x128xbf16>, vector<128x128xbf16>, vector<16x128xf32> -> vector<16x128xf32>
    %c0_304 = arith.constant 0 : index
    %c0_305 = arith.constant 0 : index
    %531 = vector.load %arg7[%c0_304, %c0_305] : memref<16x128xf32, #tpu.memory_space<vmem>>, vector<16x128xf32>
    %532 = arith.addf %530, %531 : vector<16x128xf32>
    %533 = math.tanh %532 : vector<16x128xf32>
    %534 = arith.truncf %533 : vector<16x128xf32> to vector<16x128xbf16>
    %c4_i32_306 = arith.constant 4 : i32
    %c16_i32_307 = arith.constant 16 : i32
    %535 = arith.muli %c4_i32_306, %c16_i32_307 : i32
    %536 = arith.addi %535, %0 : i32
    %c0_i32_308 = arith.constant 0 : i32
    %537 = arith.addi %536, %c0_i32_308 : i32
    %538 = arith.index_cast %537 : i32 to index
    %539 = memref.load %arg1[%538] : memref<128xi32, #tpu.memory_space<smem>>
    %540 = arith.index_cast %539 : i32 to index
    %c0_309 = arith.constant 0 : index
    %541 = vector.load %arg2[%540, %c0_309] : memref<56x128xf32, #tpu.memory_space<vmem>>, vector<1x128xf32>
    %c0_310 = arith.constant 0 : index
    %c0_311 = arith.constant 0 : index
    %542 = vector.load %arg7[%c0_310, %c0_311] : memref<16x128xf32, #tpu.memory_space<vmem>>, vector<1x128xf32>
    tpu.vector_store %arg7[%c0_310, %c0_311], %541 {strides = array<i32>} : memref<16x128xf32, #tpu.memory_space<vmem>>, vector<1x128xf32>,
    %c16_i32_312 = arith.constant 16 : i32
    %543 = arith.muli %c4_i32_306, %c16_i32_312 : i32
    %544 = arith.addi %543, %0 : i32
    %c1_i32_313 = arith.constant 1 : i32
    %545 = arith.addi %544, %c1_i32_313 : i32
    %546 = arith.index_cast %545 : i32 to index
    %547 = memref.load %arg1[%546] : memref<128xi32, #tpu.memory_space<smem>>
    %548 = arith.index_cast %547 : i32 to index
    %c0_314 = arith.constant 0 : index
    %549 = vector.load %arg2[%548, %c0_314] : memref<56x128xf32, #tpu.memory_space<vmem>>, vector<1x128xf32>
    %c1_315 = arith.constant 1 : index
    %c0_316 = arith.constant 0 : index
    %550 = vector.load %arg7[%c1_315, %c0_316] : memref<16x128xf32, #tpu.memory_space<vmem>>, vector<1x128xf32>
    tpu.vector_store %arg7[%c1_315, %c0_316], %549 {strides = array<i32>} : memref<16x128xf32, #tpu.memory_space<vmem>>, vector<1x128xf32>,
    %c16_i32_317 = arith.constant 16 : i32
    %551 = arith.muli %c4_i32_306, %c16_i32_317 : i32
    %552 = arith.addi %551, %0 : i32
    %c2_i32_318 = arith.constant 2 : i32
    %553 = arith.addi %552, %c2_i32_318 : i32
    %554 = arith.index_cast %553 : i32 to index
    %555 = memref.load %arg1[%554] : memref<128xi32, #tpu.memory_space<smem>>
    %556 = arith.index_cast %555 : i32 to index
    %c0_319 = arith.constant 0 : index
    %557 = vector.load %arg2[%556, %c0_319] : memref<56x128xf32, #tpu.memory_space<vmem>>, vector<1x128xf32>
    %c2_320 = arith.constant 2 : index
    %c0_321 = arith.constant 0 : index
    %558 = vector.load %arg7[%c2_320, %c0_321] : memref<16x128xf32, #tpu.memory_space<vmem>>, vector<1x128xf32>
    tpu.vector_store %arg7[%c2_320, %c0_321], %557 {strides = array<i32>} : memref<16x128xf32, #tpu.memory_space<vmem>>, vector<1x128xf32>,
    %c16_i32_322 = arith.constant 16 : i32
    %559 = arith.muli %c4_i32_306, %c16_i32_322 : i32
    %560 = arith.addi %559, %0 : i32
    %c3_i32_323 = arith.constant 3 : i32
    %561 = arith.addi %560, %c3_i32_323 : i32
    %562 = arith.index_cast %561 : i32 to index
    %563 = memref.load %arg1[%562] : memref<128xi32, #tpu.memory_space<smem>>
    %564 = arith.index_cast %563 : i32 to index
    %c0_324 = arith.constant 0 : index
    %565 = vector.load %arg2[%564, %c0_324] : memref<56x128xf32, #tpu.memory_space<vmem>>, vector<1x128xf32>
    %c3_325 = arith.constant 3 : index
    %c0_326 = arith.constant 0 : index
    %566 = vector.load %arg7[%c3_325, %c0_326] : memref<16x128xf32, #tpu.memory_space<vmem>>, vector<1x128xf32>
    tpu.vector_store %arg7[%c3_325, %c0_326], %565 {strides = array<i32>} : memref<16x128xf32, #tpu.memory_space<vmem>>, vector<1x128xf32>,
    %c16_i32_327 = arith.constant 16 : i32
    %567 = arith.muli %c4_i32_306, %c16_i32_327 : i32
    %568 = arith.addi %567, %0 : i32
    %c4_i32_328 = arith.constant 4 : i32
    %569 = arith.addi %568, %c4_i32_328 : i32
    %570 = arith.index_cast %569 : i32 to index
    %571 = memref.load %arg1[%570] : memref<128xi32, #tpu.memory_space<smem>>
    %572 = arith.index_cast %571 : i32 to index
    %c0_329 = arith.constant 0 : index
    %573 = vector.load %arg2[%572, %c0_329] : memref<56x128xf32, #tpu.memory_space<vmem>>, vector<1x128xf32>
    %c4_330 = arith.constant 4 : index
    %c0_331 = arith.constant 0 : index
    %574 = vector.load %arg7[%c4_330, %c0_331] : memref<16x128xf32, #tpu.memory_space<vmem>>, vector<1x128xf32>
    tpu.vector_store %arg7[%c4_330, %c0_331], %573 {strides = array<i32>} : memref<16x128xf32, #tpu.memory_space<vmem>>, vector<1x128xf32>,
    %c16_i32_332 = arith.constant 16 : i32
    %575 = arith.muli %c4_i32_306, %c16_i32_332 : i32
    %576 = arith.addi %575, %0 : i32
    %c5_i32_333 = arith.constant 5 : i32
    %577 = arith.addi %576, %c5_i32_333 : i32
    %578 = arith.index_cast %577 : i32 to index
    %579 = memref.load %arg1[%578] : memref<128xi32, #tpu.memory_space<smem>>
    %580 = arith.index_cast %579 : i32 to index
    %c0_334 = arith.constant 0 : index
    %581 = vector.load %arg2[%580, %c0_334] : memref<56x128xf32, #tpu.memory_space<vmem>>, vector<1x128xf32>
    %c5_335 = arith.constant 5 : index
    %c0_336 = arith.constant 0 : index
    %582 = vector.load %arg7[%c5_335, %c0_336] : memref<16x128xf32, #tpu.memory_space<vmem>>, vector<1x128xf32>
    tpu.vector_store %arg7[%c5_335, %c0_336], %581 {strides = array<i32>} : memref<16x128xf32, #tpu.memory_space<vmem>>, vector<1x128xf32>,
    %c16_i32_337 = arith.constant 16 : i32
    %583 = arith.muli %c4_i32_306, %c16_i32_337 : i32
    %584 = arith.addi %583, %0 : i32
    %c6_i32_338 = arith.constant 6 : i32
    %585 = arith.addi %584, %c6_i32_338 : i32
    %586 = arith.index_cast %585 : i32 to index
    %587 = memref.load %arg1[%586] : memref<128xi32, #tpu.memory_space<smem>>
    %588 = arith.index_cast %587 : i32 to index
    %c0_339 = arith.constant 0 : index
    %589 = vector.load %arg2[%588, %c0_339] : memref<56x128xf32, #tpu.memory_space<vmem>>, vector<1x128xf32>
    %c6_340 = arith.constant 6 : index
    %c0_341 = arith.constant 0 : index
    %590 = vector.load %arg7[%c6_340, %c0_341] : memref<16x128xf32, #tpu.memory_space<vmem>>, vector<1x128xf32>
    tpu.vector_store %arg7[%c6_340, %c0_341], %589 {strides = array<i32>} : memref<16x128xf32, #tpu.memory_space<vmem>>, vector<1x128xf32>,
    %c16_i32_342 = arith.constant 16 : i32
    %591 = arith.muli %c4_i32_306, %c16_i32_342 : i32
    %592 = arith.addi %591, %0 : i32
    %c7_i32_343 = arith.constant 7 : i32
    %593 = arith.addi %592, %c7_i32_343 : i32
    %594 = arith.index_cast %593 : i32 to index
    %595 = memref.load %arg1[%594] : memref<128xi32, #tpu.memory_space<smem>>
    %596 = arith.index_cast %595 : i32 to index
    %c0_344 = arith.constant 0 : index
    %597 = vector.load %arg2[%596, %c0_344] : memref<56x128xf32, #tpu.memory_space<vmem>>, vector<1x128xf32>
    %c7_345 = arith.constant 7 : index
    %c0_346 = arith.constant 0 : index
    %598 = vector.load %arg7[%c7_345, %c0_346] : memref<16x128xf32, #tpu.memory_space<vmem>>, vector<1x128xf32>
    tpu.vector_store %arg7[%c7_345, %c0_346], %597 {strides = array<i32>} : memref<16x128xf32, #tpu.memory_space<vmem>>, vector<1x128xf32>,
    %c16_i32_347 = arith.constant 16 : i32
    %599 = arith.muli %c4_i32_306, %c16_i32_347 : i32
    %600 = arith.addi %599, %0 : i32
    %c8_i32_348 = arith.constant 8 : i32
    %601 = arith.addi %600, %c8_i32_348 : i32
    %602 = arith.index_cast %601 : i32 to index
    %603 = memref.load %arg1[%602] : memref<128xi32, #tpu.memory_space<smem>>
    %604 = arith.index_cast %603 : i32 to index
    %c0_349 = arith.constant 0 : index
    %605 = vector.load %arg2[%604, %c0_349] : memref<56x128xf32, #tpu.memory_space<vmem>>, vector<1x128xf32>
    %c8_350 = arith.constant 8 : index
    %c0_351 = arith.constant 0 : index
    %606 = vector.load %arg7[%c8_350, %c0_351] : memref<16x128xf32, #tpu.memory_space<vmem>>, vector<1x128xf32>
    tpu.vector_store %arg7[%c8_350, %c0_351], %605 {strides = array<i32>} : memref<16x128xf32, #tpu.memory_space<vmem>>, vector<1x128xf32>,
    %c16_i32_352 = arith.constant 16 : i32
    %607 = arith.muli %c4_i32_306, %c16_i32_352 : i32
    %608 = arith.addi %607, %0 : i32
    %c9_i32_353 = arith.constant 9 : i32
    %609 = arith.addi %608, %c9_i32_353 : i32
    %610 = arith.index_cast %609 : i32 to index
    %611 = memref.load %arg1[%610] : memref<128xi32, #tpu.memory_space<smem>>
    %612 = arith.index_cast %611 : i32 to index
    %c0_354 = arith.constant 0 : index
    %613 = vector.load %arg2[%612, %c0_354] : memref<56x128xf32, #tpu.memory_space<vmem>>, vector<1x128xf32>
    %c9_355 = arith.constant 9 : index
    %c0_356 = arith.constant 0 : index
    %614 = vector.load %arg7[%c9_355, %c0_356] : memref<16x128xf32, #tpu.memory_space<vmem>>, vector<1x128xf32>
    tpu.vector_store %arg7[%c9_355, %c0_356], %613 {strides = array<i32>} : memref<16x128xf32, #tpu.memory_space<vmem>>, vector<1x128xf32>,
    %c16_i32_357 = arith.constant 16 : i32
    %615 = arith.muli %c4_i32_306, %c16_i32_357 : i32
    %616 = arith.addi %615, %0 : i32
    %c10_i32_358 = arith.constant 10 : i32
    %617 = arith.addi %616, %c10_i32_358 : i32
    %618 = arith.index_cast %617 : i32 to index
    %619 = memref.load %arg1[%618] : memref<128xi32, #tpu.memory_space<smem>>
    %620 = arith.index_cast %619 : i32 to index
    %c0_359 = arith.constant 0 : index
    %621 = vector.load %arg2[%620, %c0_359] : memref<56x128xf32, #tpu.memory_space<vmem>>, vector<1x128xf32>
    %c10_360 = arith.constant 10 : index
    %c0_361 = arith.constant 0 : index
    %622 = vector.load %arg7[%c10_360, %c0_361] : memref<16x128xf32, #tpu.memory_space<vmem>>, vector<1x128xf32>
    tpu.vector_store %arg7[%c10_360, %c0_361], %621 {strides = array<i32>} : memref<16x128xf32, #tpu.memory_space<vmem>>, vector<1x128xf32>,
    %c16_i32_362 = arith.constant 16 : i32
    %623 = arith.muli %c4_i32_306, %c16_i32_362 : i32
    %624 = arith.addi %623, %0 : i32
    %c11_i32_363 = arith.constant 11 : i32
    %625 = arith.addi %624, %c11_i32_363 : i32
    %626 = arith.index_cast %625 : i32 to index
    %627 = memref.load %arg1[%626] : memref<128xi32, #tpu.memory_space<smem>>
    %628 = arith.index_cast %627 : i32 to index
    %c0_364 = arith.constant 0 : index
    %629 = vector.load %arg2[%628, %c0_364] : memref<56x128xf32, #tpu.memory_space<vmem>>, vector<1x128xf32>
    %c11_365 = arith.constant 11 : index
    %c0_366 = arith.constant 0 : index
    %630 = vector.load %arg7[%c11_365, %c0_366] : memref<16x128xf32, #tpu.memory_space<vmem>>, vector<1x128xf32>
    tpu.vector_store %arg7[%c11_365, %c0_366], %629 {strides = array<i32>} : memref<16x128xf32, #tpu.memory_space<vmem>>, vector<1x128xf32>,
    %c16_i32_367 = arith.constant 16 : i32
    %631 = arith.muli %c4_i32_306, %c16_i32_367 : i32
    %632 = arith.addi %631, %0 : i32
    %c12_i32_368 = arith.constant 12 : i32
    %633 = arith.addi %632, %c12_i32_368 : i32
    %634 = arith.index_cast %633 : i32 to index
    %635 = memref.load %arg1[%634] : memref<128xi32, #tpu.memory_space<smem>>
    %636 = arith.index_cast %635 : i32 to index
    %c0_369 = arith.constant 0 : index
    %637 = vector.load %arg2[%636, %c0_369] : memref<56x128xf32, #tpu.memory_space<vmem>>, vector<1x128xf32>
    %c12_370 = arith.constant 12 : index
    %c0_371 = arith.constant 0 : index
    %638 = vector.load %arg7[%c12_370, %c0_371] : memref<16x128xf32, #tpu.memory_space<vmem>>, vector<1x128xf32>
    tpu.vector_store %arg7[%c12_370, %c0_371], %637 {strides = array<i32>} : memref<16x128xf32, #tpu.memory_space<vmem>>, vector<1x128xf32>,
    %c16_i32_372 = arith.constant 16 : i32
    %639 = arith.muli %c4_i32_306, %c16_i32_372 : i32
    %640 = arith.addi %639, %0 : i32
    %c13_i32_373 = arith.constant 13 : i32
    %641 = arith.addi %640, %c13_i32_373 : i32
    %642 = arith.index_cast %641 : i32 to index
    %643 = memref.load %arg1[%642] : memref<128xi32, #tpu.memory_space<smem>>
    %644 = arith.index_cast %643 : i32 to index
    %c0_374 = arith.constant 0 : index
    %645 = vector.load %arg2[%644, %c0_374] : memref<56x128xf32, #tpu.memory_space<vmem>>, vector<1x128xf32>
    %c13_375 = arith.constant 13 : index
    %c0_376 = arith.constant 0 : index
    %646 = vector.load %arg7[%c13_375, %c0_376] : memref<16x128xf32, #tpu.memory_space<vmem>>, vector<1x128xf32>
    tpu.vector_store %arg7[%c13_375, %c0_376], %645 {strides = array<i32>} : memref<16x128xf32, #tpu.memory_space<vmem>>, vector<1x128xf32>,
    %c16_i32_377 = arith.constant 16 : i32
    %647 = arith.muli %c4_i32_306, %c16_i32_377 : i32
    %648 = arith.addi %647, %0 : i32
    %c14_i32_378 = arith.constant 14 : i32
    %649 = arith.addi %648, %c14_i32_378 : i32
    %650 = arith.index_cast %649 : i32 to index
    %651 = memref.load %arg1[%650] : memref<128xi32, #tpu.memory_space<smem>>
    %652 = arith.index_cast %651 : i32 to index
    %c0_379 = arith.constant 0 : index
    %653 = vector.load %arg2[%652, %c0_379] : memref<56x128xf32, #tpu.memory_space<vmem>>, vector<1x128xf32>
    %c14_380 = arith.constant 14 : index
    %c0_381 = arith.constant 0 : index
    %654 = vector.load %arg7[%c14_380, %c0_381] : memref<16x128xf32, #tpu.memory_space<vmem>>, vector<1x128xf32>
    tpu.vector_store %arg7[%c14_380, %c0_381], %653 {strides = array<i32>} : memref<16x128xf32, #tpu.memory_space<vmem>>, vector<1x128xf32>,
    %c16_i32_382 = arith.constant 16 : i32
    %655 = arith.muli %c4_i32_306, %c16_i32_382 : i32
    %656 = arith.addi %655, %0 : i32
    %c15_i32_383 = arith.constant 15 : i32
    %657 = arith.addi %656, %c15_i32_383 : i32
    %658 = arith.index_cast %657 : i32 to index
    %659 = memref.load %arg1[%658] : memref<128xi32, #tpu.memory_space<smem>>
    %660 = arith.index_cast %659 : i32 to index
    %c0_384 = arith.constant 0 : index
    %661 = vector.load %arg2[%660, %c0_384] : memref<56x128xf32, #tpu.memory_space<vmem>>, vector<1x128xf32>
    %c15_385 = arith.constant 15 : index
    %c0_386 = arith.constant 0 : index
    %662 = vector.load %arg7[%c15_385, %c0_386] : memref<16x128xf32, #tpu.memory_space<vmem>>, vector<1x128xf32>
    tpu.vector_store %arg7[%c15_385, %c0_386], %661 {strides = array<i32>} : memref<16x128xf32, #tpu.memory_space<vmem>>, vector<1x128xf32>,
    %cst_387 = arith.constant dense<0.000000e+00> : vector<16x128xf32>
    %663 = tpu.matmul %534, %1, %cst_387 {dimension_numbers = #tpu.dot_dimension_numbers<[1], [0], [0], [1], [0, 0, 1, 1], [], []>} : vector<16x128xbf16>, vector<128x128xbf16>, vector<16x128xf32> -> vector<16x128xf32>
    %c0_388 = arith.constant 0 : index
    %c0_389 = arith.constant 0 : index
    %664 = vector.load %arg7[%c0_388, %c0_389] : memref<16x128xf32, #tpu.memory_space<vmem>>, vector<16x128xf32>
    %665 = arith.addf %663, %664 : vector<16x128xf32>
    %666 = math.tanh %665 : vector<16x128xf32>
    %667 = arith.truncf %666 : vector<16x128xf32> to vector<16x128xbf16>
    %c5_i32_390 = arith.constant 5 : i32
    %c16_i32_391 = arith.constant 16 : i32
    %668 = arith.muli %c5_i32_390, %c16_i32_391 : i32
    %669 = arith.addi %668, %0 : i32
    %c0_i32_392 = arith.constant 0 : i32
    %670 = arith.addi %669, %c0_i32_392 : i32
    %671 = arith.index_cast %670 : i32 to index
    %672 = memref.load %arg1[%671] : memref<128xi32, #tpu.memory_space<smem>>
    %673 = arith.index_cast %672 : i32 to index
    %c0_393 = arith.constant 0 : index
    %674 = vector.load %arg2[%673, %c0_393] : memref<56x128xf32, #tpu.memory_space<vmem>>, vector<1x128xf32>
    %c0_394 = arith.constant 0 : index
    %c0_395 = arith.constant 0 : index
    %675 = vector.load %arg7[%c0_394, %c0_395] : memref<16x128xf32, #tpu.memory_space<vmem>>, vector<1x128xf32>
    tpu.vector_store %arg7[%c0_394, %c0_395], %674 {strides = array<i32>} : memref<16x128xf32, #tpu.memory_space<vmem>>, vector<1x128xf32>,
    %c16_i32_396 = arith.constant 16 : i32
    %676 = arith.muli %c5_i32_390, %c16_i32_396 : i32
    %677 = arith.addi %676, %0 : i32
    %c1_i32_397 = arith.constant 1 : i32
    %678 = arith.addi %677, %c1_i32_397 : i32
    %679 = arith.index_cast %678 : i32 to index
    %680 = memref.load %arg1[%679] : memref<128xi32, #tpu.memory_space<smem>>
    %681 = arith.index_cast %680 : i32 to index
    %c0_398 = arith.constant 0 : index
    %682 = vector.load %arg2[%681, %c0_398] : memref<56x128xf32, #tpu.memory_space<vmem>>, vector<1x128xf32>
    %c1_399 = arith.constant 1 : index
    %c0_400 = arith.constant 0 : index
    %683 = vector.load %arg7[%c1_399, %c0_400] : memref<16x128xf32, #tpu.memory_space<vmem>>, vector<1x128xf32>
    tpu.vector_store %arg7[%c1_399, %c0_400], %682 {strides = array<i32>} : memref<16x128xf32, #tpu.memory_space<vmem>>, vector<1x128xf32>,
    %c16_i32_401 = arith.constant 16 : i32
    %684 = arith.muli %c5_i32_390, %c16_i32_401 : i32
    %685 = arith.addi %684, %0 : i32
    %c2_i32_402 = arith.constant 2 : i32
    %686 = arith.addi %685, %c2_i32_402 : i32
    %687 = arith.index_cast %686 : i32 to index
    %688 = memref.load %arg1[%687] : memref<128xi32, #tpu.memory_space<smem>>
    %689 = arith.index_cast %688 : i32 to index
    %c0_403 = arith.constant 0 : index
    %690 = vector.load %arg2[%689, %c0_403] : memref<56x128xf32, #tpu.memory_space<vmem>>, vector<1x128xf32>
    %c2_404 = arith.constant 2 : index
    %c0_405 = arith.constant 0 : index
    %691 = vector.load %arg7[%c2_404, %c0_405] : memref<16x128xf32, #tpu.memory_space<vmem>>, vector<1x128xf32>
    tpu.vector_store %arg7[%c2_404, %c0_405], %690 {strides = array<i32>} : memref<16x128xf32, #tpu.memory_space<vmem>>, vector<1x128xf32>,
    %c16_i32_406 = arith.constant 16 : i32
    %692 = arith.muli %c5_i32_390, %c16_i32_406 : i32
    %693 = arith.addi %692, %0 : i32
    %c3_i32_407 = arith.constant 3 : i32
    %694 = arith.addi %693, %c3_i32_407 : i32
    %695 = arith.index_cast %694 : i32 to index
    %696 = memref.load %arg1[%695] : memref<128xi32, #tpu.memory_space<smem>>
    %697 = arith.index_cast %696 : i32 to index
    %c0_408 = arith.constant 0 : index
    %698 = vector.load %arg2[%697, %c0_408] : memref<56x128xf32, #tpu.memory_space<vmem>>, vector<1x128xf32>
    %c3_409 = arith.constant 3 : index
    %c0_410 = arith.constant 0 : index
    %699 = vector.load %arg7[%c3_409, %c0_410] : memref<16x128xf32, #tpu.memory_space<vmem>>, vector<1x128xf32>
    tpu.vector_store %arg7[%c3_409, %c0_410], %698 {strides = array<i32>} : memref<16x128xf32, #tpu.memory_space<vmem>>, vector<1x128xf32>,
    %c16_i32_411 = arith.constant 16 : i32
    %700 = arith.muli %c5_i32_390, %c16_i32_411 : i32
    %701 = arith.addi %700, %0 : i32
    %c4_i32_412 = arith.constant 4 : i32
    %702 = arith.addi %701, %c4_i32_412 : i32
    %703 = arith.index_cast %702 : i32 to index
    %704 = memref.load %arg1[%703] : memref<128xi32, #tpu.memory_space<smem>>
    %705 = arith.index_cast %704 : i32 to index
    %c0_413 = arith.constant 0 : index
    %706 = vector.load %arg2[%705, %c0_413] : memref<56x128xf32, #tpu.memory_space<vmem>>, vector<1x128xf32>
    %c4_414 = arith.constant 4 : index
    %c0_415 = arith.constant 0 : index
    %707 = vector.load %arg7[%c4_414, %c0_415] : memref<16x128xf32, #tpu.memory_space<vmem>>, vector<1x128xf32>
    tpu.vector_store %arg7[%c4_414, %c0_415], %706 {strides = array<i32>} : memref<16x128xf32, #tpu.memory_space<vmem>>, vector<1x128xf32>,
    %c16_i32_416 = arith.constant 16 : i32
    %708 = arith.muli %c5_i32_390, %c16_i32_416 : i32
    %709 = arith.addi %708, %0 : i32
    %c5_i32_417 = arith.constant 5 : i32
    %710 = arith.addi %709, %c5_i32_417 : i32
    %711 = arith.index_cast %710 : i32 to index
    %712 = memref.load %arg1[%711] : memref<128xi32, #tpu.memory_space<smem>>
    %713 = arith.index_cast %712 : i32 to index
    %c0_418 = arith.constant 0 : index
    %714 = vector.load %arg2[%713, %c0_418] : memref<56x128xf32, #tpu.memory_space<vmem>>, vector<1x128xf32>
    %c5_419 = arith.constant 5 : index
    %c0_420 = arith.constant 0 : index
    %715 = vector.load %arg7[%c5_419, %c0_420] : memref<16x128xf32, #tpu.memory_space<vmem>>, vector<1x128xf32>
    tpu.vector_store %arg7[%c5_419, %c0_420], %714 {strides = array<i32>} : memref<16x128xf32, #tpu.memory_space<vmem>>, vector<1x128xf32>,
    %c16_i32_421 = arith.constant 16 : i32
    %716 = arith.muli %c5_i32_390, %c16_i32_421 : i32
    %717 = arith.addi %716, %0 : i32
    %c6_i32_422 = arith.constant 6 : i32
    %718 = arith.addi %717, %c6_i32_422 : i32
    %719 = arith.index_cast %718 : i32 to index
    %720 = memref.load %arg1[%719] : memref<128xi32, #tpu.memory_space<smem>>
    %721 = arith.index_cast %720 : i32 to index
    %c0_423 = arith.constant 0 : index
    %722 = vector.load %arg2[%721, %c0_423] : memref<56x128xf32, #tpu.memory_space<vmem>>, vector<1x128xf32>
    %c6_424 = arith.constant 6 : index
    %c0_425 = arith.constant 0 : index
    %723 = vector.load %arg7[%c6_424, %c0_425] : memref<16x128xf32, #tpu.memory_space<vmem>>, vector<1x128xf32>
    tpu.vector_store %arg7[%c6_424, %c0_425], %722 {strides = array<i32>} : memref<16x128xf32, #tpu.memory_space<vmem>>, vector<1x128xf32>,
    %c16_i32_426 = arith.constant 16 : i32
    %724 = arith.muli %c5_i32_390, %c16_i32_426 : i32
    %725 = arith.addi %724, %0 : i32
    %c7_i32_427 = arith.constant 7 : i32
    %726 = arith.addi %725, %c7_i32_427 : i32
    %727 = arith.index_cast %726 : i32 to index
    %728 = memref.load %arg1[%727] : memref<128xi32, #tpu.memory_space<smem>>
    %729 = arith.index_cast %728 : i32 to index
    %c0_428 = arith.constant 0 : index
    %730 = vector.load %arg2[%729, %c0_428] : memref<56x128xf32, #tpu.memory_space<vmem>>, vector<1x128xf32>
    %c7_429 = arith.constant 7 : index
    %c0_430 = arith.constant 0 : index
    %731 = vector.load %arg7[%c7_429, %c0_430] : memref<16x128xf32, #tpu.memory_space<vmem>>, vector<1x128xf32>
    tpu.vector_store %arg7[%c7_429, %c0_430], %730 {strides = array<i32>} : memref<16x128xf32, #tpu.memory_space<vmem>>, vector<1x128xf32>,
    %c16_i32_431 = arith.constant 16 : i32
    %732 = arith.muli %c5_i32_390, %c16_i32_431 : i32
    %733 = arith.addi %732, %0 : i32
    %c8_i32_432 = arith.constant 8 : i32
    %734 = arith.addi %733, %c8_i32_432 : i32
    %735 = arith.index_cast %734 : i32 to index
    %736 = memref.load %arg1[%735] : memref<128xi32, #tpu.memory_space<smem>>
    %737 = arith.index_cast %736 : i32 to index
    %c0_433 = arith.constant 0 : index
    %738 = vector.load %arg2[%737, %c0_433] : memref<56x128xf32, #tpu.memory_space<vmem>>, vector<1x128xf32>
    %c8_434 = arith.constant 8 : index
    %c0_435 = arith.constant 0 : index
    %739 = vector.load %arg7[%c8_434, %c0_435] : memref<16x128xf32, #tpu.memory_space<vmem>>, vector<1x128xf32>
    tpu.vector_store %arg7[%c8_434, %c0_435], %738 {strides = array<i32>} : memref<16x128xf32, #tpu.memory_space<vmem>>, vector<1x128xf32>,
    %c16_i32_436 = arith.constant 16 : i32
    %740 = arith.muli %c5_i32_390, %c16_i32_436 : i32
    %741 = arith.addi %740, %0 : i32
    %c9_i32_437 = arith.constant 9 : i32
    %742 = arith.addi %741, %c9_i32_437 : i32
    %743 = arith.index_cast %742 : i32 to index
    %744 = memref.load %arg1[%743] : memref<128xi32, #tpu.memory_space<smem>>
    %745 = arith.index_cast %744 : i32 to index
    %c0_438 = arith.constant 0 : index
    %746 = vector.load %arg2[%745, %c0_438] : memref<56x128xf32, #tpu.memory_space<vmem>>, vector<1x128xf32>
    %c9_439 = arith.constant 9 : index
    %c0_440 = arith.constant 0 : index
    %747 = vector.load %arg7[%c9_439, %c0_440] : memref<16x128xf32, #tpu.memory_space<vmem>>, vector<1x128xf32>
    tpu.vector_store %arg7[%c9_439, %c0_440], %746 {strides = array<i32>} : memref<16x128xf32, #tpu.memory_space<vmem>>, vector<1x128xf32>,
    %c16_i32_441 = arith.constant 16 : i32
    %748 = arith.muli %c5_i32_390, %c16_i32_441 : i32
    %749 = arith.addi %748, %0 : i32
    %c10_i32_442 = arith.constant 10 : i32
    %750 = arith.addi %749, %c10_i32_442 : i32
    %751 = arith.index_cast %750 : i32 to index
    %752 = memref.load %arg1[%751] : memref<128xi32, #tpu.memory_space<smem>>
    %753 = arith.index_cast %752 : i32 to index
    %c0_443 = arith.constant 0 : index
    %754 = vector.load %arg2[%753, %c0_443] : memref<56x128xf32, #tpu.memory_space<vmem>>, vector<1x128xf32>
    %c10_444 = arith.constant 10 : index
    %c0_445 = arith.constant 0 : index
    %755 = vector.load %arg7[%c10_444, %c0_445] : memref<16x128xf32, #tpu.memory_space<vmem>>, vector<1x128xf32>
    tpu.vector_store %arg7[%c10_444, %c0_445], %754 {strides = array<i32>} : memref<16x128xf32, #tpu.memory_space<vmem>>, vector<1x128xf32>,
    %c16_i32_446 = arith.constant 16 : i32
    %756 = arith.muli %c5_i32_390, %c16_i32_446 : i32
    %757 = arith.addi %756, %0 : i32
    %c11_i32_447 = arith.constant 11 : i32
    %758 = arith.addi %757, %c11_i32_447 : i32
    %759 = arith.index_cast %758 : i32 to index
    %760 = memref.load %arg1[%759] : memref<128xi32, #tpu.memory_space<smem>>
    %761 = arith.index_cast %760 : i32 to index
    %c0_448 = arith.constant 0 : index
    %762 = vector.load %arg2[%761, %c0_448] : memref<56x128xf32, #tpu.memory_space<vmem>>, vector<1x128xf32>
    %c11_449 = arith.constant 11 : index
    %c0_450 = arith.constant 0 : index
    %763 = vector.load %arg7[%c11_449, %c0_450] : memref<16x128xf32, #tpu.memory_space<vmem>>, vector<1x128xf32>
    tpu.vector_store %arg7[%c11_449, %c0_450], %762 {strides = array<i32>} : memref<16x128xf32, #tpu.memory_space<vmem>>, vector<1x128xf32>,
    %c16_i32_451 = arith.constant 16 : i32
    %764 = arith.muli %c5_i32_390, %c16_i32_451 : i32
    %765 = arith.addi %764, %0 : i32
    %c12_i32_452 = arith.constant 12 : i32
    %766 = arith.addi %765, %c12_i32_452 : i32
    %767 = arith.index_cast %766 : i32 to index
    %768 = memref.load %arg1[%767] : memref<128xi32, #tpu.memory_space<smem>>
    %769 = arith.index_cast %768 : i32 to index
    %c0_453 = arith.constant 0 : index
    %770 = vector.load %arg2[%769, %c0_453] : memref<56x128xf32, #tpu.memory_space<vmem>>, vector<1x128xf32>
    %c12_454 = arith.constant 12 : index
    %c0_455 = arith.constant 0 : index
    %771 = vector.load %arg7[%c12_454, %c0_455] : memref<16x128xf32, #tpu.memory_space<vmem>>, vector<1x128xf32>
    tpu.vector_store %arg7[%c12_454, %c0_455], %770 {strides = array<i32>} : memref<16x128xf32, #tpu.memory_space<vmem>>, vector<1x128xf32>,
    %c16_i32_456 = arith.constant 16 : i32
    %772 = arith.muli %c5_i32_390, %c16_i32_456 : i32
    %773 = arith.addi %772, %0 : i32
    %c13_i32_457 = arith.constant 13 : i32
    %774 = arith.addi %773, %c13_i32_457 : i32
    %775 = arith.index_cast %774 : i32 to index
    %776 = memref.load %arg1[%775] : memref<128xi32, #tpu.memory_space<smem>>
    %777 = arith.index_cast %776 : i32 to index
    %c0_458 = arith.constant 0 : index
    %778 = vector.load %arg2[%777, %c0_458] : memref<56x128xf32, #tpu.memory_space<vmem>>, vector<1x128xf32>
    %c13_459 = arith.constant 13 : index
    %c0_460 = arith.constant 0 : index
    %779 = vector.load %arg7[%c13_459, %c0_460] : memref<16x128xf32, #tpu.memory_space<vmem>>, vector<1x128xf32>
    tpu.vector_store %arg7[%c13_459, %c0_460], %778 {strides = array<i32>} : memref<16x128xf32, #tpu.memory_space<vmem>>, vector<1x128xf32>,
    %c16_i32_461 = arith.constant 16 : i32
    %780 = arith.muli %c5_i32_390, %c16_i32_461 : i32
    %781 = arith.addi %780, %0 : i32
    %c14_i32_462 = arith.constant 14 : i32
    %782 = arith.addi %781, %c14_i32_462 : i32
    %783 = arith.index_cast %782 : i32 to index
    %784 = memref.load %arg1[%783] : memref<128xi32, #tpu.memory_space<smem>>
    %785 = arith.index_cast %784 : i32 to index
    %c0_463 = arith.constant 0 : index
    %786 = vector.load %arg2[%785, %c0_463] : memref<56x128xf32, #tpu.memory_space<vmem>>, vector<1x128xf32>
    %c14_464 = arith.constant 14 : index
    %c0_465 = arith.constant 0 : index
    %787 = vector.load %arg7[%c14_464, %c0_465] : memref<16x128xf32, #tpu.memory_space<vmem>>, vector<1x128xf32>
    tpu.vector_store %arg7[%c14_464, %c0_465], %786 {strides = array<i32>} : memref<16x128xf32, #tpu.memory_space<vmem>>, vector<1x128xf32>,
    %c16_i32_466 = arith.constant 16 : i32
    %788 = arith.muli %c5_i32_390, %c16_i32_466 : i32
    %789 = arith.addi %788, %0 : i32
    %c15_i32_467 = arith.constant 15 : i32
    %790 = arith.addi %789, %c15_i32_467 : i32
    %791 = arith.index_cast %790 : i32 to index
    %792 = memref.load %arg1[%791] : memref<128xi32, #tpu.memory_space<smem>>
    %793 = arith.index_cast %792 : i32 to index
    %c0_468 = arith.constant 0 : index
    %794 = vector.load %arg2[%793, %c0_468] : memref<56x128xf32, #tpu.memory_space<vmem>>, vector<1x128xf32>
    %c15_469 = arith.constant 15 : index
    %c0_470 = arith.constant 0 : index
    %795 = vector.load %arg7[%c15_469, %c0_470] : memref<16x128xf32, #tpu.memory_space<vmem>>, vector<1x128xf32>
    tpu.vector_store %arg7[%c15_469, %c0_470], %794 {strides = array<i32>} : memref<16x128xf32, #tpu.memory_space<vmem>>, vector<1x128xf32>,
    %cst_471 = arith.constant dense<0.000000e+00> : vector<16x128xf32>
    %796 = tpu.matmul %667, %1, %cst_471 {dimension_numbers = #tpu.dot_dimension_numbers<[1], [0], [0], [1], [0, 0, 1, 1], [], []>} : vector<16x128xbf16>, vector<128x128xbf16>, vector<16x128xf32> -> vector<16x128xf32>
    %c0_472 = arith.constant 0 : index
    %c0_473 = arith.constant 0 : index
    %797 = vector.load %arg7[%c0_472, %c0_473] : memref<16x128xf32, #tpu.memory_space<vmem>>, vector<16x128xf32>
    %798 = arith.addf %796, %797 : vector<16x128xf32>
    %799 = math.tanh %798 : vector<16x128xf32>
    %800 = arith.truncf %799 : vector<16x128xf32> to vector<16x128xbf16>
    %c6_i32_474 = arith.constant 6 : i32
    %c16_i32_475 = arith.constant 16 : i32
    %801 = arith.muli %c6_i32_474, %c16_i32_475 : i32
    %802 = arith.addi %801, %0 : i32
    %c0_i32_476 = arith.constant 0 : i32
    %803 = arith.addi %802, %c0_i32_476 : i32
    %804 = arith.index_cast %803 : i32 to index
    %805 = memref.load %arg1[%804] : memref<128xi32, #tpu.memory_space<smem>>
    %806 = arith.index_cast %805 : i32 to index
    %c0_477 = arith.constant 0 : index
    %807 = vector.load %arg2[%806, %c0_477] : memref<56x128xf32, #tpu.memory_space<vmem>>, vector<1x128xf32>
    %c0_478 = arith.constant 0 : index
    %c0_479 = arith.constant 0 : index
    %808 = vector.load %arg7[%c0_478, %c0_479] : memref<16x128xf32, #tpu.memory_space<vmem>>, vector<1x128xf32>
    tpu.vector_store %arg7[%c0_478, %c0_479], %807 {strides = array<i32>} : memref<16x128xf32, #tpu.memory_space<vmem>>, vector<1x128xf32>,
    %c16_i32_480 = arith.constant 16 : i32
    %809 = arith.muli %c6_i32_474, %c16_i32_480 : i32
    %810 = arith.addi %809, %0 : i32
    %c1_i32_481 = arith.constant 1 : i32
    %811 = arith.addi %810, %c1_i32_481 : i32
    %812 = arith.index_cast %811 : i32 to index
    %813 = memref.load %arg1[%812] : memref<128xi32, #tpu.memory_space<smem>>
    %814 = arith.index_cast %813 : i32 to index
    %c0_482 = arith.constant 0 : index
    %815 = vector.load %arg2[%814, %c0_482] : memref<56x128xf32, #tpu.memory_space<vmem>>, vector<1x128xf32>
    %c1_483 = arith.constant 1 : index
    %c0_484 = arith.constant 0 : index
    %816 = vector.load %arg7[%c1_483, %c0_484] : memref<16x128xf32, #tpu.memory_space<vmem>>, vector<1x128xf32>
    tpu.vector_store %arg7[%c1_483, %c0_484], %815 {strides = array<i32>} : memref<16x128xf32, #tpu.memory_space<vmem>>, vector<1x128xf32>,
    %c16_i32_485 = arith.constant 16 : i32
    %817 = arith.muli %c6_i32_474, %c16_i32_485 : i32
    %818 = arith.addi %817, %0 : i32
    %c2_i32_486 = arith.constant 2 : i32
    %819 = arith.addi %818, %c2_i32_486 : i32
    %820 = arith.index_cast %819 : i32 to index
    %821 = memref.load %arg1[%820] : memref<128xi32, #tpu.memory_space<smem>>
    %822 = arith.index_cast %821 : i32 to index
    %c0_487 = arith.constant 0 : index
    %823 = vector.load %arg2[%822, %c0_487] : memref<56x128xf32, #tpu.memory_space<vmem>>, vector<1x128xf32>
    %c2_488 = arith.constant 2 : index
    %c0_489 = arith.constant 0 : index
    %824 = vector.load %arg7[%c2_488, %c0_489] : memref<16x128xf32, #tpu.memory_space<vmem>>, vector<1x128xf32>
    tpu.vector_store %arg7[%c2_488, %c0_489], %823 {strides = array<i32>} : memref<16x128xf32, #tpu.memory_space<vmem>>, vector<1x128xf32>,
    %c16_i32_490 = arith.constant 16 : i32
    %825 = arith.muli %c6_i32_474, %c16_i32_490 : i32
    %826 = arith.addi %825, %0 : i32
    %c3_i32_491 = arith.constant 3 : i32
    %827 = arith.addi %826, %c3_i32_491 : i32
    %828 = arith.index_cast %827 : i32 to index
    %829 = memref.load %arg1[%828] : memref<128xi32, #tpu.memory_space<smem>>
    %830 = arith.index_cast %829 : i32 to index
    %c0_492 = arith.constant 0 : index
    %831 = vector.load %arg2[%830, %c0_492] : memref<56x128xf32, #tpu.memory_space<vmem>>, vector<1x128xf32>
    %c3_493 = arith.constant 3 : index
    %c0_494 = arith.constant 0 : index
    %832 = vector.load %arg7[%c3_493, %c0_494] : memref<16x128xf32, #tpu.memory_space<vmem>>, vector<1x128xf32>
    tpu.vector_store %arg7[%c3_493, %c0_494], %831 {strides = array<i32>} : memref<16x128xf32, #tpu.memory_space<vmem>>, vector<1x128xf32>,
    %c16_i32_495 = arith.constant 16 : i32
    %833 = arith.muli %c6_i32_474, %c16_i32_495 : i32
    %834 = arith.addi %833, %0 : i32
    %c4_i32_496 = arith.constant 4 : i32
    %835 = arith.addi %834, %c4_i32_496 : i32
    %836 = arith.index_cast %835 : i32 to index
    %837 = memref.load %arg1[%836] : memref<128xi32, #tpu.memory_space<smem>>
    %838 = arith.index_cast %837 : i32 to index
    %c0_497 = arith.constant 0 : index
    %839 = vector.load %arg2[%838, %c0_497] : memref<56x128xf32, #tpu.memory_space<vmem>>, vector<1x128xf32>
    %c4_498 = arith.constant 4 : index
    %c0_499 = arith.constant 0 : index
    %840 = vector.load %arg7[%c4_498, %c0_499] : memref<16x128xf32, #tpu.memory_space<vmem>>, vector<1x128xf32>
    tpu.vector_store %arg7[%c4_498, %c0_499], %839 {strides = array<i32>} : memref<16x128xf32, #tpu.memory_space<vmem>>, vector<1x128xf32>,
    %c16_i32_500 = arith.constant 16 : i32
    %841 = arith.muli %c6_i32_474, %c16_i32_500 : i32
    %842 = arith.addi %841, %0 : i32
    %c5_i32_501 = arith.constant 5 : i32
    %843 = arith.addi %842, %c5_i32_501 : i32
    %844 = arith.index_cast %843 : i32 to index
    %845 = memref.load %arg1[%844] : memref<128xi32, #tpu.memory_space<smem>>
    %846 = arith.index_cast %845 : i32 to index
    %c0_502 = arith.constant 0 : index
    %847 = vector.load %arg2[%846, %c0_502] : memref<56x128xf32, #tpu.memory_space<vmem>>, vector<1x128xf32>
    %c5_503 = arith.constant 5 : index
    %c0_504 = arith.constant 0 : index
    %848 = vector.load %arg7[%c5_503, %c0_504] : memref<16x128xf32, #tpu.memory_space<vmem>>, vector<1x128xf32>
    tpu.vector_store %arg7[%c5_503, %c0_504], %847 {strides = array<i32>} : memref<16x128xf32, #tpu.memory_space<vmem>>, vector<1x128xf32>,
    %c16_i32_505 = arith.constant 16 : i32
    %849 = arith.muli %c6_i32_474, %c16_i32_505 : i32
    %850 = arith.addi %849, %0 : i32
    %c6_i32_506 = arith.constant 6 : i32
    %851 = arith.addi %850, %c6_i32_506 : i32
    %852 = arith.index_cast %851 : i32 to index
    %853 = memref.load %arg1[%852] : memref<128xi32, #tpu.memory_space<smem>>
    %854 = arith.index_cast %853 : i32 to index
    %c0_507 = arith.constant 0 : index
    %855 = vector.load %arg2[%854, %c0_507] : memref<56x128xf32, #tpu.memory_space<vmem>>, vector<1x128xf32>
    %c6_508 = arith.constant 6 : index
    %c0_509 = arith.constant 0 : index
    %856 = vector.load %arg7[%c6_508, %c0_509] : memref<16x128xf32, #tpu.memory_space<vmem>>, vector<1x128xf32>
    tpu.vector_store %arg7[%c6_508, %c0_509], %855 {strides = array<i32>} : memref<16x128xf32, #tpu.memory_space<vmem>>, vector<1x128xf32>,
    %c16_i32_510 = arith.constant 16 : i32
    %857 = arith.muli %c6_i32_474, %c16_i32_510 : i32
    %858 = arith.addi %857, %0 : i32
    %c7_i32_511 = arith.constant 7 : i32
    %859 = arith.addi %858, %c7_i32_511 : i32
    %860 = arith.index_cast %859 : i32 to index
    %861 = memref.load %arg1[%860] : memref<128xi32, #tpu.memory_space<smem>>
    %862 = arith.index_cast %861 : i32 to index
    %c0_512 = arith.constant 0 : index
    %863 = vector.load %arg2[%862, %c0_512] : memref<56x128xf32, #tpu.memory_space<vmem>>, vector<1x128xf32>
    %c7_513 = arith.constant 7 : index
    %c0_514 = arith.constant 0 : index
    %864 = vector.load %arg7[%c7_513, %c0_514] : memref<16x128xf32, #tpu.memory_space<vmem>>, vector<1x128xf32>
    tpu.vector_store %arg7[%c7_513, %c0_514], %863 {strides = array<i32>} : memref<16x128xf32, #tpu.memory_space<vmem>>, vector<1x128xf32>,
    %c16_i32_515 = arith.constant 16 : i32
    %865 = arith.muli %c6_i32_474, %c16_i32_515 : i32
    %866 = arith.addi %865, %0 : i32
    %c8_i32_516 = arith.constant 8 : i32
    %867 = arith.addi %866, %c8_i32_516 : i32
    %868 = arith.index_cast %867 : i32 to index
    %869 = memref.load %arg1[%868] : memref<128xi32, #tpu.memory_space<smem>>
    %870 = arith.index_cast %869 : i32 to index
    %c0_517 = arith.constant 0 : index
    %871 = vector.load %arg2[%870, %c0_517] : memref<56x128xf32, #tpu.memory_space<vmem>>, vector<1x128xf32>
    %c8_518 = arith.constant 8 : index
    %c0_519 = arith.constant 0 : index
    %872 = vector.load %arg7[%c8_518, %c0_519] : memref<16x128xf32, #tpu.memory_space<vmem>>, vector<1x128xf32>
    tpu.vector_store %arg7[%c8_518, %c0_519], %871 {strides = array<i32>} : memref<16x128xf32, #tpu.memory_space<vmem>>, vector<1x128xf32>,
    %c16_i32_520 = arith.constant 16 : i32
    %873 = arith.muli %c6_i32_474, %c16_i32_520 : i32
    %874 = arith.addi %873, %0 : i32
    %c9_i32_521 = arith.constant 9 : i32
    %875 = arith.addi %874, %c9_i32_521 : i32
    %876 = arith.index_cast %875 : i32 to index
    %877 = memref.load %arg1[%876] : memref<128xi32, #tpu.memory_space<smem>>
    %878 = arith.index_cast %877 : i32 to index
    %c0_522 = arith.constant 0 : index
    %879 = vector.load %arg2[%878, %c0_522] : memref<56x128xf32, #tpu.memory_space<vmem>>, vector<1x128xf32>
    %c9_523 = arith.constant 9 : index
    %c0_524 = arith.constant 0 : index
    %880 = vector.load %arg7[%c9_523, %c0_524] : memref<16x128xf32, #tpu.memory_space<vmem>>, vector<1x128xf32>
    tpu.vector_store %arg7[%c9_523, %c0_524], %879 {strides = array<i32>} : memref<16x128xf32, #tpu.memory_space<vmem>>, vector<1x128xf32>,
    %c16_i32_525 = arith.constant 16 : i32
    %881 = arith.muli %c6_i32_474, %c16_i32_525 : i32
    %882 = arith.addi %881, %0 : i32
    %c10_i32_526 = arith.constant 10 : i32
    %883 = arith.addi %882, %c10_i32_526 : i32
    %884 = arith.index_cast %883 : i32 to index
    %885 = memref.load %arg1[%884] : memref<128xi32, #tpu.memory_space<smem>>
    %886 = arith.index_cast %885 : i32 to index
    %c0_527 = arith.constant 0 : index
    %887 = vector.load %arg2[%886, %c0_527] : memref<56x128xf32, #tpu.memory_space<vmem>>, vector<1x128xf32>
    %c10_528 = arith.constant 10 : index
    %c0_529 = arith.constant 0 : index
    %888 = vector.load %arg7[%c10_528, %c0_529] : memref<16x128xf32, #tpu.memory_space<vmem>>, vector<1x128xf32>
    tpu.vector_store %arg7[%c10_528, %c0_529], %887 {strides = array<i32>} : memref<16x128xf32, #tpu.memory_space<vmem>>, vector<1x128xf32>,
    %c16_i32_530 = arith.constant 16 : i32
    %889 = arith.muli %c6_i32_474, %c16_i32_530 : i32
    %890 = arith.addi %889, %0 : i32
    %c11_i32_531 = arith.constant 11 : i32
    %891 = arith.addi %890, %c11_i32_531 : i32
    %892 = arith.index_cast %891 : i32 to index
    %893 = memref.load %arg1[%892] : memref<128xi32, #tpu.memory_space<smem>>
    %894 = arith.index_cast %893 : i32 to index
    %c0_532 = arith.constant 0 : index
    %895 = vector.load %arg2[%894, %c0_532] : memref<56x128xf32, #tpu.memory_space<vmem>>, vector<1x128xf32>
    %c11_533 = arith.constant 11 : index
    %c0_534 = arith.constant 0 : index
    %896 = vector.load %arg7[%c11_533, %c0_534] : memref<16x128xf32, #tpu.memory_space<vmem>>, vector<1x128xf32>
    tpu.vector_store %arg7[%c11_533, %c0_534], %895 {strides = array<i32>} : memref<16x128xf32, #tpu.memory_space<vmem>>, vector<1x128xf32>,
    %c16_i32_535 = arith.constant 16 : i32
    %897 = arith.muli %c6_i32_474, %c16_i32_535 : i32
    %898 = arith.addi %897, %0 : i32
    %c12_i32_536 = arith.constant 12 : i32
    %899 = arith.addi %898, %c12_i32_536 : i32
    %900 = arith.index_cast %899 : i32 to index
    %901 = memref.load %arg1[%900] : memref<128xi32, #tpu.memory_space<smem>>
    %902 = arith.index_cast %901 : i32 to index
    %c0_537 = arith.constant 0 : index
    %903 = vector.load %arg2[%902, %c0_537] : memref<56x128xf32, #tpu.memory_space<vmem>>, vector<1x128xf32>
    %c12_538 = arith.constant 12 : index
    %c0_539 = arith.constant 0 : index
    %904 = vector.load %arg7[%c12_538, %c0_539] : memref<16x128xf32, #tpu.memory_space<vmem>>, vector<1x128xf32>
    tpu.vector_store %arg7[%c12_538, %c0_539], %903 {strides = array<i32>} : memref<16x128xf32, #tpu.memory_space<vmem>>, vector<1x128xf32>,
    %c16_i32_540 = arith.constant 16 : i32
    %905 = arith.muli %c6_i32_474, %c16_i32_540 : i32
    %906 = arith.addi %905, %0 : i32
    %c13_i32_541 = arith.constant 13 : i32
    %907 = arith.addi %906, %c13_i32_541 : i32
    %908 = arith.index_cast %907 : i32 to index
    %909 = memref.load %arg1[%908] : memref<128xi32, #tpu.memory_space<smem>>
    %910 = arith.index_cast %909 : i32 to index
    %c0_542 = arith.constant 0 : index
    %911 = vector.load %arg2[%910, %c0_542] : memref<56x128xf32, #tpu.memory_space<vmem>>, vector<1x128xf32>
    %c13_543 = arith.constant 13 : index
    %c0_544 = arith.constant 0 : index
    %912 = vector.load %arg7[%c13_543, %c0_544] : memref<16x128xf32, #tpu.memory_space<vmem>>, vector<1x128xf32>
    tpu.vector_store %arg7[%c13_543, %c0_544], %911 {strides = array<i32>} : memref<16x128xf32, #tpu.memory_space<vmem>>, vector<1x128xf32>,
    %c16_i32_545 = arith.constant 16 : i32
    %913 = arith.muli %c6_i32_474, %c16_i32_545 : i32
    %914 = arith.addi %913, %0 : i32
    %c14_i32_546 = arith.constant 14 : i32
    %915 = arith.addi %914, %c14_i32_546 : i32
    %916 = arith.index_cast %915 : i32 to index
    %917 = memref.load %arg1[%916] : memref<128xi32, #tpu.memory_space<smem>>
    %918 = arith.index_cast %917 : i32 to index
    %c0_547 = arith.constant 0 : index
    %919 = vector.load %arg2[%918, %c0_547] : memref<56x128xf32, #tpu.memory_space<vmem>>, vector<1x128xf32>
    %c14_548 = arith.constant 14 : index
    %c0_549 = arith.constant 0 : index
    %920 = vector.load %arg7[%c14_548, %c0_549] : memref<16x128xf32, #tpu.memory_space<vmem>>, vector<1x128xf32>
    tpu.vector_store %arg7[%c14_548, %c0_549], %919 {strides = array<i32>} : memref<16x128xf32, #tpu.memory_space<vmem>>, vector<1x128xf32>,
    %c16_i32_550 = arith.constant 16 : i32
    %921 = arith.muli %c6_i32_474, %c16_i32_550 : i32
    %922 = arith.addi %921, %0 : i32
    %c15_i32_551 = arith.constant 15 : i32
    %923 = arith.addi %922, %c15_i32_551 : i32
    %924 = arith.index_cast %923 : i32 to index
    %925 = memref.load %arg1[%924] : memref<128xi32, #tpu.memory_space<smem>>
    %926 = arith.index_cast %925 : i32 to index
    %c0_552 = arith.constant 0 : index
    %927 = vector.load %arg2[%926, %c0_552] : memref<56x128xf32, #tpu.memory_space<vmem>>, vector<1x128xf32>
    %c15_553 = arith.constant 15 : index
    %c0_554 = arith.constant 0 : index
    %928 = vector.load %arg7[%c15_553, %c0_554] : memref<16x128xf32, #tpu.memory_space<vmem>>, vector<1x128xf32>
    tpu.vector_store %arg7[%c15_553, %c0_554], %927 {strides = array<i32>} : memref<16x128xf32, #tpu.memory_space<vmem>>, vector<1x128xf32>,
    %cst_555 = arith.constant dense<0.000000e+00> : vector<16x128xf32>
    %929 = tpu.matmul %800, %1, %cst_555 {dimension_numbers = #tpu.dot_dimension_numbers<[1], [0], [0], [1], [0, 0, 1, 1], [], []>} : vector<16x128xbf16>, vector<128x128xbf16>, vector<16x128xf32> -> vector<16x128xf32>
    %c0_556 = arith.constant 0 : index
    %c0_557 = arith.constant 0 : index
    %930 = vector.load %arg7[%c0_556, %c0_557] : memref<16x128xf32, #tpu.memory_space<vmem>>, vector<16x128xf32>
    %931 = arith.addf %929, %930 : vector<16x128xf32>
    %932 = math.tanh %931 : vector<16x128xf32>
    %933 = arith.truncf %932 : vector<16x128xf32> to vector<16x128xbf16>
    %c7_i32_558 = arith.constant 7 : i32
    %c16_i32_559 = arith.constant 16 : i32
    %934 = arith.muli %c7_i32_558, %c16_i32_559 : i32
    %935 = arith.addi %934, %0 : i32
    %c0_i32_560 = arith.constant 0 : i32
    %936 = arith.addi %935, %c0_i32_560 : i32
    %937 = arith.index_cast %936 : i32 to index
    %938 = memref.load %arg1[%937] : memref<128xi32, #tpu.memory_space<smem>>
    %939 = arith.index_cast %938 : i32 to index
    %c0_561 = arith.constant 0 : index
    %940 = vector.load %arg2[%939, %c0_561] : memref<56x128xf32, #tpu.memory_space<vmem>>, vector<1x128xf32>
    %c0_562 = arith.constant 0 : index
    %c0_563 = arith.constant 0 : index
    %941 = vector.load %arg7[%c0_562, %c0_563] : memref<16x128xf32, #tpu.memory_space<vmem>>, vector<1x128xf32>
    tpu.vector_store %arg7[%c0_562, %c0_563], %940 {strides = array<i32>} : memref<16x128xf32, #tpu.memory_space<vmem>>, vector<1x128xf32>,
    %c16_i32_564 = arith.constant 16 : i32
    %942 = arith.muli %c7_i32_558, %c16_i32_564 : i32
    %943 = arith.addi %942, %0 : i32
    %c1_i32_565 = arith.constant 1 : i32
    %944 = arith.addi %943, %c1_i32_565 : i32
    %945 = arith.index_cast %944 : i32 to index
    %946 = memref.load %arg1[%945] : memref<128xi32, #tpu.memory_space<smem>>
    %947 = arith.index_cast %946 : i32 to index
    %c0_566 = arith.constant 0 : index
    %948 = vector.load %arg2[%947, %c0_566] : memref<56x128xf32, #tpu.memory_space<vmem>>, vector<1x128xf32>
    %c1_567 = arith.constant 1 : index
    %c0_568 = arith.constant 0 : index
    %949 = vector.load %arg7[%c1_567, %c0_568] : memref<16x128xf32, #tpu.memory_space<vmem>>, vector<1x128xf32>
    tpu.vector_store %arg7[%c1_567, %c0_568], %948 {strides = array<i32>} : memref<16x128xf32, #tpu.memory_space<vmem>>, vector<1x128xf32>,
    %c16_i32_569 = arith.constant 16 : i32
    %950 = arith.muli %c7_i32_558, %c16_i32_569 : i32
    %951 = arith.addi %950, %0 : i32
    %c2_i32_570 = arith.constant 2 : i32
    %952 = arith.addi %951, %c2_i32_570 : i32
    %953 = arith.index_cast %952 : i32 to index
    %954 = memref.load %arg1[%953] : memref<128xi32, #tpu.memory_space<smem>>
    %955 = arith.index_cast %954 : i32 to index
    %c0_571 = arith.constant 0 : index
    %956 = vector.load %arg2[%955, %c0_571] : memref<56x128xf32, #tpu.memory_space<vmem>>, vector<1x128xf32>
    %c2_572 = arith.constant 2 : index
    %c0_573 = arith.constant 0 : index
    %957 = vector.load %arg7[%c2_572, %c0_573] : memref<16x128xf32, #tpu.memory_space<vmem>>, vector<1x128xf32>
    tpu.vector_store %arg7[%c2_572, %c0_573], %956 {strides = array<i32>} : memref<16x128xf32, #tpu.memory_space<vmem>>, vector<1x128xf32>,
    %c16_i32_574 = arith.constant 16 : i32
    %958 = arith.muli %c7_i32_558, %c16_i32_574 : i32
    %959 = arith.addi %958, %0 : i32
    %c3_i32_575 = arith.constant 3 : i32
    %960 = arith.addi %959, %c3_i32_575 : i32
    %961 = arith.index_cast %960 : i32 to index
    %962 = memref.load %arg1[%961] : memref<128xi32, #tpu.memory_space<smem>>
    %963 = arith.index_cast %962 : i32 to index
    %c0_576 = arith.constant 0 : index
    %964 = vector.load %arg2[%963, %c0_576] : memref<56x128xf32, #tpu.memory_space<vmem>>, vector<1x128xf32>
    %c3_577 = arith.constant 3 : index
    %c0_578 = arith.constant 0 : index
    %965 = vector.load %arg7[%c3_577, %c0_578] : memref<16x128xf32, #tpu.memory_space<vmem>>, vector<1x128xf32>
    tpu.vector_store %arg7[%c3_577, %c0_578], %964 {strides = array<i32>} : memref<16x128xf32, #tpu.memory_space<vmem>>, vector<1x128xf32>,
    %c16_i32_579 = arith.constant 16 : i32
    %966 = arith.muli %c7_i32_558, %c16_i32_579 : i32
    %967 = arith.addi %966, %0 : i32
    %c4_i32_580 = arith.constant 4 : i32
    %968 = arith.addi %967, %c4_i32_580 : i32
    %969 = arith.index_cast %968 : i32 to index
    %970 = memref.load %arg1[%969] : memref<128xi32, #tpu.memory_space<smem>>
    %971 = arith.index_cast %970 : i32 to index
    %c0_581 = arith.constant 0 : index
    %972 = vector.load %arg2[%971, %c0_581] : memref<56x128xf32, #tpu.memory_space<vmem>>, vector<1x128xf32>
    %c4_582 = arith.constant 4 : index
    %c0_583 = arith.constant 0 : index
    %973 = vector.load %arg7[%c4_582, %c0_583] : memref<16x128xf32, #tpu.memory_space<vmem>>, vector<1x128xf32>
    tpu.vector_store %arg7[%c4_582, %c0_583], %972 {strides = array<i32>} : memref<16x128xf32, #tpu.memory_space<vmem>>, vector<1x128xf32>,
    %c16_i32_584 = arith.constant 16 : i32
    %974 = arith.muli %c7_i32_558, %c16_i32_584 : i32
    %975 = arith.addi %974, %0 : i32
    %c5_i32_585 = arith.constant 5 : i32
    %976 = arith.addi %975, %c5_i32_585 : i32
    %977 = arith.index_cast %976 : i32 to index
    %978 = memref.load %arg1[%977] : memref<128xi32, #tpu.memory_space<smem>>
    %979 = arith.index_cast %978 : i32 to index
    %c0_586 = arith.constant 0 : index
    %980 = vector.load %arg2[%979, %c0_586] : memref<56x128xf32, #tpu.memory_space<vmem>>, vector<1x128xf32>
    %c5_587 = arith.constant 5 : index
    %c0_588 = arith.constant 0 : index
    %981 = vector.load %arg7[%c5_587, %c0_588] : memref<16x128xf32, #tpu.memory_space<vmem>>, vector<1x128xf32>
    tpu.vector_store %arg7[%c5_587, %c0_588], %980 {strides = array<i32>} : memref<16x128xf32, #tpu.memory_space<vmem>>, vector<1x128xf32>,
    %c16_i32_589 = arith.constant 16 : i32
    %982 = arith.muli %c7_i32_558, %c16_i32_589 : i32
    %983 = arith.addi %982, %0 : i32
    %c6_i32_590 = arith.constant 6 : i32
    %984 = arith.addi %983, %c6_i32_590 : i32
    %985 = arith.index_cast %984 : i32 to index
    %986 = memref.load %arg1[%985] : memref<128xi32, #tpu.memory_space<smem>>
    %987 = arith.index_cast %986 : i32 to index
    %c0_591 = arith.constant 0 : index
    %988 = vector.load %arg2[%987, %c0_591] : memref<56x128xf32, #tpu.memory_space<vmem>>, vector<1x128xf32>
    %c6_592 = arith.constant 6 : index
    %c0_593 = arith.constant 0 : index
    %989 = vector.load %arg7[%c6_592, %c0_593] : memref<16x128xf32, #tpu.memory_space<vmem>>, vector<1x128xf32>
    tpu.vector_store %arg7[%c6_592, %c0_593], %988 {strides = array<i32>} : memref<16x128xf32, #tpu.memory_space<vmem>>, vector<1x128xf32>,
    %c16_i32_594 = arith.constant 16 : i32
    %990 = arith.muli %c7_i32_558, %c16_i32_594 : i32
    %991 = arith.addi %990, %0 : i32
    %c7_i32_595 = arith.constant 7 : i32
    %992 = arith.addi %991, %c7_i32_595 : i32
    %993 = arith.index_cast %992 : i32 to index
    %994 = memref.load %arg1[%993] : memref<128xi32, #tpu.memory_space<smem>>
    %995 = arith.index_cast %994 : i32 to index
    %c0_596 = arith.constant 0 : index
    %996 = vector.load %arg2[%995, %c0_596] : memref<56x128xf32, #tpu.memory_space<vmem>>, vector<1x128xf32>
    %c7_597 = arith.constant 7 : index
    %c0_598 = arith.constant 0 : index
    %997 = vector.load %arg7[%c7_597, %c0_598] : memref<16x128xf32, #tpu.memory_space<vmem>>, vector<1x128xf32>
    tpu.vector_store %arg7[%c7_597, %c0_598], %996 {strides = array<i32>} : memref<16x128xf32, #tpu.memory_space<vmem>>, vector<1x128xf32>,
    %c16_i32_599 = arith.constant 16 : i32
    %998 = arith.muli %c7_i32_558, %c16_i32_599 : i32
    %999 = arith.addi %998, %0 : i32
    %c8_i32_600 = arith.constant 8 : i32
    %1000 = arith.addi %999, %c8_i32_600 : i32
    %1001 = arith.index_cast %1000 : i32 to index
    %1002 = memref.load %arg1[%1001] : memref<128xi32, #tpu.memory_space<smem>>
    %1003 = arith.index_cast %1002 : i32 to index
    %c0_601 = arith.constant 0 : index
    %1004 = vector.load %arg2[%1003, %c0_601] : memref<56x128xf32, #tpu.memory_space<vmem>>, vector<1x128xf32>
    %c8_602 = arith.constant 8 : index
    %c0_603 = arith.constant 0 : index
    %1005 = vector.load %arg7[%c8_602, %c0_603] : memref<16x128xf32, #tpu.memory_space<vmem>>, vector<1x128xf32>
    tpu.vector_store %arg7[%c8_602, %c0_603], %1004 {strides = array<i32>} : memref<16x128xf32, #tpu.memory_space<vmem>>, vector<1x128xf32>,
    %c16_i32_604 = arith.constant 16 : i32
    %1006 = arith.muli %c7_i32_558, %c16_i32_604 : i32
    %1007 = arith.addi %1006, %0 : i32
    %c9_i32_605 = arith.constant 9 : i32
    %1008 = arith.addi %1007, %c9_i32_605 : i32
    %1009 = arith.index_cast %1008 : i32 to index
    %1010 = memref.load %arg1[%1009] : memref<128xi32, #tpu.memory_space<smem>>
    %1011 = arith.index_cast %1010 : i32 to index
    %c0_606 = arith.constant 0 : index
    %1012 = vector.load %arg2[%1011, %c0_606] : memref<56x128xf32, #tpu.memory_space<vmem>>, vector<1x128xf32>
    %c9_607 = arith.constant 9 : index
    %c0_608 = arith.constant 0 : index
    %1013 = vector.load %arg7[%c9_607, %c0_608] : memref<16x128xf32, #tpu.memory_space<vmem>>, vector<1x128xf32>
    tpu.vector_store %arg7[%c9_607, %c0_608], %1012 {strides = array<i32>} : memref<16x128xf32, #tpu.memory_space<vmem>>, vector<1x128xf32>,
    %c16_i32_609 = arith.constant 16 : i32
    %1014 = arith.muli %c7_i32_558, %c16_i32_609 : i32
    %1015 = arith.addi %1014, %0 : i32
    %c10_i32_610 = arith.constant 10 : i32
    %1016 = arith.addi %1015, %c10_i32_610 : i32
    %1017 = arith.index_cast %1016 : i32 to index
    %1018 = memref.load %arg1[%1017] : memref<128xi32, #tpu.memory_space<smem>>
    %1019 = arith.index_cast %1018 : i32 to index
    %c0_611 = arith.constant 0 : index
    %1020 = vector.load %arg2[%1019, %c0_611] : memref<56x128xf32, #tpu.memory_space<vmem>>, vector<1x128xf32>
    %c10_612 = arith.constant 10 : index
    %c0_613 = arith.constant 0 : index
    %1021 = vector.load %arg7[%c10_612, %c0_613] : memref<16x128xf32, #tpu.memory_space<vmem>>, vector<1x128xf32>
    tpu.vector_store %arg7[%c10_612, %c0_613], %1020 {strides = array<i32>} : memref<16x128xf32, #tpu.memory_space<vmem>>, vector<1x128xf32>,
    %c16_i32_614 = arith.constant 16 : i32
    %1022 = arith.muli %c7_i32_558, %c16_i32_614 : i32
    %1023 = arith.addi %1022, %0 : i32
    %c11_i32_615 = arith.constant 11 : i32
    %1024 = arith.addi %1023, %c11_i32_615 : i32
    %1025 = arith.index_cast %1024 : i32 to index
    %1026 = memref.load %arg1[%1025] : memref<128xi32, #tpu.memory_space<smem>>
    %1027 = arith.index_cast %1026 : i32 to index
    %c0_616 = arith.constant 0 : index
    %1028 = vector.load %arg2[%1027, %c0_616] : memref<56x128xf32, #tpu.memory_space<vmem>>, vector<1x128xf32>
    %c11_617 = arith.constant 11 : index
    %c0_618 = arith.constant 0 : index
    %1029 = vector.load %arg7[%c11_617, %c0_618] : memref<16x128xf32, #tpu.memory_space<vmem>>, vector<1x128xf32>
    tpu.vector_store %arg7[%c11_617, %c0_618], %1028 {strides = array<i32>} : memref<16x128xf32, #tpu.memory_space<vmem>>, vector<1x128xf32>,
    %c16_i32_619 = arith.constant 16 : i32
    %1030 = arith.muli %c7_i32_558, %c16_i32_619 : i32
    %1031 = arith.addi %1030, %0 : i32
    %c12_i32_620 = arith.constant 12 : i32
    %1032 = arith.addi %1031, %c12_i32_620 : i32
    %1033 = arith.index_cast %1032 : i32 to index
    %1034 = memref.load %arg1[%1033] : memref<128xi32, #tpu.memory_space<smem>>
    %1035 = arith.index_cast %1034 : i32 to index
    %c0_621 = arith.constant 0 : index
    %1036 = vector.load %arg2[%1035, %c0_621] : memref<56x128xf32, #tpu.memory_space<vmem>>, vector<1x128xf32>
    %c12_622 = arith.constant 12 : index
    %c0_623 = arith.constant 0 : index
    %1037 = vector.load %arg7[%c12_622, %c0_623] : memref<16x128xf32, #tpu.memory_space<vmem>>, vector<1x128xf32>
    tpu.vector_store %arg7[%c12_622, %c0_623], %1036 {strides = array<i32>} : memref<16x128xf32, #tpu.memory_space<vmem>>, vector<1x128xf32>,
    %c16_i32_624 = arith.constant 16 : i32
    %1038 = arith.muli %c7_i32_558, %c16_i32_624 : i32
    %1039 = arith.addi %1038, %0 : i32
    %c13_i32_625 = arith.constant 13 : i32
    %1040 = arith.addi %1039, %c13_i32_625 : i32
    %1041 = arith.index_cast %1040 : i32 to index
    %1042 = memref.load %arg1[%1041] : memref<128xi32, #tpu.memory_space<smem>>
    %1043 = arith.index_cast %1042 : i32 to index
    %c0_626 = arith.constant 0 : index
    %1044 = vector.load %arg2[%1043, %c0_626] : memref<56x128xf32, #tpu.memory_space<vmem>>, vector<1x128xf32>
    %c13_627 = arith.constant 13 : index
    %c0_628 = arith.constant 0 : index
    %1045 = vector.load %arg7[%c13_627, %c0_628] : memref<16x128xf32, #tpu.memory_space<vmem>>, vector<1x128xf32>
    tpu.vector_store %arg7[%c13_627, %c0_628], %1044 {strides = array<i32>} : memref<16x128xf32, #tpu.memory_space<vmem>>, vector<1x128xf32>,
    %c16_i32_629 = arith.constant 16 : i32
    %1046 = arith.muli %c7_i32_558, %c16_i32_629 : i32
    %1047 = arith.addi %1046, %0 : i32
    %c14_i32_630 = arith.constant 14 : i32
    %1048 = arith.addi %1047, %c14_i32_630 : i32
    %1049 = arith.index_cast %1048 : i32 to index
    %1050 = memref.load %arg1[%1049] : memref<128xi32, #tpu.memory_space<smem>>
    %1051 = arith.index_cast %1050 : i32 to index
    %c0_631 = arith.constant 0 : index
    %1052 = vector.load %arg2[%1051, %c0_631] : memref<56x128xf32, #tpu.memory_space<vmem>>, vector<1x128xf32>
    %c14_632 = arith.constant 14 : index
    %c0_633 = arith.constant 0 : index
    %1053 = vector.load %arg7[%c14_632, %c0_633] : memref<16x128xf32, #tpu.memory_space<vmem>>, vector<1x128xf32>
    tpu.vector_store %arg7[%c14_632, %c0_633], %1052 {strides = array<i32>} : memref<16x128xf32, #tpu.memory_space<vmem>>, vector<1x128xf32>,
    %c16_i32_634 = arith.constant 16 : i32
    %1054 = arith.muli %c7_i32_558, %c16_i32_634 : i32
    %1055 = arith.addi %1054, %0 : i32
    %c15_i32_635 = arith.constant 15 : i32
    %1056 = arith.addi %1055, %c15_i32_635 : i32
    %1057 = arith.index_cast %1056 : i32 to index
    %1058 = memref.load %arg1[%1057] : memref<128xi32, #tpu.memory_space<smem>>
    %1059 = arith.index_cast %1058 : i32 to index
    %c0_636 = arith.constant 0 : index
    %1060 = vector.load %arg2[%1059, %c0_636] : memref<56x128xf32, #tpu.memory_space<vmem>>, vector<1x128xf32>
    %c15_637 = arith.constant 15 : index
    %c0_638 = arith.constant 0 : index
    %1061 = vector.load %arg7[%c15_637, %c0_638] : memref<16x128xf32, #tpu.memory_space<vmem>>, vector<1x128xf32>
    tpu.vector_store %arg7[%c15_637, %c0_638], %1060 {strides = array<i32>} : memref<16x128xf32, #tpu.memory_space<vmem>>, vector<1x128xf32>,
    %cst_639 = arith.constant dense<0.000000e+00> : vector<16x128xf32>
    %1062 = tpu.matmul %933, %1, %cst_639 {dimension_numbers = #tpu.dot_dimension_numbers<[1], [0], [0], [1], [0, 0, 1, 1], [], []>} : vector<16x128xbf16>, vector<128x128xbf16>, vector<16x128xf32> -> vector<16x128xf32>
    %c0_640 = arith.constant 0 : index
    %c0_641 = arith.constant 0 : index
    %1063 = vector.load %arg7[%c0_640, %c0_641] : memref<16x128xf32, #tpu.memory_space<vmem>>, vector<16x128xf32>
    %1064 = arith.addf %1062, %1063 : vector<16x128xf32>
    %1065 = math.tanh %1064 : vector<16x128xf32>
    %1066 = arith.truncf %1065 : vector<16x128xf32> to vector<16x128xbf16>
    %c8_i32_642 = arith.constant 8 : i32
    %c0_643 = arith.constant 0 : index
    %c0_644 = arith.constant 0 : index
    %1067 = vector.load %arg4[%c0_643, %c0_644] : memref<128x128xbf16, #tpu.memory_space<vmem>>, vector<128x128xbf16>
    %cst_645 = arith.constant dense<0.000000e+00> : vector<16x128xf32>
    %1068 = tpu.matmul %1066, %1067, %cst_645 {dimension_numbers = #tpu.dot_dimension_numbers<[1], [0], [0], [1], [0, 0, 1, 1], [], []>} : vector<16x128xbf16>, vector<128x128xbf16>, vector<16x128xf32> -> vector<16x128xf32>
    %c0_646 = arith.constant 0 : index
    %c0_647 = arith.constant 0 : index
    %1069 = vector.load %arg5[%c0_646, %c0_647] : memref<1x128xf32, #tpu.memory_space<vmem>>, vector<1x128xf32>
    %1070 = vector.broadcast %1069 : vector<1x128xf32> to vector<16x128xf32>
    %1071 = arith.addf %1068, %1070 : vector<16x128xf32>
    %c0_648 = arith.constant 0 : index
    %c0_649 = arith.constant 0 : index
    %1072 = vector.load %arg6[%c0_648, %c0_649] : memref<16x128xf32, #tpu.memory_space<vmem>>, vector<16x128xf32>
    tpu.vector_store %arg6[%c0_648, %c0_649], %1071 {strides = array<i32>} : memref<16x128xf32, #tpu.memory_space<vmem>>, vector<16x128xf32>,
    return
  }
  func.func @transform_0(%arg0: i32, %arg1: memref<128xi32, #tpu.memory_space<smem>>) -> (i32, i32) {
    %c0_i32 = arith.constant 0 : i32
    %c0_i32_0 = arith.constant 0 : i32
    %c0_i32_1 = arith.constant 0 : i32
    return %c0_i32, %c0_i32_0 : i32, i32
  }
  func.func @transform_1(%arg0: i32, %arg1: memref<128xi32, #tpu.memory_space<smem>>) -> (i32, i32) {
    %c0_i32 = arith.constant 0 : i32
    %c0_i32_0 = arith.constant 0 : i32
    %c0_i32_1 = arith.constant 0 : i32
    return %c0_i32, %c0_i32_0 : i32, i32
  }
  func.func @transform_2(%arg0: i32, %arg1: memref<128xi32, #tpu.memory_space<smem>>) -> (i32, i32) {
    %c0_i32 = arith.constant 0 : i32
    %c0_i32_0 = arith.constant 0 : i32
    %c0_i32_1 = arith.constant 0 : i32
    return %c0_i32, %c0_i32_0 : i32, i32
  }
  func.func @transform_3(%arg0: i32, %arg1: memref<128xi32, #tpu.memory_space<smem>>) -> (i32, i32) {
    %c0_i32 = arith.constant 0 : i32
    %c0_i32_0 = arith.constant 0 : i32
    %c0_i32_1 = arith.constant 0 : i32
    return %c0_i32, %c0_i32_0 : i32, i32
  }
  func.func @transform_4(%arg0: i32, %arg1: memref<128xi32, #tpu.memory_space<smem>>) -> (i32, i32) {
    %c0_i32 = arith.constant 0 : i32
    %c0_i32_0 = arith.constant 0 : i32
    return %arg0, %c0_i32 : i32, i32
  }
}

</mosaic_0001>

<llo_original>
// kernel: rnn_forward.1
$region0: #{rnn_forward.1}
  #allocation0 [shape = 'u32[]', space=smem, size = 0x4, offset = 0x4, fixed_abs, tag = 'smem constant byte address 0x4 - core index']
  #allocation1 [shape = 'u32[144,128]{1,0:T(1,128)}', space=vmem, size = 0x12000, scoped, tag = 'internal scratch']
  #allocation2 [shape = 'f32[16,128]{1,0:T(8,128)}', space=vmem, size = 0x2000, scoped, tag = 'scratch operand']
  #allocation3 [shape = 's32[1]{0}', space=sflag, size = 0x4, scoped, tag = 'scoped memory for rnn_forward.1']
  #allocation4 [shape = 'u8[512]{0}', space=smem, size = 0x200, scoped, tag = 'prefetched SMEM operand 0']
  %s0 = inlined_call_operand.vmem [shape: s32[128], index: 0, kind: input, shape index: {}]
  %s1 = inlined_call_operand.vmem [shape: f32[56,128], index: 1, kind: input, shape index: {}]
  %s2 = inlined_call_operand.vmem [shape: bf16[128,128], index: 2, kind: input, shape index: {}]
  %s3 = inlined_call_operand.vmem [shape: bf16[128,128], index: 3, kind: input, shape index: {}]
  %s4 = inlined_call_operand.vmem [shape: f32[1,128], index: 4, kind: input, shape index: {}]
  %s5 = inlined_call_operand.vmem [shape: f32[16,128], index: 5, kind: output, shape index: {}]
  %s6 = sld [smem:[#allocation0]]
  $region26: #{rnn_forward.1} parent=0
    _
  %s8 = ssub.s32 1, %s6
  %s9 = scalar_select 0, %s8, %s6
  %s10 = sshll.u32 %s0, 4
  %s11 = int_to_ptr.vmem [resolvable:$true] %s10
  %13 = dma.vmem_to_smem %s11, 16, [#allocation4], [#allocation3]
  %14 = dma.done [#allocation3], 16
  %15 = sfence
  // Predicated region
  $region2: #{rnn_forward.1} parent=0 // pred_check
    _
  $region3: #{rnn_forward.1} parent=0 // pred_check_branch
    %17 = sbr.rel (0) target = $region5
  $region4: #{rnn_forward.1} parent=0 // pred_region
    _
  $region5: #{rnn_forward.1} parent=0 // pred_fallthru
    _
  // Predicated region
  $region6: #{rnn_forward.1} parent=0 // pred_check
    _
  $region7: #{rnn_forward.1} parent=0 // pred_check_branch
    %19 = sbr.rel (0) target = $region9
  $region8: #{rnn_forward.1} parent=0 // pred_region
    _
  $region9: #{rnn_forward.1} parent=0 // pred_fallthru
    _
  // Predicated region
  $region10: #{rnn_forward.1} parent=0 // pred_check
    _
  $region11: #{rnn_forward.1} parent=0 // pred_check_branch
    %21 = sbr.rel (0) target = $region13
  $region12: #{rnn_forward.1} parent=0 // pred_region
    _
  $region13: #{rnn_forward.1} parent=0 // pred_fallthru
    _
  // Predicated region
  $region14: #{rnn_forward.1} parent=0 // pred_check
    _
  $region15: #{rnn_forward.1} parent=0 // pred_check_branch
    %23 = sbr.rel (0) target = $region17
  $region16: #{rnn_forward.1} parent=0 // pred_region
    _
  $region17: #{rnn_forward.1} parent=0 // pred_fallthru
    _
  %s25 = smul.u32 0, 16
  %v26 = vld [vmem:[%s2] sm:$0xf]
  %v27 = vld [vmem:[%s2 + $0x4] sm:$0xf]
  %v28 = vld [vmem:[%s2 + $0x8] sm:$0xf]
  %v29 = vld [vmem:[%s2 + $0xc] sm:$0xf]
  %v30 = vld [vmem:[%s2 + $0x10] sm:$0xf]
  %v31 = vld [vmem:[%s2 + $0x14] sm:$0xf]
  %v32 = vld [vmem:[%s2 + $0x18] sm:$0xf]
  %v33 = vld [vmem:[%s2 + $0x1c] sm:$0xf]
  %v34 = vld [vmem:[%s2 + $0x20] sm:$0xf]
  %v35 = vld [vmem:[%s2 + $0x24] sm:$0xf]
  %v36 = vld [vmem:[%s2 + $0x28] sm:$0xf]
  %v37 = vld [vmem:[%s2 + $0x2c] sm:$0xf]
  %v38 = vld [vmem:[%s2 + $0x30] sm:$0xf]
  %v39 = vld [vmem:[%s2 + $0x34] sm:$0xf]
  %v40 = vld [vmem:[%s2 + $0x38] sm:$0xf]
  %v41 = vld [vmem:[%s2 + $0x3c] sm:$0xf]
  %s42 = sld [smem:[#allocation4 + %s25]]
  %s43 = scalar_lea.vmem %s1, %s42
  %v44 = vld [vmem:[%s43] sm:$0x1]
  %45 = vst [vmem:[#allocation2] sm:$0x1] %v44
  %s46 = sadd.s32 %s25, 1
  %s47 = sld [smem:[#allocation4 + %s46]]
  %s48 = scalar_lea.vmem %s1, %s47
  %v49 = vld [vmem:[%s48] sm:$0x1]
  %50 = vst [vmem:[#allocation2 + $0x1] sm:$0x1] %v49
  %s51 = sadd.s32 %s25, 2
  %s52 = sld [smem:[#allocation4 + %s51]]
  %s53 = scalar_lea.vmem %s1, %s52
  %v54 = vld [vmem:[%s53] sm:$0x1]
  %55 = vst [vmem:[#allocation2 + $0x2] sm:$0x1] %v54
  %s56 = sadd.s32 %s25, 3
  %s57 = sld [smem:[#allocation4 + %s56]]
  %s58 = scalar_lea.vmem %s1, %s57
  %v59 = vld [vmem:[%s58] sm:$0x1]
  %60 = vst [vmem:[#allocation2 + $0x3] sm:$0x1] %v59
  %s61 = sadd.s32 %s25, 4
  %s62 = sld [smem:[#allocation4 + %s61]]
  %s63 = scalar_lea.vmem %s1, %s62
  %v64 = vld [vmem:[%s63] sm:$0x1]
  %65 = vst [vmem:[#allocation2 + $0x4] sm:$0x1] %v64
  %s66 = sadd.s32 %s25, 5
  %s67 = sld [smem:[#allocation4 + %s66]]
  %s68 = scalar_lea.vmem %s1, %s67
  %v69 = vld [vmem:[%s68] sm:$0x1]
  %70 = vst [vmem:[#allocation2 + $0x5] sm:$0x1] %v69
  %s71 = sadd.s32 %s25, 6
  %s72 = sld [smem:[#allocation4 + %s71]]
  %s73 = scalar_lea.vmem %s1, %s72
  %v74 = vld [vmem:[%s73] sm:$0x1]
  %75 = vst [vmem:[#allocation2 + $0x6] sm:$0x1] %v74
  %s76 = sadd.s32 %s25, 7
  %s77 = sld [smem:[#allocation4 + %s76]]
  %s78 = scalar_lea.vmem %s1, %s77
  %v79 = vld [vmem:[%s78] sm:$0x1]
  %80 = vst [vmem:[#allocation2 + $0x7] sm:$0x1] %v79
  %s81 = sadd.s32 %s25, 8
  %s82 = sld [smem:[#allocation4 + %s81]]
  %s83 = scalar_lea.vmem %s1, %s82
  %v84 = vld [vmem:[%s83] sm:$0x1]
  %85 = vst [vmem:[#allocation2 + $0x8] sm:$0x1] %v84
  %s86 = sadd.s32 %s25, 9
  %s87 = sld [smem:[#allocation4 + %s86]]
  %s88 = scalar_lea.vmem %s1, %s87
  %v89 = vld [vmem:[%s88] sm:$0x1]
  %90 = vst [vmem:[#allocation2 + $0x9] sm:$0x1] %v89
  %s91 = sadd.s32 %s25, 10
  %s92 = sld [smem:[#allocation4 + %s91]]
  %s93 = scalar_lea.vmem %s1, %s92
  %v94 = vld [vmem:[%s93] sm:$0x1]
  %95 = vst [vmem:[#allocation2 + $0xa] sm:$0x1] %v94
  %s96 = sadd.s32 %s25, 11
  %s97 = sld [smem:[#allocation4 + %s96]]
  %s98 = scalar_lea.vmem %s1, %s97
  %v99 = vld [vmem:[%s98] sm:$0x1]
  %100 = vst [vmem:[#allocation2 + $0xb] sm:$0x1] %v99
  %s101 = sadd.s32 %s25, 12
  %s102 = sld [smem:[#allocation4 + %s101]]
  %s103 = scalar_lea.vmem %s1, %s102
  %v104 = vld [vmem:[%s103] sm:$0x1]
  %105 = vst [vmem:[#allocation2 + $0xc] sm:$0x1] %v104
  %s106 = sadd.s32 %s25, 13
  %s107 = sld [smem:[#allocation4 + %s106]]
  %s108 = scalar_lea.vmem %s1, %s107
  %v109 = vld [vmem:[%s108] sm:$0x1]
  %110 = vst [vmem:[#allocation2 + $0xd] sm:$0x1] %v109
  %s111 = sadd.s32 %s25, 14
  %s112 = sld [smem:[#allocation4 + %s111]]
  %s113 = scalar_lea.vmem %s1, %s112
  %v114 = vld [vmem:[%s113] sm:$0x1]
  %115 = vst [vmem:[#allocation2 + $0xe] sm:$0x1] %v114
  %s116 = sadd.s32 %s25, 15
  %s117 = sld [smem:[#allocation4 + %s116]]
  %s118 = scalar_lea.vmem %s1, %s117
  %v119 = vld [vmem:[%s118] sm:$0x1]
  %120 = vst [vmem:[#allocation2 + $0xf] sm:$0x1] %v119
  %v121 = vld [vmem:[#allocation2] sm:$0xff]
  %v122 = vld [vmem:[#allocation2 + $0x8] sm:$0xff]
  %v139 = vunpack.c.l.b16 %v26
  %v140 = vunpack.c.l.b16 %v27
  %v141 = vunpack.c.l.b16 %v28
  %v142 = vunpack.c.l.b16 %v29
  %v143 = vunpack.c.l.b16 %v30
  %v144 = vunpack.c.l.b16 %v31
  %v145 = vunpack.c.l.b16 %v32
  %v146 = vunpack.c.l.b16 %v33
  %v147 = vunpack.c.l.b16 %v34
  %v148 = vunpack.c.l.b16 %v35
  %v149 = vunpack.c.l.b16 %v36
  %v150 = vunpack.c.l.b16 %v37
  %v151 = vunpack.c.l.b16 %v38
  %v152 = vunpack.c.l.b16 %v39
  %v153 = vunpack.c.l.b16 %v40
  %v154 = vunpack.c.l.b16 %v41
  %v155 = vpack.c.b16 %v140, %v139
  %v156 = vpack.c.b16 %v142, %v141
  %v157 = vpack.c.b16 %v144, %v143
  %v158 = vpack.c.b16 %v146, %v145
  %v159 = vpack.c.b16 %v148, %v147
  %v160 = vpack.c.b16 %v150, %v149
  %v161 = vpack.c.b16 %v152, %v151
  %v162 = vpack.c.b16 %v154, %v153
  %171 = vmatprep.subr.bf16.mxu0 0
  %172 = vmatpush1.bf16.msra.mxu0 %v155
  %173 = vmatprep.subr.bf16.mxu0 0
  %174 = vmatpush1.bf16.msra.mxu0 %v156
  %175 = vmatprep.subr.bf16.mxu0 0
  %176 = vmatpush1.bf16.msra.mxu0 %v157
  %177 = vmatprep.subr.bf16.mxu0 0
  %178 = vmatpush1.bf16.msra.mxu0 %v158
  %179 = vmatprep.subr.bf16.mxu0 0
  %180 = vmatpush1.bf16.msra.mxu0 %v159
  %181 = vmatprep.subr.bf16.mxu0 0
  %182 = vmatpush1.bf16.msra.mxu0 %v160
  %183 = vmatprep.subr.bf16.mxu0 0
  %184 = vmatpush1.bf16.msra.mxu0 %v161
  %185 = vmatprep.subr.bf16.mxu0 0
  %186 = vmatpush1.bf16.msra.mxu0 %v162
  %187 = vmatprep.subr.bf16.mxu0 0
  %188 = vmatpush1.bf16.msra.mxu0 0
  %189 = vmatprep.subr.bf16.mxu0 0
  %190 = vmatpush1.bf16.msra.mxu0 0
  %191 = vmatprep.subr.bf16.mxu0 0
  %192 = vmatpush1.bf16.msra.mxu0 0
  %193 = vmatprep.subr.bf16.mxu0 0
  %194 = vmatpush1.bf16.msra.mxu0 0
  %195 = vmatprep.subr.bf16.mxu0 0
  %196 = vmatpush1.bf16.msra.mxu0 0
  %197 = vmatprep.subr.bf16.mxu0 0
  %198 = vmatpush1.bf16.msra.mxu0 0
  %199 = vmatprep.subr.bf16.mxu0 0
  %200 = vmatpush1.bf16.msra.mxu0 0
  %201 = vmatprep.subr.bf16.mxu0 0
  %202 = vmatpush1.bf16.msra.mxu0 0
  %203 = vmatprep.mubr.bf16.mxu0 0
  %204 = vmatmul.mubr.bf16.gmra.mrb[0].mxu0 0
  %v205 = vpop.f32.mrb[0].mxu0
  %v206 = vadd.f32 %v121, %v205
  %v207 = vpop.f32.mrb[0].mxu0
  %v208 = vpop.f32.mrb[0].mxu0
  %v209 = vadd.f32 %v122, %v208
  %v210 = vpop.f32.mrb[0].mxu0
  %211 = vdwg.mxu0
  %v212 = vtanh.pop %v206
  %v213 = vtanh.pop %v209
  %v214 = vpack.c.bf16 %v213, %v212
  %s215 = sadd.s32 %s25, 16
  %s216 = sld [smem:[#allocation4 + %s215]]
  %s217 = scalar_lea.vmem %s1, %s216
  %v218 = vld [vmem:[%s217] sm:$0x1]
  %219 = vst [vmem:[#allocation2] sm:$0x1] %v218
  %s220 = sadd.s32 %s25, 17
  %s221 = sld [smem:[#allocation4 + %s220]]
  %s222 = scalar_lea.vmem %s1, %s221
  %v223 = vld [vmem:[%s222] sm:$0x1]
  %224 = vst [vmem:[#allocation2 + $0x1] sm:$0x1] %v223
  %s225 = sadd.s32 %s25, 18
  %s226 = sld [smem:[#allocation4 + %s225]]
  %s227 = scalar_lea.vmem %s1, %s226
  %v228 = vld [vmem:[%s227] sm:$0x1]
  %229 = vst [vmem:[#allocation2 + $0x2] sm:$0x1] %v228
  %s230 = sadd.s32 %s25, 19
  %s231 = sld [smem:[#allocation4 + %s230]]
  %s232 = scalar_lea.vmem %s1, %s231
  %v233 = vld [vmem:[%s232] sm:$0x1]
  %234 = vst [vmem:[#allocation2 + $0x3] sm:$0x1] %v233
  %s235 = sadd.s32 %s25, 20
  %s236 = sld [smem:[#allocation4 + %s235]]
  %s237 = scalar_lea.vmem %s1, %s236
  %v238 = vld [vmem:[%s237] sm:$0x1]
  %239 = vst [vmem:[#allocation2 + $0x4] sm:$0x1] %v238
  %s240 = sadd.s32 %s25, 21
  %s241 = sld [smem:[#allocation4 + %s240]]
  %s242 = scalar_lea.vmem %s1, %s241
  %v243 = vld [vmem:[%s242] sm:$0x1]
  %244 = vst [vmem:[#allocation2 + $0x5] sm:$0x1] %v243
  %s245 = sadd.s32 %s25, 22
  %s246 = sld [smem:[#allocation4 + %s245]]
  %s247 = scalar_lea.vmem %s1, %s246
  %v248 = vld [vmem:[%s247] sm:$0x1]
  %249 = vst [vmem:[#allocation2 + $0x6] sm:$0x1] %v248
  %s250 = sadd.s32 %s25, 23
  %s251 = sld [smem:[#allocation4 + %s250]]
  %s252 = scalar_lea.vmem %s1, %s251
  %v253 = vld [vmem:[%s252] sm:$0x1]
  %254 = vst [vmem:[#allocation2 + $0x7] sm:$0x1] %v253
  %s255 = sadd.s32 %s25, 24
  %s256 = sld [smem:[#allocation4 + %s255]]
  %s257 = scalar_lea.vmem %s1, %s256
  %v258 = vld [vmem:[%s257] sm:$0x1]
  %259 = vst [vmem:[#allocation2 + $0x8] sm:$0x1] %v258
  %s260 = sadd.s32 %s25, 25
  %s261 = sld [smem:[#allocation4 + %s260]]
  %s262 = scalar_lea.vmem %s1, %s261
  %v263 = vld [vmem:[%s262] sm:$0x1]
  %264 = vst [vmem:[#allocation2 + $0x9] sm:$0x1] %v263
  %s265 = sadd.s32 %s25, 26
  %s266 = sld [smem:[#allocation4 + %s265]]
  %s267 = scalar_lea.vmem %s1, %s266
  %v268 = vld [vmem:[%s267] sm:$0x1]
  %269 = vst [vmem:[#allocation2 + $0xa] sm:$0x1] %v268
  %s270 = sadd.s32 %s25, 27
  %s271 = sld [smem:[#allocation4 + %s270]]
  %s272 = scalar_lea.vmem %s1, %s271
  %v273 = vld [vmem:[%s272] sm:$0x1]
  %274 = vst [vmem:[#allocation2 + $0xb] sm:$0x1] %v273
  %s275 = sadd.s32 %s25, 28
  %s276 = sld [smem:[#allocation4 + %s275]]
  %s277 = scalar_lea.vmem %s1, %s276
  %v278 = vld [vmem:[%s277] sm:$0x1]
  %279 = vst [vmem:[#allocation2 + $0xc] sm:$0x1] %v278
  %s280 = sadd.s32 %s25, 29
  %s281 = sld [smem:[#allocation4 + %s280]]
  %s282 = scalar_lea.vmem %s1, %s281
  %v283 = vld [vmem:[%s282] sm:$0x1]
  %284 = vst [vmem:[#allocation2 + $0xd] sm:$0x1] %v283
  %s285 = sadd.s32 %s25, 30
  %s286 = sld [smem:[#allocation4 + %s285]]
  %s287 = scalar_lea.vmem %s1, %s286
  %v288 = vld [vmem:[%s287] sm:$0x1]
  %289 = vst [vmem:[#allocation2 + $0xe] sm:$0x1] %v288
  %s290 = sadd.s32 %s25, 31
  %s291 = sld [smem:[#allocation4 + %s290]]
  %s292 = scalar_lea.vmem %s1, %s291
  %v293 = vld [vmem:[%s292] sm:$0x1]
  %294 = vst [vmem:[#allocation2 + $0xf] sm:$0x1] %v293
  %v295 = vld [vmem:[#allocation2] sm:$0xff]
  %v296 = vld [vmem:[#allocation2 + $0x8] sm:$0xff]
  %297 = vmatprep.subr.bf16.mxu0 0
  %298 = vmatpush1.bf16.msra.mxu0 %v155
  %299 = vmatprep.subr.bf16.mxu0 0
  %300 = vmatpush1.bf16.msra.mxu0 %v156
  %301 = vmatprep.subr.bf16.mxu0 0
  %302 = vmatpush1.bf16.msra.mxu0 %v157
  %303 = vmatprep.subr.bf16.mxu0 0
  %304 = vmatpush1.bf16.msra.mxu0 %v158
  %305 = vmatprep.subr.bf16.mxu0 0
  %306 = vmatpush1.bf16.msra.mxu0 %v159
  %307 = vmatprep.subr.bf16.mxu0 0
  %308 = vmatpush1.bf16.msra.mxu0 %v160
  %309 = vmatprep.subr.bf16.mxu0 0
  %310 = vmatpush1.bf16.msra.mxu0 %v161
  %311 = vmatprep.subr.bf16.mxu0 0
  %312 = vmatpush1.bf16.msra.mxu0 %v162
  %313 = vmatprep.subr.bf16.mxu0 0
  %314 = vmatpush1.bf16.msra.mxu0 0
  %315 = vmatprep.subr.bf16.mxu0 0
  %316 = vmatpush1.bf16.msra.mxu0 0
  %317 = vmatprep.subr.bf16.mxu0 0
  %318 = vmatpush1.bf16.msra.mxu0 0
  %319 = vmatprep.subr.bf16.mxu0 0
  %320 = vmatpush1.bf16.msra.mxu0 0
  %321 = vmatprep.subr.bf16.mxu0 0
  %322 = vmatpush1.bf16.msra.mxu0 0
  %323 = vmatprep.subr.bf16.mxu0 0
  %324 = vmatpush1.bf16.msra.mxu0 0
  %325 = vmatprep.subr.bf16.mxu0 0
  %326 = vmatpush1.bf16.msra.mxu0 0
  %327 = vmatprep.subr.bf16.mxu0 0
  %328 = vmatpush1.bf16.msra.mxu0 0
  %329 = vmatprep.mubr.bf16.mxu0 0
  %330 = vmatmul.mubr.bf16.gmra.mrb[0].mxu0 %v214
  %v331 = vpop.f32.mrb[0].mxu0
  %v332 = vadd.f32 %v295, %v331
  %v333 = vpop.f32.mrb[0].mxu0
  %v334 = vpop.f32.mrb[0].mxu0
  %v335 = vadd.f32 %v296, %v334
  %v336 = vpop.f32.mrb[0].mxu0
  %337 = vdwg.mxu0
  %v338 = vtanh.pop %v332
  %v339 = vtanh.pop %v335
  %v340 = vpack.c.bf16 %v339, %v338
  %s341 = sadd.s32 %s25, 32
  %s342 = sld [smem:[#allocation4 + %s341]]
  %s343 = scalar_lea.vmem %s1, %s342
  %v344 = vld [vmem:[%s343] sm:$0x1]
  %345 = vst [vmem:[#allocation2] sm:$0x1] %v344
  %s346 = sadd.s32 %s25, 33
  %s347 = sld [smem:[#allocation4 + %s346]]
  %s348 = scalar_lea.vmem %s1, %s347
  %v349 = vld [vmem:[%s348] sm:$0x1]
  %350 = vst [vmem:[#allocation2 + $0x1] sm:$0x1] %v349
  %s351 = sadd.s32 %s25, 34
  %s352 = sld [smem:[#allocation4 + %s351]]
  %s353 = scalar_lea.vmem %s1, %s352
  %v354 = vld [vmem:[%s353] sm:$0x1]
  %355 = vst [vmem:[#allocation2 + $0x2] sm:$0x1] %v354
  %s356 = sadd.s32 %s25, 35
  %s357 = sld [smem:[#allocation4 + %s356]]
  %s358 = scalar_lea.vmem %s1, %s357
  %v359 = vld [vmem:[%s358] sm:$0x1]
  %360 = vst [vmem:[#allocation2 + $0x3] sm:$0x1] %v359
  %s361 = sadd.s32 %s25, 36
  %s362 = sld [smem:[#allocation4 + %s361]]
  %s363 = scalar_lea.vmem %s1, %s362
  %v364 = vld [vmem:[%s363] sm:$0x1]
  %365 = vst [vmem:[#allocation2 + $0x4] sm:$0x1] %v364
  %s366 = sadd.s32 %s25, 37
  %s367 = sld [smem:[#allocation4 + %s366]]
  %s368 = scalar_lea.vmem %s1, %s367
  %v369 = vld [vmem:[%s368] sm:$0x1]
  %370 = vst [vmem:[#allocation2 + $0x5] sm:$0x1] %v369
  %s371 = sadd.s32 %s25, 38
  %s372 = sld [smem:[#allocation4 + %s371]]
  %s373 = scalar_lea.vmem %s1, %s372
  %v374 = vld [vmem:[%s373] sm:$0x1]
  %375 = vst [vmem:[#allocation2 + $0x6] sm:$0x1] %v374
  %s376 = sadd.s32 %s25, 39
  %s377 = sld [smem:[#allocation4 + %s376]]
  %s378 = scalar_lea.vmem %s1, %s377
  %v379 = vld [vmem:[%s378] sm:$0x1]
  %380 = vst [vmem:[#allocation2 + $0x7] sm:$0x1] %v379
  %s381 = sadd.s32 %s25, 40
  %s382 = sld [smem:[#allocation4 + %s381]]
  %s383 = scalar_lea.vmem %s1, %s382
  %v384 = vld [vmem:[%s383] sm:$0x1]
  %385 = vst [vmem:[#allocation2 + $0x8] sm:$0x1] %v384
  %s386 = sadd.s32 %s25, 41
  %s387 = sld [smem:[#allocation4 + %s386]]
  %s388 = scalar_lea.vmem %s1, %s387
  %v389 = vld [vmem:[%s388] sm:$0x1]
  %390 = vst [vmem:[#allocation2 + $0x9] sm:$0x1] %v389
  %s391 = sadd.s32 %s25, 42
  %s392 = sld [smem:[#allocation4 + %s391]]
  %s393 = scalar_lea.vmem %s1, %s392
  %v394 = vld [vmem:[%s393] sm:$0x1]
  %395 = vst [vmem:[#allocation2 + $0xa] sm:$0x1] %v394
  %s396 = sadd.s32 %s25, 43
  %s397 = sld [smem:[#allocation4 + %s396]]
  %s398 = scalar_lea.vmem %s1, %s397
  %v399 = vld [vmem:[%s398] sm:$0x1]
  %400 = vst [vmem:[#allocation2 + $0xb] sm:$0x1] %v399
  %s401 = sadd.s32 %s25, 44
  %s402 = sld [smem:[#allocation4 + %s401]]
  %s403 = scalar_lea.vmem %s1, %s402
  %v404 = vld [vmem:[%s403] sm:$0x1]
  %405 = vst [vmem:[#allocation2 + $0xc] sm:$0x1] %v404
  %s406 = sadd.s32 %s25, 45
  %s407 = sld [smem:[#allocation4 + %s406]]
  %s408 = scalar_lea.vmem %s1, %s407
  %v409 = vld [vmem:[%s408] sm:$0x1]
  %410 = vst [vmem:[#allocation2 + $0xd] sm:$0x1] %v409
  %s411 = sadd.s32 %s25, 46
  %s412 = sld [smem:[#allocation4 + %s411]]
  %s413 = scalar_lea.vmem %s1, %s412
  %v414 = vld [vmem:[%s413] sm:$0x1]
  %415 = vst [vmem:[#allocation2 + $0xe] sm:$0x1] %v414
  %s416 = sadd.s32 %s25, 47
  %s417 = sld [smem:[#allocation4 + %s416]]
  %s418 = scalar_lea.vmem %s1, %s417
  %v419 = vld [vmem:[%s418] sm:$0x1]
  %420 = vst [vmem:[#allocation2 + $0xf] sm:$0x1] %v419
  %v421 = vld [vmem:[#allocation2] sm:$0xff]
  %v422 = vld [vmem:[#allocation2 + $0x8] sm:$0xff]
  %423 = vmatprep.subr.bf16.mxu0 0
  %424 = vmatpush1.bf16.msra.mxu0 %v155
  %425 = vmatprep.subr.bf16.mxu0 0
  %426 = vmatpush1.bf16.msra.mxu0 %v156
  %427 = vmatprep.subr.bf16.mxu0 0
  %428 = vmatpush1.bf16.msra.mxu0 %v157
  %429 = vmatprep.subr.bf16.mxu0 0
  %430 = vmatpush1.bf16.msra.mxu0 %v158
  %431 = vmatprep.subr.bf16.mxu0 0
  %432 = vmatpush1.bf16.msra.mxu0 %v159
  %433 = vmatprep.subr.bf16.mxu0 0
  %434 = vmatpush1.bf16.msra.mxu0 %v160
  %435 = vmatprep.subr.bf16.mxu0 0
  %436 = vmatpush1.bf16.msra.mxu0 %v161
  %437 = vmatprep.subr.bf16.mxu0 0
  %438 = vmatpush1.bf16.msra.mxu0 %v162
  %439 = vmatprep.subr.bf16.mxu0 0
  %440 = vmatpush1.bf16.msra.mxu0 0
  %441 = vmatprep.subr.bf16.mxu0 0
  %442 = vmatpush1.bf16.msra.mxu0 0
  %443 = vmatprep.subr.bf16.mxu0 0
  %444 = vmatpush1.bf16.msra.mxu0 0
  %445 = vmatprep.subr.bf16.mxu0 0
  %446 = vmatpush1.bf16.msra.mxu0 0
  %447 = vmatprep.subr.bf16.mxu0 0
  %448 = vmatpush1.bf16.msra.mxu0 0
  %449 = vmatprep.subr.bf16.mxu0 0
  %450 = vmatpush1.bf16.msra.mxu0 0
  %451 = vmatprep.subr.bf16.mxu0 0
  %452 = vmatpush1.bf16.msra.mxu0 0
  %453 = vmatprep.subr.bf16.mxu0 0
  %454 = vmatpush1.bf16.msra.mxu0 0
  %455 = vmatprep.mubr.bf16.mxu0 0
  %456 = vmatmul.mubr.bf16.gmra.mrb[0].mxu0 %v340
  %v457 = vpop.f32.mrb[0].mxu0
  %v458 = vadd.f32 %v421, %v457
  %v459 = vpop.f32.mrb[0].mxu0
  %v460 = vpop.f32.mrb[0].mxu0
  %v461 = vadd.f32 %v422, %v460
  %v462 = vpop.f32.mrb[0].mxu0
  %463 = vdwg.mxu0
  %v464 = vtanh.pop %v458
  %v465 = vtanh.pop %v461
  %v466 = vpack.c.bf16 %v465, %v464
  %s467 = sadd.s32 %s25, 48
  %s468 = sld [smem:[#allocation4 + %s467]]
  %s469 = scalar_lea.vmem %s1, %s468
  %v470 = vld [vmem:[%s469] sm:$0x1]
  %471 = vst [vmem:[#allocation2] sm:$0x1] %v470
  %s472 = sadd.s32 %s25, 49
  %s473 = sld [smem:[#allocation4 + %s472]]
  %s474 = scalar_lea.vmem %s1, %s473
  %v475 = vld [vmem:[%s474] sm:$0x1]
  %476 = vst [vmem:[#allocation2 + $0x1] sm:$0x1] %v475
  %s477 = sadd.s32 %s25, 50
  %s478 = sld [smem:[#allocation4 + %s477]]
  %s479 = scalar_lea.vmem %s1, %s478
  %v480 = vld [vmem:[%s479] sm:$0x1]
  %481 = vst [vmem:[#allocation2 + $0x2] sm:$0x1] %v480
  %s482 = sadd.s32 %s25, 51
  %s483 = sld [smem:[#allocation4 + %s482]]
  %s484 = scalar_lea.vmem %s1, %s483
  %v485 = vld [vmem:[%s484] sm:$0x1]
  %486 = vst [vmem:[#allocation2 + $0x3] sm:$0x1] %v485
  %s487 = sadd.s32 %s25, 52
  %s488 = sld [smem:[#allocation4 + %s487]]
  %s489 = scalar_lea.vmem %s1, %s488
  %v490 = vld [vmem:[%s489] sm:$0x1]
  %491 = vst [vmem:[#allocation2 + $0x4] sm:$0x1] %v490
  %s492 = sadd.s32 %s25, 53
  %s493 = sld [smem:[#allocation4 + %s492]]
  %s494 = scalar_lea.vmem %s1, %s493
  %v495 = vld [vmem:[%s494] sm:$0x1]
  %496 = vst [vmem:[#allocation2 + $0x5] sm:$0x1] %v495
  %s497 = sadd.s32 %s25, 54
  %s498 = sld [smem:[#allocation4 + %s497]]
  %s499 = scalar_lea.vmem %s1, %s498
  %v500 = vld [vmem:[%s499] sm:$0x1]
  %501 = vst [vmem:[#allocation2 + $0x6] sm:$0x1] %v500
  %s502 = sadd.s32 %s25, 55
  %s503 = sld [smem:[#allocation4 + %s502]]
  %s504 = scalar_lea.vmem %s1, %s503
  %v505 = vld [vmem:[%s504] sm:$0x1]
  %506 = vst [vmem:[#allocation2 + $0x7] sm:$0x1] %v505
  %s507 = sadd.s32 %s25, 56
  %s508 = sld [smem:[#allocation4 + %s507]]
  %s509 = scalar_lea.vmem %s1, %s508
  %v510 = vld [vmem:[%s509] sm:$0x1]
  %511 = vst [vmem:[#allocation2 + $0x8] sm:$0x1] %v510
  %s512 = sadd.s32 %s25, 57
  %s513 = sld [smem:[#allocation4 + %s512]]
  %s514 = scalar_lea.vmem %s1, %s513
  %v515 = vld [vmem:[%s514] sm:$0x1]
  %516 = vst [vmem:[#allocation2 + $0x9] sm:$0x1] %v515
  %s517 = sadd.s32 %s25, 58
  %s518 = sld [smem:[#allocation4 + %s517]]
  %s519 = scalar_lea.vmem %s1, %s518
  %v520 = vld [vmem:[%s519] sm:$0x1]
  %521 = vst [vmem:[#allocation2 + $0xa] sm:$0x1] %v520
  %s522 = sadd.s32 %s25, 59
  %s523 = sld [smem:[#allocation4 + %s522]]
  %s524 = scalar_lea.vmem %s1, %s523
  %v525 = vld [vmem:[%s524] sm:$0x1]
  %526 = vst [vmem:[#allocation2 + $0xb] sm:$0x1] %v525
  %s527 = sadd.s32 %s25, 60
  %s528 = sld [smem:[#allocation4 + %s527]]
  %s529 = scalar_lea.vmem %s1, %s528
  %v530 = vld [vmem:[%s529] sm:$0x1]
  %531 = vst [vmem:[#allocation2 + $0xc] sm:$0x1] %v530
  %s532 = sadd.s32 %s25, 61
  %s533 = sld [smem:[#allocation4 + %s532]]
  %s534 = scalar_lea.vmem %s1, %s533
  %v535 = vld [vmem:[%s534] sm:$0x1]
  %536 = vst [vmem:[#allocation2 + $0xd] sm:$0x1] %v535
  %s537 = sadd.s32 %s25, 62
  %s538 = sld [smem:[#allocation4 + %s537]]
  %s539 = scalar_lea.vmem %s1, %s538
  %v540 = vld [vmem:[%s539] sm:$0x1]
  %541 = vst [vmem:[#allocation2 + $0xe] sm:$0x1] %v540
  %s542 = sadd.s32 %s25, 63
  %s543 = sld [smem:[#allocation4 + %s542]]
  %s544 = scalar_lea.vmem %s1, %s543
  %v545 = vld [vmem:[%s544] sm:$0x1]
  %546 = vst [vmem:[#allocation2 + $0xf] sm:$0x1] %v545
  %v547 = vld [vmem:[#allocation2] sm:$0xff]
  %v548 = vld [vmem:[#allocation2 + $0x8] sm:$0xff]
  %549 = vmatprep.subr.bf16.mxu0 0
  %550 = vmatpush1.bf16.msra.mxu0 %v155
  %551 = vmatprep.subr.bf16.mxu0 0
  %552 = vmatpush1.bf16.msra.mxu0 %v156
  %553 = vmatprep.subr.bf16.mxu0 0
  %554 = vmatpush1.bf16.msra.mxu0 %v157
  %555 = vmatprep.subr.bf16.mxu0 0
  %556 = vmatpush1.bf16.msra.mxu0 %v158
  %557 = vmatprep.subr.bf16.mxu0 0
  %558 = vmatpush1.bf16.msra.mxu0 %v159
  %559 = vmatprep.subr.bf16.mxu0 0
  %560 = vmatpush1.bf16.msra.mxu0 %v160
  %561 = vmatprep.subr.bf16.mxu0 0
  %562 = vmatpush1.bf16.msra.mxu0 %v161
  %563 = vmatprep.subr.bf16.mxu0 0
  %564 = vmatpush1.bf16.msra.mxu0 %v162
  %565 = vmatprep.subr.bf16.mxu0 0
  %566 = vmatpush1.bf16.msra.mxu0 0
  %567 = vmatprep.subr.bf16.mxu0 0
  %568 = vmatpush1.bf16.msra.mxu0 0
  %569 = vmatprep.subr.bf16.mxu0 0
  %570 = vmatpush1.bf16.msra.mxu0 0
  %571 = vmatprep.subr.bf16.mxu0 0
  %572 = vmatpush1.bf16.msra.mxu0 0
  %573 = vmatprep.subr.bf16.mxu0 0
  %574 = vmatpush1.bf16.msra.mxu0 0
  %575 = vmatprep.subr.bf16.mxu0 0
  %576 = vmatpush1.bf16.msra.mxu0 0
  %577 = vmatprep.subr.bf16.mxu0 0
  %578 = vmatpush1.bf16.msra.mxu0 0
  %579 = vmatprep.subr.bf16.mxu0 0
  %580 = vmatpush1.bf16.msra.mxu0 0
  %581 = vmatprep.mubr.bf16.mxu0 0
  %582 = vmatmul.mubr.bf16.gmra.mrb[0].mxu0 %v466
  %v583 = vpop.f32.mrb[0].mxu0
  %v584 = vadd.f32 %v547, %v583
  %v585 = vpop.f32.mrb[0].mxu0
  %v586 = vpop.f32.mrb[0].mxu0
  %v587 = vadd.f32 %v548, %v586
  %v588 = vpop.f32.mrb[0].mxu0
  %589 = vdwg.mxu0
  %v590 = vtanh.pop %v584
  %v591 = vtanh.pop %v587
  %v592 = vpack.c.bf16 %v591, %v590
  %s593 = sadd.s32 %s25, 64
  %s594 = sld [smem:[#allocation4 + %s593]]
  %s595 = scalar_lea.vmem %s1, %s594
  %v596 = vld [vmem:[%s595] sm:$0x1]
  %597 = vst [vmem:[#allocation2] sm:$0x1] %v596
  %s598 = sadd.s32 %s25, 65
  %s599 = sld [smem:[#allocation4 + %s598]]
  %s600 = scalar_lea.vmem %s1, %s599
  %v601 = vld [vmem:[%s600] sm:$0x1]
  %602 = vst [vmem:[#allocation2 + $0x1] sm:$0x1] %v601
  %s603 = sadd.s32 %s25, 66
  %s604 = sld [smem:[#allocation4 + %s603]]
  %s605 = scalar_lea.vmem %s1, %s604
  %v606 = vld [vmem:[%s605] sm:$0x1]
  %607 = vst [vmem:[#allocation2 + $0x2] sm:$0x1] %v606
  %s608 = sadd.s32 %s25, 67
  %s609 = sld [smem:[#allocation4 + %s608]]
  %s610 = scalar_lea.vmem %s1, %s609
  %v611 = vld [vmem:[%s610] sm:$0x1]
  %612 = vst [vmem:[#allocation2 + $0x3] sm:$0x1] %v611
  %s613 = sadd.s32 %s25, 68
  %s614 = sld [smem:[#allocation4 + %s613]]
  %s615 = scalar_lea.vmem %s1, %s614
  %v616 = vld [vmem:[%s615] sm:$0x1]
  %617 = vst [vmem:[#allocation2 + $0x4] sm:$0x1] %v616
  %s618 = sadd.s32 %s25, 69
  %s619 = sld [smem:[#allocation4 + %s618]]
  %s620 = scalar_lea.vmem %s1, %s619
  %v621 = vld [vmem:[%s620] sm:$0x1]
  %622 = vst [vmem:[#allocation2 + $0x5] sm:$0x1] %v621
  %s623 = sadd.s32 %s25, 70
  %s624 = sld [smem:[#allocation4 + %s623]]
  %s625 = scalar_lea.vmem %s1, %s624
  %v626 = vld [vmem:[%s625] sm:$0x1]
  %627 = vst [vmem:[#allocation2 + $0x6] sm:$0x1] %v626
  %s628 = sadd.s32 %s25, 71
  %s629 = sld [smem:[#allocation4 + %s628]]
  %s630 = scalar_lea.vmem %s1, %s629
  %v631 = vld [vmem:[%s630] sm:$0x1]
  %632 = vst [vmem:[#allocation2 + $0x7] sm:$0x1] %v631
  %s633 = sadd.s32 %s25, 72
  %s634 = sld [smem:[#allocation4 + %s633]]
  %s635 = scalar_lea.vmem %s1, %s634
  %v636 = vld [vmem:[%s635] sm:$0x1]
  %637 = vst [vmem:[#allocation2 + $0x8] sm:$0x1] %v636
  %s638 = sadd.s32 %s25, 73
  %s639 = sld [smem:[#allocation4 + %s638]]
  %s640 = scalar_lea.vmem %s1, %s639
  %v641 = vld [vmem:[%s640] sm:$0x1]
  %642 = vst [vmem:[#allocation2 + $0x9] sm:$0x1] %v641
  %s643 = sadd.s32 %s25, 74
  %s644 = sld [smem:[#allocation4 + %s643]]
  %s645 = scalar_lea.vmem %s1, %s644
  %v646 = vld [vmem:[%s645] sm:$0x1]
  %647 = vst [vmem:[#allocation2 + $0xa] sm:$0x1] %v646
  %s648 = sadd.s32 %s25, 75
  %s649 = sld [smem:[#allocation4 + %s648]]
  %s650 = scalar_lea.vmem %s1, %s649
  %v651 = vld [vmem:[%s650] sm:$0x1]
  %652 = vst [vmem:[#allocation2 + $0xb] sm:$0x1] %v651
  %s653 = sadd.s32 %s25, 76
  %s654 = sld [smem:[#allocation4 + %s653]]
  %s655 = scalar_lea.vmem %s1, %s654
  %v656 = vld [vmem:[%s655] sm:$0x1]
  %657 = vst [vmem:[#allocation2 + $0xc] sm:$0x1] %v656
  %s658 = sadd.s32 %s25, 77
  %s659 = sld [smem:[#allocation4 + %s658]]
  %s660 = scalar_lea.vmem %s1, %s659
  %v661 = vld [vmem:[%s660] sm:$0x1]
  %662 = vst [vmem:[#allocation2 + $0xd] sm:$0x1] %v661
  %s663 = sadd.s32 %s25, 78
  %s664 = sld [smem:[#allocation4 + %s663]]
  %s665 = scalar_lea.vmem %s1, %s664
  %v666 = vld [vmem:[%s665] sm:$0x1]
  %667 = vst [vmem:[#allocation2 + $0xe] sm:$0x1] %v666
  %s668 = sadd.s32 %s25, 79
  %s669 = sld [smem:[#allocation4 + %s668]]
  %s670 = scalar_lea.vmem %s1, %s669
  %v671 = vld [vmem:[%s670] sm:$0x1]
  %672 = vst [vmem:[#allocation2 + $0xf] sm:$0x1] %v671
  %v673 = vld [vmem:[#allocation2] sm:$0xff]
  %v674 = vld [vmem:[#allocation2 + $0x8] sm:$0xff]
  %675 = vmatprep.subr.bf16.mxu0 0
  %676 = vmatpush1.bf16.msra.mxu0 %v155
  %677 = vmatprep.subr.bf16.mxu0 0
  %678 = vmatpush1.bf16.msra.mxu0 %v156
  %679 = vmatprep.subr.bf16.mxu0 0
  %680 = vmatpush1.bf16.msra.mxu0 %v157
  %681 = vmatprep.subr.bf16.mxu0 0
  %682 = vmatpush1.bf16.msra.mxu0 %v158
  %683 = vmatprep.subr.bf16.mxu0 0
  %684 = vmatpush1.bf16.msra.mxu0 %v159
  %685 = vmatprep.subr.bf16.mxu0 0
  %686 = vmatpush1.bf16.msra.mxu0 %v160
  %687 = vmatprep.subr.bf16.mxu0 0
  %688 = vmatpush1.bf16.msra.mxu0 %v161
  %689 = vmatprep.subr.bf16.mxu0 0
  %690 = vmatpush1.bf16.msra.mxu0 %v162
  %691 = vmatprep.subr.bf16.mxu0 0
  %692 = vmatpush1.bf16.msra.mxu0 0
  %693 = vmatprep.subr.bf16.mxu0 0
  %694 = vmatpush1.bf16.msra.mxu0 0
  %695 = vmatprep.subr.bf16.mxu0 0
  %696 = vmatpush1.bf16.msra.mxu0 0
  %697 = vmatprep.subr.bf16.mxu0 0
  %698 = vmatpush1.bf16.msra.mxu0 0
  %699 = vmatprep.subr.bf16.mxu0 0
  %700 = vmatpush1.bf16.msra.mxu0 0
  %701 = vmatprep.subr.bf16.mxu0 0
  %702 = vmatpush1.bf16.msra.mxu0 0
  %703 = vmatprep.subr.bf16.mxu0 0
  %704 = vmatpush1.bf16.msra.mxu0 0
  %705 = vmatprep.subr.bf16.mxu0 0
  %706 = vmatpush1.bf16.msra.mxu0 0
  %707 = vmatprep.mubr.bf16.mxu0 0
  %708 = vmatmul.mubr.bf16.gmra.mrb[0].mxu0 %v592
  %v709 = vpop.f32.mrb[0].mxu0
  %v710 = vadd.f32 %v673, %v709
  %v711 = vpop.f32.mrb[0].mxu0
  %v712 = vpop.f32.mrb[0].mxu0
  %v713 = vadd.f32 %v674, %v712
  %v714 = vpop.f32.mrb[0].mxu0
  %715 = vdwg.mxu0
  %v716 = vtanh.pop %v710
  %v717 = vtanh.pop %v713
  %v718 = vpack.c.bf16 %v717, %v716
  %s719 = sadd.s32 %s25, 80
  %s720 = sld [smem:[#allocation4 + %s719]]
  %s721 = scalar_lea.vmem %s1, %s720
  %v722 = vld [vmem:[%s721] sm:$0x1]
  %723 = vst [vmem:[#allocation2] sm:$0x1] %v722
  %s724 = sadd.s32 %s25, 81
  %s725 = sld [smem:[#allocation4 + %s724]]
  %s726 = scalar_lea.vmem %s1, %s725
  %v727 = vld [vmem:[%s726] sm:$0x1]
  %728 = vst [vmem:[#allocation2 + $0x1] sm:$0x1] %v727
  %s729 = sadd.s32 %s25, 82
  %s730 = sld [smem:[#allocation4 + %s729]]
  %s731 = scalar_lea.vmem %s1, %s730
  %v732 = vld [vmem:[%s731] sm:$0x1]
  %733 = vst [vmem:[#allocation2 + $0x2] sm:$0x1] %v732
  %s734 = sadd.s32 %s25, 83
  %s735 = sld [smem:[#allocation4 + %s734]]
  %s736 = scalar_lea.vmem %s1, %s735
  %v737 = vld [vmem:[%s736] sm:$0x1]
  %738 = vst [vmem:[#allocation2 + $0x3] sm:$0x1] %v737
  %s739 = sadd.s32 %s25, 84
  %s740 = sld [smem:[#allocation4 + %s739]]
  %s741 = scalar_lea.vmem %s1, %s740
  %v742 = vld [vmem:[%s741] sm:$0x1]
  %743 = vst [vmem:[#allocation2 + $0x4] sm:$0x1] %v742
  %s744 = sadd.s32 %s25, 85
  %s745 = sld [smem:[#allocation4 + %s744]]
  %s746 = scalar_lea.vmem %s1, %s745
  %v747 = vld [vmem:[%s746] sm:$0x1]
  %748 = vst [vmem:[#allocation2 + $0x5] sm:$0x1] %v747
  %s749 = sadd.s32 %s25, 86
  %s750 = sld [smem:[#allocation4 + %s749]]
  %s751 = scalar_lea.vmem %s1, %s750
  %v752 = vld [vmem:[%s751] sm:$0x1]
  %753 = vst [vmem:[#allocation2 + $0x6] sm:$0x1] %v752
  %s754 = sadd.s32 %s25, 87
  %s755 = sld [smem:[#allocation4 + %s754]]
  %s756 = scalar_lea.vmem %s1, %s755
  %v757 = vld [vmem:[%s756] sm:$0x1]
  %758 = vst [vmem:[#allocation2 + $0x7] sm:$0x1] %v757
  %s759 = sadd.s32 %s25, 88
  %s760 = sld [smem:[#allocation4 + %s759]]
  %s761 = scalar_lea.vmem %s1, %s760
  %v762 = vld [vmem:[%s761] sm:$0x1]
  %763 = vst [vmem:[#allocation2 + $0x8] sm:$0x1] %v762
  %s764 = sadd.s32 %s25, 89
  %s765 = sld [smem:[#allocation4 + %s764]]
  %s766 = scalar_lea.vmem %s1, %s765
  %v767 = vld [vmem:[%s766] sm:$0x1]
  %768 = vst [vmem:[#allocation2 + $0x9] sm:$0x1] %v767
  %s769 = sadd.s32 %s25, 90
  %s770 = sld [smem:[#allocation4 + %s769]]
  %s771 = scalar_lea.vmem %s1, %s770
  %v772 = vld [vmem:[%s771] sm:$0x1]
  %773 = vst [vmem:[#allocation2 + $0xa] sm:$0x1] %v772
  %s774 = sadd.s32 %s25, 91
  %s775 = sld [smem:[#allocation4 + %s774]]
  %s776 = scalar_lea.vmem %s1, %s775
  %v777 = vld [vmem:[%s776] sm:$0x1]
  %778 = vst [vmem:[#allocation2 + $0xb] sm:$0x1] %v777
  %s779 = sadd.s32 %s25, 92
  %s780 = sld [smem:[#allocation4 + %s779]]
  %s781 = scalar_lea.vmem %s1, %s780
  %v782 = vld [vmem:[%s781] sm:$0x1]
  %783 = vst [vmem:[#allocation2 + $0xc] sm:$0x1] %v782
  %s784 = sadd.s32 %s25, 93
  %s785 = sld [smem:[#allocation4 + %s784]]
  %s786 = scalar_lea.vmem %s1, %s785
  %v787 = vld [vmem:[%s786] sm:$0x1]
  %788 = vst [vmem:[#allocation2 + $0xd] sm:$0x1] %v787
  %s789 = sadd.s32 %s25, 94
  %s790 = sld [smem:[#allocation4 + %s789]]
  %s791 = scalar_lea.vmem %s1, %s790
  %v792 = vld [vmem:[%s791] sm:$0x1]
  %793 = vst [vmem:[#allocation2 + $0xe] sm:$0x1] %v792
  %s794 = sadd.s32 %s25, 95
  %s795 = sld [smem:[#allocation4 + %s794]]
  %s796 = scalar_lea.vmem %s1, %s795
  %v797 = vld [vmem:[%s796] sm:$0x1]
  %798 = vst [vmem:[#allocation2 + $0xf] sm:$0x1] %v797
  %v799 = vld [vmem:[#allocation2] sm:$0xff]
  %v800 = vld [vmem:[#allocation2 + $0x8] sm:$0xff]
  %801 = vmatprep.subr.bf16.mxu0 0
  %802 = vmatpush1.bf16.msra.mxu0 %v155
  %803 = vmatprep.subr.bf16.mxu0 0
  %804 = vmatpush1.bf16.msra.mxu0 %v156
  %805 = vmatprep.subr.bf16.mxu0 0
  %806 = vmatpush1.bf16.msra.mxu0 %v157
  %807 = vmatprep.subr.bf16.mxu0 0
  %808 = vmatpush1.bf16.msra.mxu0 %v158
  %809 = vmatprep.subr.bf16.mxu0 0
  %810 = vmatpush1.bf16.msra.mxu0 %v159
  %811 = vmatprep.subr.bf16.mxu0 0
  %812 = vmatpush1.bf16.msra.mxu0 %v160
  %813 = vmatprep.subr.bf16.mxu0 0
  %814 = vmatpush1.bf16.msra.mxu0 %v161
  %815 = vmatprep.subr.bf16.mxu0 0
  %816 = vmatpush1.bf16.msra.mxu0 %v162
  %817 = vmatprep.subr.bf16.mxu0 0
  %818 = vmatpush1.bf16.msra.mxu0 0
  %819 = vmatprep.subr.bf16.mxu0 0
  %820 = vmatpush1.bf16.msra.mxu0 0
  %821 = vmatprep.subr.bf16.mxu0 0
  %822 = vmatpush1.bf16.msra.mxu0 0
  %823 = vmatprep.subr.bf16.mxu0 0
  %824 = vmatpush1.bf16.msra.mxu0 0
  %825 = vmatprep.subr.bf16.mxu0 0
  %826 = vmatpush1.bf16.msra.mxu0 0
  %827 = vmatprep.subr.bf16.mxu0 0
  %828 = vmatpush1.bf16.msra.mxu0 0
  %829 = vmatprep.subr.bf16.mxu0 0
  %830 = vmatpush1.bf16.msra.mxu0 0
  %831 = vmatprep.subr.bf16.mxu0 0
  %832 = vmatpush1.bf16.msra.mxu0 0
  %833 = vmatprep.mubr.bf16.mxu0 0
  %834 = vmatmul.mubr.bf16.gmra.mrb[0].mxu0 %v718
  %v835 = vpop.f32.mrb[0].mxu0
  %v836 = vadd.f32 %v799, %v835
  %v837 = vpop.f32.mrb[0].mxu0
  %v838 = vpop.f32.mrb[0].mxu0
  %v839 = vadd.f32 %v800, %v838
  %v840 = vpop.f32.mrb[0].mxu0
  %841 = vdwg.mxu0
  %v842 = vtanh.pop %v836
  %v843 = vtanh.pop %v839
  %v844 = vpack.c.bf16 %v843, %v842
  %s845 = sadd.s32 %s25, 96
  %s846 = sld [smem:[#allocation4 + %s845]]
  %s847 = scalar_lea.vmem %s1, %s846
  %v848 = vld [vmem:[%s847] sm:$0x1]
  %849 = vst [vmem:[#allocation2] sm:$0x1] %v848
  %s850 = sadd.s32 %s25, 97
  %s851 = sld [smem:[#allocation4 + %s850]]
  %s852 = scalar_lea.vmem %s1, %s851
  %v853 = vld [vmem:[%s852] sm:$0x1]
  %854 = vst [vmem:[#allocation2 + $0x1] sm:$0x1] %v853
  %s855 = sadd.s32 %s25, 98
  %s856 = sld [smem:[#allocation4 + %s855]]
  %s857 = scalar_lea.vmem %s1, %s856
  %v858 = vld [vmem:[%s857] sm:$0x1]
  %859 = vst [vmem:[#allocation2 + $0x2] sm:$0x1] %v858
  %s860 = sadd.s32 %s25, 99
  %s861 = sld [smem:[#allocation4 + %s860]]
  %s862 = scalar_lea.vmem %s1, %s861
  %v863 = vld [vmem:[%s862] sm:$0x1]
  %864 = vst [vmem:[#allocation2 + $0x3] sm:$0x1] %v863
  %s865 = sadd.s32 %s25, 100
  %s866 = sld [smem:[#allocation4 + %s865]]
  %s867 = scalar_lea.vmem %s1, %s866
  %v868 = vld [vmem:[%s867] sm:$0x1]
  %869 = vst [vmem:[#allocation2 + $0x4] sm:$0x1] %v868
  %s870 = sadd.s32 %s25, 101
  %s871 = sld [smem:[#allocation4 + %s870]]
  %s872 = scalar_lea.vmem %s1, %s871
  %v873 = vld [vmem:[%s872] sm:$0x1]
  %874 = vst [vmem:[#allocation2 + $0x5] sm:$0x1] %v873
  %s875 = sadd.s32 %s25, 102
  %s876 = sld [smem:[#allocation4 + %s875]]
  %s877 = scalar_lea.vmem %s1, %s876
  %v878 = vld [vmem:[%s877] sm:$0x1]
  %879 = vst [vmem:[#allocation2 + $0x6] sm:$0x1] %v878
  %s880 = sadd.s32 %s25, 103
  %s881 = sld [smem:[#allocation4 + %s880]]
  %s882 = scalar_lea.vmem %s1, %s881
  %v883 = vld [vmem:[%s882] sm:$0x1]
  %884 = vst [vmem:[#allocation2 + $0x7] sm:$0x1] %v883
  %s885 = sadd.s32 %s25, 104
  %s886 = sld [smem:[#allocation4 + %s885]]
  %s887 = scalar_lea.vmem %s1, %s886
  %v888 = vld [vmem:[%s887] sm:$0x1]
  %889 = vst [vmem:[#allocation2 + $0x8] sm:$0x1] %v888
  %s890 = sadd.s32 %s25, 105
  %s891 = sld [smem:[#allocation4 + %s890]]
  %s892 = scalar_lea.vmem %s1, %s891
  %v893 = vld [vmem:[%s892] sm:$0x1]
  %894 = vst [vmem:[#allocation2 + $0x9] sm:$0x1] %v893
  %s895 = sadd.s32 %s25, 106
  %s896 = sld [smem:[#allocation4 + %s895]]
  %s897 = scalar_lea.vmem %s1, %s896
  %v898 = vld [vmem:[%s897] sm:$0x1]
  %899 = vst [vmem:[#allocation2 + $0xa] sm:$0x1] %v898
  %s900 = sadd.s32 %s25, 107
  %s901 = sld [smem:[#allocation4 + %s900]]
  %s902 = scalar_lea.vmem %s1, %s901
  %v903 = vld [vmem:[%s902] sm:$0x1]
  %904 = vst [vmem:[#allocation2 + $0xb] sm:$0x1] %v903
  %s905 = sadd.s32 %s25, 108
  %s906 = sld [smem:[#allocation4 + %s905]]
  %s907 = scalar_lea.vmem %s1, %s906
  %v908 = vld [vmem:[%s907] sm:$0x1]
  %909 = vst [vmem:[#allocation2 + $0xc] sm:$0x1] %v908
  %s910 = sadd.s32 %s25, 109
  %s911 = sld [smem:[#allocation4 + %s910]]
  %s912 = scalar_lea.vmem %s1, %s911
  %v913 = vld [vmem:[%s912] sm:$0x1]
  %914 = vst [vmem:[#allocation2 + $0xd] sm:$0x1] %v913
  %s915 = sadd.s32 %s25, 110
  %s916 = sld [smem:[#allocation4 + %s915]]
  %s917 = scalar_lea.vmem %s1, %s916
  %v918 = vld [vmem:[%s917] sm:$0x1]
  %919 = vst [vmem:[#allocation2 + $0xe] sm:$0x1] %v918
  %s920 = sadd.s32 %s25, 111
  %s921 = sld [smem:[#allocation4 + %s920]]
  %s922 = scalar_lea.vmem %s1, %s921
  %v923 = vld [vmem:[%s922] sm:$0x1]
  %924 = vst [vmem:[#allocation2 + $0xf] sm:$0x1] %v923
  %v925 = vld [vmem:[#allocation2] sm:$0xff]
  %v926 = vld [vmem:[#allocation2 + $0x8] sm:$0xff]
  %927 = vmatprep.subr.bf16.mxu0 0
  %928 = vmatpush1.bf16.msra.mxu0 %v155
  %929 = vmatprep.subr.bf16.mxu0 0
  %930 = vmatpush1.bf16.msra.mxu0 %v156
  %931 = vmatprep.subr.bf16.mxu0 0
  %932 = vmatpush1.bf16.msra.mxu0 %v157
  %933 = vmatprep.subr.bf16.mxu0 0
  %934 = vmatpush1.bf16.msra.mxu0 %v158
  %935 = vmatprep.subr.bf16.mxu0 0
  %936 = vmatpush1.bf16.msra.mxu0 %v159
  %937 = vmatprep.subr.bf16.mxu0 0
  %938 = vmatpush1.bf16.msra.mxu0 %v160
  %939 = vmatprep.subr.bf16.mxu0 0
  %940 = vmatpush1.bf16.msra.mxu0 %v161
  %941 = vmatprep.subr.bf16.mxu0 0
  %942 = vmatpush1.bf16.msra.mxu0 %v162
  %943 = vmatprep.subr.bf16.mxu0 0
  %944 = vmatpush1.bf16.msra.mxu0 0
  %945 = vmatprep.subr.bf16.mxu0 0
  %946 = vmatpush1.bf16.msra.mxu0 0
  %947 = vmatprep.subr.bf16.mxu0 0
  %948 = vmatpush1.bf16.msra.mxu0 0
  %949 = vmatprep.subr.bf16.mxu0 0
  %950 = vmatpush1.bf16.msra.mxu0 0
  %951 = vmatprep.subr.bf16.mxu0 0
  %952 = vmatpush1.bf16.msra.mxu0 0
  %953 = vmatprep.subr.bf16.mxu0 0
  %954 = vmatpush1.bf16.msra.mxu0 0
  %955 = vmatprep.subr.bf16.mxu0 0
  %956 = vmatpush1.bf16.msra.mxu0 0
  %957 = vmatprep.subr.bf16.mxu0 0
  %958 = vmatpush1.bf16.msra.mxu0 0
  %959 = vmatprep.mubr.bf16.mxu0 0
  %960 = vmatmul.mubr.bf16.gmra.mrb[0].mxu0 %v844
  %v961 = vpop.f32.mrb[0].mxu0
  %v962 = vadd.f32 %v925, %v961
  %v963 = vpop.f32.mrb[0].mxu0
  %v964 = vpop.f32.mrb[0].mxu0
  %v965 = vadd.f32 %v926, %v964
  %v966 = vpop.f32.mrb[0].mxu0
  %967 = vdwg.mxu0
  %v968 = vtanh.pop %v962
  %v969 = vtanh.pop %v965
  %v970 = vpack.c.bf16 %v969, %v968
  %s971 = sadd.s32 %s25, 112
  %s972 = sld [smem:[#allocation4 + %s971]]
  %s973 = scalar_lea.vmem %s1, %s972
  %v974 = vld [vmem:[%s973] sm:$0x1]
  %975 = vst [vmem:[#allocation2] sm:$0x1] %v974
  %s976 = sadd.s32 %s25, 113
  %s977 = sld [smem:[#allocation4 + %s976]]
  %s978 = scalar_lea.vmem %s1, %s977
  %v979 = vld [vmem:[%s978] sm:$0x1]
  %980 = vst [vmem:[#allocation2 + $0x1] sm:$0x1] %v979
  %s981 = sadd.s32 %s25, 114
  %s982 = sld [smem:[#allocation4 + %s981]]
  %s983 = scalar_lea.vmem %s1, %s982
  %v984 = vld [vmem:[%s983] sm:$0x1]
  %985 = vst [vmem:[#allocation2 + $0x2] sm:$0x1] %v984
  %s986 = sadd.s32 %s25, 115
  %s987 = sld [smem:[#allocation4 + %s986]]
  %s988 = scalar_lea.vmem %s1, %s987
  %v989 = vld [vmem:[%s988] sm:$0x1]
  %990 = vst [vmem:[#allocation2 + $0x3] sm:$0x1] %v989
  %s991 = sadd.s32 %s25, 116
  %s992 = sld [smem:[#allocation4 + %s991]]
  %s993 = scalar_lea.vmem %s1, %s992
  %v994 = vld [vmem:[%s993] sm:$0x1]
  %995 = vst [vmem:[#allocation2 + $0x4] sm:$0x1] %v994
  %s996 = sadd.s32 %s25, 117
  %s997 = sld [smem:[#allocation4 + %s996]]
  %s998 = scalar_lea.vmem %s1, %s997
  %v999 = vld [vmem:[%s998] sm:$0x1]
  %1000 = vst [vmem:[#allocation2 + $0x5] sm:$0x1] %v999
  %s1001 = sadd.s32 %s25, 118
  %s1002 = sld [smem:[#allocation4 + %s1001]]
  %s1003 = scalar_lea.vmem %s1, %s1002
  %v1004 = vld [vmem:[%s1003] sm:$0x1]
  %1005 = vst [vmem:[#allocation2 + $0x6] sm:$0x1] %v1004
  %s1006 = sadd.s32 %s25, 119
  %s1007 = sld [smem:[#allocation4 + %s1006]]
  %s1008 = scalar_lea.vmem %s1, %s1007
  %v1009 = vld [vmem:[%s1008] sm:$0x1]
  %1010 = vst [vmem:[#allocation2 + $0x7] sm:$0x1] %v1009
  %s1011 = sadd.s32 %s25, 120
  %s1012 = sld [smem:[#allocation4 + %s1011]]
  %s1013 = scalar_lea.vmem %s1, %s1012
  %v1014 = vld [vmem:[%s1013] sm:$0x1]
  %1015 = vst [vmem:[#allocation2 + $0x8] sm:$0x1] %v1014
  %s1016 = sadd.s32 %s25, 121
  %s1017 = sld [smem:[#allocation4 + %s1016]]
  %s1018 = scalar_lea.vmem %s1, %s1017
  %v1019 = vld [vmem:[%s1018] sm:$0x1]
  %1020 = vst [vmem:[#allocation2 + $0x9] sm:$0x1] %v1019
  %s1021 = sadd.s32 %s25, 122
  %s1022 = sld [smem:[#allocation4 + %s1021]]
  %s1023 = scalar_lea.vmem %s1, %s1022
  %v1024 = vld [vmem:[%s1023] sm:$0x1]
  %1025 = vst [vmem:[#allocation2 + $0xa] sm:$0x1] %v1024
  %s1026 = sadd.s32 %s25, 123
  %s1027 = sld [smem:[#allocation4 + %s1026]]
  %s1028 = scalar_lea.vmem %s1, %s1027
  %v1029 = vld [vmem:[%s1028] sm:$0x1]
  %1030 = vst [vmem:[#allocation2 + $0xb] sm:$0x1] %v1029
  %s1031 = sadd.s32 %s25, 124
  %s1032 = sld [smem:[#allocation4 + %s1031]]
  %s1033 = scalar_lea.vmem %s1, %s1032
  %v1034 = vld [vmem:[%s1033] sm:$0x1]
  %1035 = vst [vmem:[#allocation2 + $0xc] sm:$0x1] %v1034
  %s1036 = sadd.s32 %s25, 125
  %s1037 = sld [smem:[#allocation4 + %s1036]]
  %s1038 = scalar_lea.vmem %s1, %s1037
  %v1039 = vld [vmem:[%s1038] sm:$0x1]
  %1040 = vst [vmem:[#allocation2 + $0xd] sm:$0x1] %v1039
  %s1041 = sadd.s32 %s25, 126
  %s1042 = sld [smem:[#allocation4 + %s1041]]
  %s1043 = scalar_lea.vmem %s1, %s1042
  %v1044 = vld [vmem:[%s1043] sm:$0x1]
  %1045 = vst [vmem:[#allocation2 + $0xe] sm:$0x1] %v1044
  %s1046 = sadd.s32 %s25, 127
  %s1047 = sld [smem:[#allocation4 + %s1046]]
  %s1048 = scalar_lea.vmem %s1, %s1047
  %v1049 = vld [vmem:[%s1048] sm:$0x1]
  %1050 = vst [vmem:[#allocation2 + $0xf] sm:$0x1] %v1049
  %v1051 = vld [vmem:[#allocation2] sm:$0xff]
  %v1052 = vld [vmem:[#allocation2 + $0x8] sm:$0xff]
  %1053 = vmatprep.subr.bf16.mxu0 0
  %1054 = vmatpush1.bf16.msra.mxu0 %v155
  %1055 = vmatprep.subr.bf16.mxu0 0
  %1056 = vmatpush1.bf16.msra.mxu0 %v156
  %1057 = vmatprep.subr.bf16.mxu0 0
  %1058 = vmatpush1.bf16.msra.mxu0 %v157
  %1059 = vmatprep.subr.bf16.mxu0 0
  %1060 = vmatpush1.bf16.msra.mxu0 %v158
  %1061 = vmatprep.subr.bf16.mxu0 0
  %1062 = vmatpush1.bf16.msra.mxu0 %v159
  %1063 = vmatprep.subr.bf16.mxu0 0
  %1064 = vmatpush1.bf16.msra.mxu0 %v160
  %1065 = vmatprep.subr.bf16.mxu0 0
  %1066 = vmatpush1.bf16.msra.mxu0 %v161
  %1067 = vmatprep.subr.bf16.mxu0 0
  %1068 = vmatpush1.bf16.msra.mxu0 %v162
  %1069 = vmatprep.subr.bf16.mxu0 0
  %1070 = vmatpush1.bf16.msra.mxu0 0
  %1071 = vmatprep.subr.bf16.mxu0 0
  %1072 = vmatpush1.bf16.msra.mxu0 0
  %1073 = vmatprep.subr.bf16.mxu0 0
  %1074 = vmatpush1.bf16.msra.mxu0 0
  %1075 = vmatprep.subr.bf16.mxu0 0
  %1076 = vmatpush1.bf16.msra.mxu0 0
  %1077 = vmatprep.subr.bf16.mxu0 0
  %1078 = vmatpush1.bf16.msra.mxu0 0
  %1079 = vmatprep.subr.bf16.mxu0 0
  %1080 = vmatpush1.bf16.msra.mxu0 0
  %1081 = vmatprep.subr.bf16.mxu0 0
  %1082 = vmatpush1.bf16.msra.mxu0 0
  %1083 = vmatprep.subr.bf16.mxu0 0
  %1084 = vmatpush1.bf16.msra.mxu0 0
  %1085 = vmatprep.mubr.bf16.mxu0 0
  %1086 = vmatmul.mubr.bf16.gmra.mrb[0].mxu0 %v970
  %v1087 = vpop.f32.mrb[0].mxu0
  %v1088 = vadd.f32 %v1051, %v1087
  %v1089 = vpop.f32.mrb[0].mxu0
  %v1090 = vpop.f32.mrb[0].mxu0
  %v1091 = vadd.f32 %v1052, %v1090
  %v1092 = vpop.f32.mrb[0].mxu0
  %1093 = vdwg.mxu0
  %v1094 = vtanh.pop %v1088
  %v1095 = vtanh.pop %v1091
  %v1096 = vpack.c.bf16 %v1095, %v1094
  %v1097 = vld [vmem:[%s3] sm:$0xf]
  %v1098 = vld [vmem:[%s3 + $0x4] sm:$0xf]
  %v1099 = vld [vmem:[%s3 + $0x8] sm:$0xf]
  %v1100 = vld [vmem:[%s3 + $0xc] sm:$0xf]
  %v1101 = vld [vmem:[%s3 + $0x10] sm:$0xf]
  %v1102 = vld [vmem:[%s3 + $0x14] sm:$0xf]
  %v1103 = vld [vmem:[%s3 + $0x18] sm:$0xf]
  %v1104 = vld [vmem:[%s3 + $0x1c] sm:$0xf]
  %v1105 = vld [vmem:[%s3 + $0x20] sm:$0xf]
  %v1106 = vld [vmem:[%s3 + $0x24] sm:$0xf]
  %v1107 = vld [vmem:[%s3 + $0x28] sm:$0xf]
  %v1108 = vld [vmem:[%s3 + $0x2c] sm:$0xf]
  %v1109 = vld [vmem:[%s3 + $0x30] sm:$0xf]
  %v1110 = vld [vmem:[%s3 + $0x34] sm:$0xf]
  %v1111 = vld [vmem:[%s3 + $0x38] sm:$0xf]
  %v1112 = vld [vmem:[%s3 + $0x3c] sm:$0xf]
  %v1113 = vld [vmem:[%s4] sm:$0x1]
  %v1115 = vlaneseq
  %v1116 = vshrl.u32 %v1115, 7
  %v1117 = vsub.s32 0, %v1116
  %v1118 = vrot.slane %v1113, %v1117
  %v1136 = vunpack.c.l.b16 %v1097
  %v1137 = vunpack.c.l.b16 %v1098
  %v1138 = vunpack.c.l.b16 %v1099
  %v1139 = vunpack.c.l.b16 %v1100
  %v1140 = vunpack.c.l.b16 %v1101
  %v1141 = vunpack.c.l.b16 %v1102
  %v1142 = vunpack.c.l.b16 %v1103
  %v1143 = vunpack.c.l.b16 %v1104
  %v1144 = vunpack.c.l.b16 %v1105
  %v1145 = vunpack.c.l.b16 %v1106
  %v1146 = vunpack.c.l.b16 %v1107
  %v1147 = vunpack.c.l.b16 %v1108
  %v1148 = vunpack.c.l.b16 %v1109
  %v1149 = vunpack.c.l.b16 %v1110
  %v1150 = vunpack.c.l.b16 %v1111
  %v1151 = vunpack.c.l.b16 %v1112
  %v1152 = vpack.c.b16 %v1137, %v1136
  %v1153 = vpack.c.b16 %v1139, %v1138
  %v1154 = vpack.c.b16 %v1141, %v1140
  %v1155 = vpack.c.b16 %v1143, %v1142
  %v1156 = vpack.c.b16 %v1145, %v1144
  %v1157 = vpack.c.b16 %v1147, %v1146
  %v1158 = vpack.c.b16 %v1149, %v1148
  %v1159 = vpack.c.b16 %v1151, %v1150
  %1168 = vmatprep.subr.bf16.mxu0 0
  %1169 = vmatpush1.bf16.msra.mxu0 %v1152
  %1170 = vmatprep.subr.bf16.mxu0 0
  %1171 = vmatpush1.bf16.msra.mxu0 %v1153
  %1172 = vmatprep.subr.bf16.mxu0 0
  %1173 = vmatpush1.bf16.msra.mxu0 %v1154
  %1174 = vmatprep.subr.bf16.mxu0 0
  %1175 = vmatpush1.bf16.msra.mxu0 %v1155
  %1176 = vmatprep.subr.bf16.mxu0 0
  %1177 = vmatpush1.bf16.msra.mxu0 %v1156
  %1178 = vmatprep.subr.bf16.mxu0 0
  %1179 = vmatpush1.bf16.msra.mxu0 %v1157
  %1180 = vmatprep.subr.bf16.mxu0 0
  %1181 = vmatpush1.bf16.msra.mxu0 %v1158
  %1182 = vmatprep.subr.bf16.mxu0 0
  %1183 = vmatpush1.bf16.msra.mxu0 %v1159
  %1184 = vmatprep.subr.bf16.mxu0 0
  %1185 = vmatpush1.bf16.msra.mxu0 0
  %1186 = vmatprep.subr.bf16.mxu0 0
  %1187 = vmatpush1.bf16.msra.mxu0 0
  %1188 = vmatprep.subr.bf16.mxu0 0
  %1189 = vmatpush1.bf16.msra.mxu0 0
  %1190 = vmatprep.subr.bf16.mxu0 0
  %1191 = vmatpush1.bf16.msra.mxu0 0
  %1192 = vmatprep.subr.bf16.mxu0 0
  %1193 = vmatpush1.bf16.msra.mxu0 0
  %1194 = vmatprep.subr.bf16.mxu0 0
  %1195 = vmatpush1.bf16.msra.mxu0 0
  %1196 = vmatprep.subr.bf16.mxu0 0
  %1197 = vmatpush1.bf16.msra.mxu0 0
  %1198 = vmatprep.subr.bf16.mxu0 0
  %1199 = vmatpush1.bf16.msra.mxu0 0
  %1200 = vmatprep.mubr.bf16.mxu0 0
  %1201 = vmatmul.mubr.bf16.gmra.mrb[0].mxu0 %v1096
  %v1202 = vpop.f32.mrb[0].mxu0
  %v1203 = vadd.f32 %v1118, %v1202
  %v1204 = vpop.f32.mrb[0].mxu0
  %v1205 = vpop.f32.mrb[0].mxu0
  %v1206 = vadd.f32 %v1118, %v1205
  %v1207 = vpop.f32.mrb[0].mxu0
  %1208 = vdwg.mxu0
  %1209 = vst [vmem:[%s5] sm:$0xff] %v1203
  %1210 = vst [vmem:[%s5 + $0x8] sm:$0xff] %v1206
  // Predicated region
  $region18: #{rnn_forward.1} parent=0 // pred_check
    _
  $region19: #{rnn_forward.1} parent=0 // pred_check_branch
    %1212 = sbr.rel (0) target = $region21
  $region20: #{rnn_forward.1} parent=0 // pred_region
    _
  $region21: #{rnn_forward.1} parent=0 // pred_fallthru
    _
  // Predicated region
  $region22: #{rnn_forward.1} parent=0 // pred_check
    _
  $region23: #{rnn_forward.1} parent=0 // pred_check_branch
    %1214 = sbr.rel (0) target = $region25
  $region24: #{rnn_forward.1} parent=0 // pred_region
    _
  $region25: #{rnn_forward.1} parent=0 // pred_fallthru
    _

</llo_original>
